<compile_context>
chip_gen: v5e
topology: v5e:2x2
jax: 0.10.0
libtpu: 0.0.40
codegen_flags: <defaults>
</compile_context>

<pallas_src>
import numpy as np

import jax
import jax.numpy as jnp
from jax import lax
from jax.experimental import pallas as pl
from jax.experimental.pallas import tpu as pltpu


def _round_up(v, m):
    return (v + m - 1) // m * m


def _make_vgg_block_kernel(*, W, KH, KW, PH, PW, pool_k, layer_dims, Cout, M,
                           PADE):
    """Fused [conv -> relu] * num_convs -> maxpool kernel body.

    layer_dims: per conv layer (cin, cin_pad, cout, cout_pad), channel counts
    padded to the f32 sublane tile (8) so every scratch access is aligned.
    """
    num_convs = len(layer_dims)
    taps = [(kh - PH, kw - PW) for kh in range(KH) for kw in range(KW)]

    def kernel(*refs):
        x_ref = refs[0]                        # (cin_pad0, M) flat input
        m_ref = refs[1]                        # (KH*KW, M)    tap masks
        s_ref = refs[2]                        # (M, Mo)       pool selection
        wb_refs = refs[3:3 + 2 * num_convs]    # per layer: wmat, bias
        out_ref = refs[3 + 2 * num_convs]      # (Cout, Mo)
        ext_ref = refs[4 + 2 * num_convs]      # (cp_max, M + 2*PADE) haloed act
        p_ref = refs[5 + 2 * num_convs]        # (k_max, M)    im2col patches

        # Zero the haloed activation buffer once (this IS the "same" padding),
        # then drop the flat input into its interior.
        ext_ref[...] = jnp.zeros_like(ext_ref)
        cin_pad0 = layer_dims[0][1]
        ext_ref[0:cin_pad0, PADE:PADE + M] = x_ref[...]

        for l, (_, cin_pad, _, cout_pad) in enumerate(layer_dims):
            w_ref = wb_refs[2 * l]             # (cout_pad, KH*KW*cin_pad)
            b_ref = wb_refs[2 * l + 1]         # (cout_pad, 1)
            k = KH * KW * cin_pad

            # im2col: each tap is a lane-shifted read of the haloed activation,
            # masked to zero where the tap falls outside the image.
            for t, (dy, dx) in enumerate(taps):
                off = dy * W + dx
                window = ext_ref[0:cin_pad, PADE + off:PADE + off + M]
                p_ref[t * cin_pad:(t + 1) * cin_pad, :] = (
                    window * m_ref[t:t + 1, :])

            # A single MXU contraction per conv layer (K = KH*KW*cin_pad).
            acc = jnp.dot(w_ref[...], p_ref[0:k, :],
                          preferred_element_type=jnp.float32,
                          precision=lax.Precision.HIGHEST)
            act = jnp.maximum(acc + b_ref[...], 0.0)        # (cout_pad, M)

            # Stash the activation back into the halo buffer for the next
            # layer / the pool (padded channel rows stay exactly zero).
            ext_ref[0:cout_pad, PADE:PADE + M] = act

        # Fused max-pool: elementwise max over the pool window via shifted
        # reads, then compaction of the window-anchor lanes with a 0/1
        # selection matmul (keeps everything lane-dense, no strided loads).
        c_last = layer_dims[-1][3]
        wmax = ext_ref[0:c_last, PADE:PADE + M]
        for i in range(pool_k[0]):
            for j in range(pool_k[1]):
                if i == 0 and j == 0:
                    continue
                off = i * W + j
                wmax = jnp.maximum(
                    wmax, ext_ref[0:c_last, PADE + off:PADE + off + M])
        pooled = jnp.dot(wmax, s_ref[...],
                         preferred_element_type=jnp.float32,
                         precision=lax.Precision.HIGHEST)   # (c_last, Mo)
        out_ref[...] = pooled[0:Cout, :].astype(out_ref.dtype)

    return kernel


def vgg_block_forward(x_nchw, params, *, conv_padding=(1, 1),
                      maxpool_kernel_size=(2, 2), maxpool_stride=(2, 2)):
    """VggBlock forward.  x: (N, Cin, H, W) NCHW; params: [(w OIHW, b), ...]."""
    N, Cin, H, W = map(int, x_nchw.shape)
    KH, KW = int(params[0][0].shape[2]), int(params[0][0].shape[3])
    PH, PW = conv_padding
    if KH != 2 * PH + 1 or KW != 2 * PW + 1:
        raise NotImplementedError("only 'same' convolutions are supported")
    if tuple(maxpool_kernel_size) != tuple(maxpool_stride):
        raise NotImplementedError("only non-overlapping max-pool is supported")
    pk = tuple(maxpool_kernel_size)
    Ho = (H - pk[0]) // pk[0] + 1
    Wo = (W - pk[1]) // pk[1] + 1
    M = N * H * W
    Mo = N * Ho * Wo
    PADE = 128                       # lane-aligned halo around the flat image
    assert PADE > max(PH * W + PW, (pk[0] - 1) * W + pk[1] - 1)

    # Per-layer channel counts padded up to the f32 sublane tile (8).
    layer_dims = []
    cin_l = Cin
    for w, _ in params:
        cout_l = int(w.shape[0])
        assert int(w.shape[1]) == cin_l
        layer_dims.append((cin_l, _round_up(cin_l, 8),
                           cout_l, _round_up(cout_l, 8)))
        cin_l = cout_l
    Cout = layer_dims[-1][2]
    cp_max = max(max(d[1], d[3]) for d in layer_dims)
    k_max = KH * KW * max(d[1] for d in layer_dims)

    # ---- host-built constants (depend only on static shapes) ----
    # (a) 0/1 validity mask of every conv tap over the flat (n, y, x) index.
    yy = np.arange(H).reshape(H, 1)
    xx = np.arange(W).reshape(1, W)
    rows = []
    for kh in range(KH):
        for kw in range(KW):
            dy, dx = kh - PH, kw - PW
            ok = ((yy + dy >= 0) & (yy + dy < H) &
                  (xx + dx >= 0) & (xx + dx < W)).astype(np.float32)
            rows.append(np.broadcast_to(ok[None], (N, H, W)).reshape(M))
    masks = jnp.asarray(np.stack(rows, axis=0))               # (KH*KW, M)

    # (b) 0/1 matrix selecting the pool-window anchor lane for each output.
    sel = np.zeros((M, Mo), np.float32)
    for n in range(N):
        for yo in range(Ho):
            for xo in range(Wo):
                sel[(n * H + pk[0] * yo) * W + pk[1] * xo,
                    (n * Ho + yo) * Wo + xo] = 1.0
    sel = jnp.asarray(sel)                                    # (M, Mo)

    # (c) weights as (cout_pad, KH*KW*cin_pad) matmul operands, biases (cout_pad, 1).
    flat_wb = []
    for (w, b), (cin_d, cin_pad, cout_d, cout_pad) in zip(params, layer_dims):
        wk = jnp.transpose(w.astype(jnp.float32), (0, 2, 3, 1))  # (Co, KH, KW, Ci)
        wk = jnp.pad(wk, ((0, cout_pad - cout_d), (0, 0), (0, 0),
                          (0, cin_pad - cin_d)))
        flat_wb.append(wk.reshape(cout_pad, KH * KW * cin_pad))
        flat_wb.append(jnp.pad(b.astype(jnp.float32),
                               (0, cout_pad - cout_d)).reshape(cout_pad, 1))

    # (d) flat lane-major input (channels on sublanes, n*H*W on lanes).
    cin_pad0 = layer_dims[0][1]
    x_flat = jnp.transpose(x_nchw.astype(jnp.float32),
                           (1, 0, 2, 3)).reshape(Cin, M)
    x_flat = jnp.pad(x_flat, ((0, cin_pad0 - Cin), (0, 0)))

    kernel = _make_vgg_block_kernel(
        W=W, KH=KH, KW=KW, PH=PH, PW=PW, pool_k=pk,
        layer_dims=layer_dims, Cout=Cout, M=M, PADE=PADE)

    in_specs = [
        pl.BlockSpec((cin_pad0, M), lambda i: (0, 0)),
        pl.BlockSpec((KH * KW, M), lambda i: (0, 0)),
        pl.BlockSpec((M, Mo), lambda i: (0, 0)),
    ]
    for (_, cin_pad, _, cout_pad) in layer_dims:
        in_specs.append(pl.BlockSpec((cout_pad, KH * KW * cin_pad),
                                     lambda i: (0, 0)))
        in_specs.append(pl.BlockSpec((cout_pad, 1), lambda i: (0, 0)))

    out = pl.pallas_call(
        kernel,
        out_shape=jax.ShapeDtypeStruct((Cout, Mo), x_nchw.dtype),
        grid=(1,),                   # batch folded into the matmul M dimension
        in_specs=in_specs,
        out_specs=pl.BlockSpec((Cout, Mo), lambda i: (0, 0)),
        scratch_shapes=[
            pltpu.VMEM((cp_max, M + 2 * PADE), jnp.float32),  # haloed activation
            pltpu.VMEM((k_max, M), jnp.float32),              # im2col patches
        ],
        compiler_params=pltpu.CompilerParams(
            dimension_semantics=("arbitrary",),
            vmem_limit_bytes=32 * 1024 * 1024),
    )(x_flat, masks, sel, *flat_wb)

    # (Cout, N*Ho*Wo) -> NCHW; tiny output-only layout fix-up.
    return jnp.transpose(out.reshape(Cout, N, Ho, Wo), (1, 0, 2, 3))


def init_vgg_block_params(key, num_convs, in_channels, out_channels,
                          ksize=(3, 3)):
    """PyTorch-default-style (uniform +/- 1/sqrt(fan_in)) init, OIHW weights."""
    params = []
    cin = in_channels
    for _ in range(num_convs):
        key, kw_, kb_ = jax.random.split(key, 3)
        fan_in = cin * ksize[0] * ksize[1]
        bound = 1.0 / (fan_in ** 0.5)
        w = jax.random.uniform(kw_, (out_channels, cin, ksize[0], ksize[1]),
                               jnp.float32, -bound, bound)    # OIHW
        b = jax.random.uniform(kb_, (out_channels,), jnp.float32, -bound, bound)
        params.append((w, b))
        cin = out_channels
    return params


def reference_forward(x_nchw, params, *, conv_padding=(1, 1),
                      maxpool_kernel_size=(2, 2), maxpool_stride=(2, 2)):
    """Pure-JAX reference matching the PyTorch module semantics."""
    y = x_nchw
    for w, b in params:
        y = lax.conv_general_dilated(
            y, w, window_strides=(1, 1),
            padding=((conv_padding[0], conv_padding[0]),
                     (conv_padding[1], conv_padding[1])),
            dimension_numbers=("NCHW", "OIHW", "NCHW"),
            precision=lax.Precision.HIGHEST)
        y = jnp.maximum(y + b[None, :, None, None], 0.0)
    return lax.reduce_window(
        y, -jnp.inf, lax.max,
        (1, 1) + tuple(maxpool_kernel_size),
        (1, 1) + tuple(maxpool_stride), "VALID")


if __name__ == "__main__":
    key = jax.random.PRNGKey(0)
    kx, kp = jax.random.split(key)

    # VggBlock(num_convs=2, in_channels=4, out_channels=8) on a (2,4,16,16) input.
    N, Cin, H, W = 2, 4, 16, 16
    num_convs, Cout = 2, 8

    x = jax.random.normal(kx, (N, Cin, H, W), jnp.float32)
    params = init_vgg_block_params(kp, num_convs, Cin, Cout)

    out = jax.block_until_ready(vgg_block_forward(x, params))
    ref = reference_forward(x, params)

    assert out.shape == (N, Cout, H // 2, W // 2), out.shape
    max_err = float(jnp.max(jnp.abs(out - ref)))
    assert jnp.allclose(out, ref, atol=1e-2, rtol=1e-2), max_err
    print("KERNEL_OK")
</pallas_src>

<mosaic_0001>
module attributes {stable_mosaic.version = 11 : i64} {
  func.func @kernel(%arg0: i32, %arg1: memref<8x512xf32, #tpu.memory_space<vmem>>, %arg2: memref<9x512xf32, #tpu.memory_space<vmem>>, %arg3: memref<512x128xf32, #tpu.memory_space<vmem>>, %arg4: memref<8x72xf32, #tpu.memory_space<vmem>>, %arg5: memref<8x1xf32, #tpu.memory_space<vmem>>, %arg6: memref<8x72xf32, #tpu.memory_space<vmem>>, %arg7: memref<8x1xf32, #tpu.memory_space<vmem>>, %arg8: memref<8x128xf32, #tpu.memory_space<vmem>>, %arg9: memref<8x768xf32, #tpu.memory_space<vmem>>, %arg10: memref<72x512xf32, #tpu.memory_space<vmem>>) attributes {dimension_semantics = [#tpu.dimension_semantics<arbitrary>], iteration_bounds = array<i64: 1>, scalar_prefetch = 0 : i64, scratch_operands = 2 : i64, tpu.core_type = #tpu.core_type<tc>, window_params = [{pipeline_mode = #tpu.pipeline_mode<synchronous>, transform_indices = @transform_0, window_bounds = array<i64: 8, 512>}, {pipeline_mode = #tpu.pipeline_mode<synchronous>, transform_indices = @transform_1, window_bounds = array<i64: 9, 512>}, {pipeline_mode = #tpu.pipeline_mode<synchronous>, transform_indices = @transform_2, window_bounds = array<i64: 512, 128>}, {pipeline_mode = #tpu.pipeline_mode<synchronous>, transform_indices = @transform_3, window_bounds = array<i64: 8, 72>}, {pipeline_mode = #tpu.pipeline_mode<synchronous>, transform_indices = @transform_4, window_bounds = array<i64: 8, 1>}, {pipeline_mode = #tpu.pipeline_mode<synchronous>, transform_indices = @transform_5, window_bounds = array<i64: 8, 72>}, {pipeline_mode = #tpu.pipeline_mode<synchronous>, transform_indices = @transform_6, window_bounds = array<i64: 8, 1>}, {pipeline_mode = #tpu.pipeline_mode<synchronous>, transform_indices = @transform_7, window_bounds = array<i64: 8, 128>}]} {
    %cst = arith.constant 0.000000e+00 : f32
    %0 = vector.broadcast %cst : f32 to vector<8x768xf32>
    %c0 = arith.constant 0 : index
    %c0_0 = arith.constant 0 : index
    %1 = vector.load %arg9[%c0, %c0_0] : memref<8x768xf32, #tpu.memory_space<vmem>>, vector<8x768xf32>
    tpu.vector_store %arg9[%c0, %c0_0], %0 {strides = array<i32>} : memref<8x768xf32, #tpu.memory_space<vmem>>, vector<8x768xf32>,
    %c0_1 = arith.constant 0 : index
    %c0_2 = arith.constant 0 : index
    %2 = vector.load %arg1[%c0_1, %c0_2] : memref<8x512xf32, #tpu.memory_space<vmem>>, vector<8x512xf32>
    %c0_3 = arith.constant 0 : index
    %c128 = arith.constant 128 : index
    %3 = vector.load %arg9[%c0_3, %c128] : memref<8x768xf32, #tpu.memory_space<vmem>>, vector<8x512xf32>
    tpu.vector_store %arg9[%c0_3, %c128], %2 {strides = array<i32>} : memref<8x768xf32, #tpu.memory_space<vmem>>, vector<8x512xf32>,
    %c0_4 = arith.constant 0 : index
    %c111 = arith.constant 111 : index
    %4 = vector.load %arg9[%c0_4, %c111] : memref<8x768xf32, #tpu.memory_space<vmem>>, vector<8x512xf32>
    %c0_5 = arith.constant 0 : index
    %c0_6 = arith.constant 0 : index
    %5 = vector.load %arg2[%c0_5, %c0_6] : memref<9x512xf32, #tpu.memory_space<vmem>>, vector<1x512xf32>
    %6 = vector.broadcast %5 : vector<1x512xf32> to vector<8x512xf32>
    %7 = arith.mulf %4, %6 : vector<8x512xf32>
    %c0_7 = arith.constant 0 : index
    %c0_8 = arith.constant 0 : index
    %8 = vector.load %arg10[%c0_7, %c0_8] : memref<72x512xf32, #tpu.memory_space<vmem>>, vector<8x512xf32>
    tpu.vector_store %arg10[%c0_7, %c0_8], %7 {strides = array<i32>} : memref<72x512xf32, #tpu.memory_space<vmem>>, vector<8x512xf32>,
    %c0_9 = arith.constant 0 : index
    %c112 = arith.constant 112 : index
    %9 = vector.load %arg9[%c0_9, %c112] : memref<8x768xf32, #tpu.memory_space<vmem>>, vector<8x512xf32>
    %c1 = arith.constant 1 : index
    %c0_10 = arith.constant 0 : index
    %10 = vector.load %arg2[%c1, %c0_10] : memref<9x512xf32, #tpu.memory_space<vmem>>, vector<1x512xf32>
    %11 = vector.broadcast %10 : vector<1x512xf32> to vector<8x512xf32>
    %12 = arith.mulf %9, %11 : vector<8x512xf32>
    %c8 = arith.constant 8 : index
    %c0_11 = arith.constant 0 : index
    %13 = vector.load %arg10[%c8, %c0_11] : memref<72x512xf32, #tpu.memory_space<vmem>>, vector<8x512xf32>
    tpu.vector_store %arg10[%c8, %c0_11], %12 {strides = array<i32>} : memref<72x512xf32, #tpu.memory_space<vmem>>, vector<8x512xf32>,
    %c0_12 = arith.constant 0 : index
    %c113 = arith.constant 113 : index
    %14 = vector.load %arg9[%c0_12, %c113] : memref<8x768xf32, #tpu.memory_space<vmem>>, vector<8x512xf32>
    %c2 = arith.constant 2 : index
    %c0_13 = arith.constant 0 : index
    %15 = vector.load %arg2[%c2, %c0_13] : memref<9x512xf32, #tpu.memory_space<vmem>>, vector<1x512xf32>
    %16 = vector.broadcast %15 : vector<1x512xf32> to vector<8x512xf32>
    %17 = arith.mulf %14, %16 : vector<8x512xf32>
    %c16 = arith.constant 16 : index
    %c0_14 = arith.constant 0 : index
    %18 = vector.load %arg10[%c16, %c0_14] : memref<72x512xf32, #tpu.memory_space<vmem>>, vector<8x512xf32>
    tpu.vector_store %arg10[%c16, %c0_14], %17 {strides = array<i32>} : memref<72x512xf32, #tpu.memory_space<vmem>>, vector<8x512xf32>,
    %c0_15 = arith.constant 0 : index
    %c127 = arith.constant 127 : index
    %19 = vector.load %arg9[%c0_15, %c127] : memref<8x768xf32, #tpu.memory_space<vmem>>, vector<8x512xf32>
    %c3 = arith.constant 3 : index
    %c0_16 = arith.constant 0 : index
    %20 = vector.load %arg2[%c3, %c0_16] : memref<9x512xf32, #tpu.memory_space<vmem>>, vector<1x512xf32>
    %21 = vector.broadcast %20 : vector<1x512xf32> to vector<8x512xf32>
    %22 = arith.mulf %19, %21 : vector<8x512xf32>
    %c24 = arith.constant 24 : index
    %c0_17 = arith.constant 0 : index
    %23 = vector.load %arg10[%c24, %c0_17] : memref<72x512xf32, #tpu.memory_space<vmem>>, vector<8x512xf32>
    tpu.vector_store %arg10[%c24, %c0_17], %22 {strides = array<i32>} : memref<72x512xf32, #tpu.memory_space<vmem>>, vector<8x512xf32>,
    %c0_18 = arith.constant 0 : index
    %c128_19 = arith.constant 128 : index
    %24 = vector.load %arg9[%c0_18, %c128_19] : memref<8x768xf32, #tpu.memory_space<vmem>>, vector<8x512xf32>
    %c4 = arith.constant 4 : index
    %c0_20 = arith.constant 0 : index
    %25 = vector.load %arg2[%c4, %c0_20] : memref<9x512xf32, #tpu.memory_space<vmem>>, vector<1x512xf32>
    %26 = vector.broadcast %25 : vector<1x512xf32> to vector<8x512xf32>
    %27 = arith.mulf %24, %26 : vector<8x512xf32>
    %c32 = arith.constant 32 : index
    %c0_21 = arith.constant 0 : index
    %28 = vector.load %arg10[%c32, %c0_21] : memref<72x512xf32, #tpu.memory_space<vmem>>, vector<8x512xf32>
    tpu.vector_store %arg10[%c32, %c0_21], %27 {strides = array<i32>} : memref<72x512xf32, #tpu.memory_space<vmem>>, vector<8x512xf32>,
    %c0_22 = arith.constant 0 : index
    %c129 = arith.constant 129 : index
    %29 = vector.load %arg9[%c0_22, %c129] : memref<8x768xf32, #tpu.memory_space<vmem>>, vector<8x512xf32>
    %c5 = arith.constant 5 : index
    %c0_23 = arith.constant 0 : index
    %30 = vector.load %arg2[%c5, %c0_23] : memref<9x512xf32, #tpu.memory_space<vmem>>, vector<1x512xf32>
    %31 = vector.broadcast %30 : vector<1x512xf32> to vector<8x512xf32>
    %32 = arith.mulf %29, %31 : vector<8x512xf32>
    %c40 = arith.constant 40 : index
    %c0_24 = arith.constant 0 : index
    %33 = vector.load %arg10[%c40, %c0_24] : memref<72x512xf32, #tpu.memory_space<vmem>>, vector<8x512xf32>
    tpu.vector_store %arg10[%c40, %c0_24], %32 {strides = array<i32>} : memref<72x512xf32, #tpu.memory_space<vmem>>, vector<8x512xf32>,
    %c0_25 = arith.constant 0 : index
    %c143 = arith.constant 143 : index
    %34 = vector.load %arg9[%c0_25, %c143] : memref<8x768xf32, #tpu.memory_space<vmem>>, vector<8x512xf32>
    %c6 = arith.constant 6 : index
    %c0_26 = arith.constant 0 : index
    %35 = vector.load %arg2[%c6, %c0_26] : memref<9x512xf32, #tpu.memory_space<vmem>>, vector<1x512xf32>
    %36 = vector.broadcast %35 : vector<1x512xf32> to vector<8x512xf32>
    %37 = arith.mulf %34, %36 : vector<8x512xf32>
    %c48 = arith.constant 48 : index
    %c0_27 = arith.constant 0 : index
    %38 = vector.load %arg10[%c48, %c0_27] : memref<72x512xf32, #tpu.memory_space<vmem>>, vector<8x512xf32>
    tpu.vector_store %arg10[%c48, %c0_27], %37 {strides = array<i32>} : memref<72x512xf32, #tpu.memory_space<vmem>>, vector<8x512xf32>,
    %c0_28 = arith.constant 0 : index
    %c144 = arith.constant 144 : index
    %39 = vector.load %arg9[%c0_28, %c144] : memref<8x768xf32, #tpu.memory_space<vmem>>, vector<8x512xf32>
    %c7 = arith.constant 7 : index
    %c0_29 = arith.constant 0 : index
    %40 = vector.load %arg2[%c7, %c0_29] : memref<9x512xf32, #tpu.memory_space<vmem>>, vector<1x512xf32>
    %41 = vector.broadcast %40 : vector<1x512xf32> to vector<8x512xf32>
    %42 = arith.mulf %39, %41 : vector<8x512xf32>
    %c56 = arith.constant 56 : index
    %c0_30 = arith.constant 0 : index
    %43 = vector.load %arg10[%c56, %c0_30] : memref<72x512xf32, #tpu.memory_space<vmem>>, vector<8x512xf32>
    tpu.vector_store %arg10[%c56, %c0_30], %42 {strides = array<i32>} : memref<72x512xf32, #tpu.memory_space<vmem>>, vector<8x512xf32>,
    %c0_31 = arith.constant 0 : index
    %c145 = arith.constant 145 : index
    %44 = vector.load %arg9[%c0_31, %c145] : memref<8x768xf32, #tpu.memory_space<vmem>>, vector<8x512xf32>
    %c8_32 = arith.constant 8 : index
    %c0_33 = arith.constant 0 : index
    %45 = vector.load %arg2[%c8_32, %c0_33] : memref<9x512xf32, #tpu.memory_space<vmem>>, vector<1x512xf32>
    %46 = vector.broadcast %45 : vector<1x512xf32> to vector<8x512xf32>
    %47 = arith.mulf %44, %46 : vector<8x512xf32>
    %c64 = arith.constant 64 : index
    %c0_34 = arith.constant 0 : index
    %48 = vector.load %arg10[%c64, %c0_34] : memref<72x512xf32, #tpu.memory_space<vmem>>, vector<8x512xf32>
    tpu.vector_store %arg10[%c64, %c0_34], %47 {strides = array<i32>} : memref<72x512xf32, #tpu.memory_space<vmem>>, vector<8x512xf32>,
    %c0_35 = arith.constant 0 : index
    %c0_36 = arith.constant 0 : index
    %49 = vector.load %arg4[%c0_35, %c0_36] : memref<8x72xf32, #tpu.memory_space<vmem>>, vector<8x72xf32>
    %c0_37 = arith.constant 0 : index
    %c0_38 = arith.constant 0 : index
    %50 = vector.load %arg10[%c0_37, %c0_38] : memref<72x512xf32, #tpu.memory_space<vmem>>, vector<72x512xf32>
    %cst_39 = arith.constant dense<0.000000e+00> : vector<8x512xf32>
    %51 = tpu.matmul %49, %50, %cst_39 {dimension_numbers = #tpu.dot_dimension_numbers<[1], [0], [0], [1], [0, 0, 1, 1], [], []>, precision = #tpu.contract_precision<fp32>} : vector<8x72xf32>, vector<72x512xf32>, vector<8x512xf32> -> vector<8x512xf32>
    %c0_40 = arith.constant 0 : index
    %c0_41 = arith.constant 0 : index
    %52 = vector.load %arg5[%c0_40, %c0_41] : memref<8x1xf32, #tpu.memory_space<vmem>>, vector<8x1xf32>
    %53 = vector.broadcast %52 : vector<8x1xf32> to vector<8x512xf32>
    %54 = arith.addf %51, %53 : vector<8x512xf32>
    %cst_42 = arith.constant 0.000000e+00 : f32
    %55 = vector.broadcast %cst_42 : f32 to vector<8x512xf32>
    %56 = arith.maximumf %54, %55 : vector<8x512xf32>
    %c0_43 = arith.constant 0 : index
    %c128_44 = arith.constant 128 : index
    %57 = vector.load %arg9[%c0_43, %c128_44] : memref<8x768xf32, #tpu.memory_space<vmem>>, vector<8x512xf32>
    tpu.vector_store %arg9[%c0_43, %c128_44], %56 {strides = array<i32>} : memref<8x768xf32, #tpu.memory_space<vmem>>, vector<8x512xf32>,
    %c0_45 = arith.constant 0 : index
    %c111_46 = arith.constant 111 : index
    %58 = vector.load %arg9[%c0_45, %c111_46] : memref<8x768xf32, #tpu.memory_space<vmem>>, vector<8x512xf32>
    %c0_47 = arith.constant 0 : index
    %c0_48 = arith.constant 0 : index
    %59 = vector.load %arg2[%c0_47, %c0_48] : memref<9x512xf32, #tpu.memory_space<vmem>>, vector<1x512xf32>
    %60 = vector.broadcast %59 : vector<1x512xf32> to vector<8x512xf32>
    %61 = arith.mulf %58, %60 : vector<8x512xf32>
    %c0_49 = arith.constant 0 : index
    %c0_50 = arith.constant 0 : index
    %62 = vector.load %arg10[%c0_49, %c0_50] : memref<72x512xf32, #tpu.memory_space<vmem>>, vector<8x512xf32>
    tpu.vector_store %arg10[%c0_49, %c0_50], %61 {strides = array<i32>} : memref<72x512xf32, #tpu.memory_space<vmem>>, vector<8x512xf32>,
    %c0_51 = arith.constant 0 : index
    %c112_52 = arith.constant 112 : index
    %63 = vector.load %arg9[%c0_51, %c112_52] : memref<8x768xf32, #tpu.memory_space<vmem>>, vector<8x512xf32>
    %c1_53 = arith.constant 1 : index
    %c0_54 = arith.constant 0 : index
    %64 = vector.load %arg2[%c1_53, %c0_54] : memref<9x512xf32, #tpu.memory_space<vmem>>, vector<1x512xf32>
    %65 = vector.broadcast %64 : vector<1x512xf32> to vector<8x512xf32>
    %66 = arith.mulf %63, %65 : vector<8x512xf32>
    %c8_55 = arith.constant 8 : index
    %c0_56 = arith.constant 0 : index
    %67 = vector.load %arg10[%c8_55, %c0_56] : memref<72x512xf32, #tpu.memory_space<vmem>>, vector<8x512xf32>
    tpu.vector_store %arg10[%c8_55, %c0_56], %66 {strides = array<i32>} : memref<72x512xf32, #tpu.memory_space<vmem>>, vector<8x512xf32>,
    %c0_57 = arith.constant 0 : index
    %c113_58 = arith.constant 113 : index
    %68 = vector.load %arg9[%c0_57, %c113_58] : memref<8x768xf32, #tpu.memory_space<vmem>>, vector<8x512xf32>
    %c2_59 = arith.constant 2 : index
    %c0_60 = arith.constant 0 : index
    %69 = vector.load %arg2[%c2_59, %c0_60] : memref<9x512xf32, #tpu.memory_space<vmem>>, vector<1x512xf32>
    %70 = vector.broadcast %69 : vector<1x512xf32> to vector<8x512xf32>
    %71 = arith.mulf %68, %70 : vector<8x512xf32>
    %c16_61 = arith.constant 16 : index
    %c0_62 = arith.constant 0 : index
    %72 = vector.load %arg10[%c16_61, %c0_62] : memref<72x512xf32, #tpu.memory_space<vmem>>, vector<8x512xf32>
    tpu.vector_store %arg10[%c16_61, %c0_62], %71 {strides = array<i32>} : memref<72x512xf32, #tpu.memory_space<vmem>>, vector<8x512xf32>,
    %c0_63 = arith.constant 0 : index
    %c127_64 = arith.constant 127 : index
    %73 = vector.load %arg9[%c0_63, %c127_64] : memref<8x768xf32, #tpu.memory_space<vmem>>, vector<8x512xf32>
    %c3_65 = arith.constant 3 : index
    %c0_66 = arith.constant 0 : index
    %74 = vector.load %arg2[%c3_65, %c0_66] : memref<9x512xf32, #tpu.memory_space<vmem>>, vector<1x512xf32>
    %75 = vector.broadcast %74 : vector<1x512xf32> to vector<8x512xf32>
    %76 = arith.mulf %73, %75 : vector<8x512xf32>
    %c24_67 = arith.constant 24 : index
    %c0_68 = arith.constant 0 : index
    %77 = vector.load %arg10[%c24_67, %c0_68] : memref<72x512xf32, #tpu.memory_space<vmem>>, vector<8x512xf32>
    tpu.vector_store %arg10[%c24_67, %c0_68], %76 {strides = array<i32>} : memref<72x512xf32, #tpu.memory_space<vmem>>, vector<8x512xf32>,
    %c0_69 = arith.constant 0 : index
    %c128_70 = arith.constant 128 : index
    %78 = vector.load %arg9[%c0_69, %c128_70] : memref<8x768xf32, #tpu.memory_space<vmem>>, vector<8x512xf32>
    %c4_71 = arith.constant 4 : index
    %c0_72 = arith.constant 0 : index
    %79 = vector.load %arg2[%c4_71, %c0_72] : memref<9x512xf32, #tpu.memory_space<vmem>>, vector<1x512xf32>
    %80 = vector.broadcast %79 : vector<1x512xf32> to vector<8x512xf32>
    %81 = arith.mulf %78, %80 : vector<8x512xf32>
    %c32_73 = arith.constant 32 : index
    %c0_74 = arith.constant 0 : index
    %82 = vector.load %arg10[%c32_73, %c0_74] : memref<72x512xf32, #tpu.memory_space<vmem>>, vector<8x512xf32>
    tpu.vector_store %arg10[%c32_73, %c0_74], %81 {strides = array<i32>} : memref<72x512xf32, #tpu.memory_space<vmem>>, vector<8x512xf32>,
    %c0_75 = arith.constant 0 : index
    %c129_76 = arith.constant 129 : index
    %83 = vector.load %arg9[%c0_75, %c129_76] : memref<8x768xf32, #tpu.memory_space<vmem>>, vector<8x512xf32>
    %c5_77 = arith.constant 5 : index
    %c0_78 = arith.constant 0 : index
    %84 = vector.load %arg2[%c5_77, %c0_78] : memref<9x512xf32, #tpu.memory_space<vmem>>, vector<1x512xf32>
    %85 = vector.broadcast %84 : vector<1x512xf32> to vector<8x512xf32>
    %86 = arith.mulf %83, %85 : vector<8x512xf32>
    %c40_79 = arith.constant 40 : index
    %c0_80 = arith.constant 0 : index
    %87 = vector.load %arg10[%c40_79, %c0_80] : memref<72x512xf32, #tpu.memory_space<vmem>>, vector<8x512xf32>
    tpu.vector_store %arg10[%c40_79, %c0_80], %86 {strides = array<i32>} : memref<72x512xf32, #tpu.memory_space<vmem>>, vector<8x512xf32>,
    %c0_81 = arith.constant 0 : index
    %c143_82 = arith.constant 143 : index
    %88 = vector.load %arg9[%c0_81, %c143_82] : memref<8x768xf32, #tpu.memory_space<vmem>>, vector<8x512xf32>
    %c6_83 = arith.constant 6 : index
    %c0_84 = arith.constant 0 : index
    %89 = vector.load %arg2[%c6_83, %c0_84] : memref<9x512xf32, #tpu.memory_space<vmem>>, vector<1x512xf32>
    %90 = vector.broadcast %89 : vector<1x512xf32> to vector<8x512xf32>
    %91 = arith.mulf %88, %90 : vector<8x512xf32>
    %c48_85 = arith.constant 48 : index
    %c0_86 = arith.constant 0 : index
    %92 = vector.load %arg10[%c48_85, %c0_86] : memref<72x512xf32, #tpu.memory_space<vmem>>, vector<8x512xf32>
    tpu.vector_store %arg10[%c48_85, %c0_86], %91 {strides = array<i32>} : memref<72x512xf32, #tpu.memory_space<vmem>>, vector<8x512xf32>,
    %c0_87 = arith.constant 0 : index
    %c144_88 = arith.constant 144 : index
    %93 = vector.load %arg9[%c0_87, %c144_88] : memref<8x768xf32, #tpu.memory_space<vmem>>, vector<8x512xf32>
    %c7_89 = arith.constant 7 : index
    %c0_90 = arith.constant 0 : index
    %94 = vector.load %arg2[%c7_89, %c0_90] : memref<9x512xf32, #tpu.memory_space<vmem>>, vector<1x512xf32>
    %95 = vector.broadcast %94 : vector<1x512xf32> to vector<8x512xf32>
    %96 = arith.mulf %93, %95 : vector<8x512xf32>
    %c56_91 = arith.constant 56 : index
    %c0_92 = arith.constant 0 : index
    %97 = vector.load %arg10[%c56_91, %c0_92] : memref<72x512xf32, #tpu.memory_space<vmem>>, vector<8x512xf32>
    tpu.vector_store %arg10[%c56_91, %c0_92], %96 {strides = array<i32>} : memref<72x512xf32, #tpu.memory_space<vmem>>, vector<8x512xf32>,
    %c0_93 = arith.constant 0 : index
    %c145_94 = arith.constant 145 : index
    %98 = vector.load %arg9[%c0_93, %c145_94] : memref<8x768xf32, #tpu.memory_space<vmem>>, vector<8x512xf32>
    %c8_95 = arith.constant 8 : index
    %c0_96 = arith.constant 0 : index
    %99 = vector.load %arg2[%c8_95, %c0_96] : memref<9x512xf32, #tpu.memory_space<vmem>>, vector<1x512xf32>
    %100 = vector.broadcast %99 : vector<1x512xf32> to vector<8x512xf32>
    %101 = arith.mulf %98, %100 : vector<8x512xf32>
    %c64_97 = arith.constant 64 : index
    %c0_98 = arith.constant 0 : index
    %102 = vector.load %arg10[%c64_97, %c0_98] : memref<72x512xf32, #tpu.memory_space<vmem>>, vector<8x512xf32>
    tpu.vector_store %arg10[%c64_97, %c0_98], %101 {strides = array<i32>} : memref<72x512xf32, #tpu.memory_space<vmem>>, vector<8x512xf32>,
    %c0_99 = arith.constant 0 : index
    %c0_100 = arith.constant 0 : index
    %103 = vector.load %arg6[%c0_99, %c0_100] : memref<8x72xf32, #tpu.memory_space<vmem>>, vector<8x72xf32>
    %c0_101 = arith.constant 0 : index
    %c0_102 = arith.constant 0 : index
    %104 = vector.load %arg10[%c0_101, %c0_102] : memref<72x512xf32, #tpu.memory_space<vmem>>, vector<72x512xf32>
    %cst_103 = arith.constant dense<0.000000e+00> : vector<8x512xf32>
    %105 = tpu.matmul %103, %104, %cst_103 {dimension_numbers = #tpu.dot_dimension_numbers<[1], [0], [0], [1], [0, 0, 1, 1], [], []>, precision = #tpu.contract_precision<fp32>} : vector<8x72xf32>, vector<72x512xf32>, vector<8x512xf32> -> vector<8x512xf32>
    %c0_104 = arith.constant 0 : index
    %c0_105 = arith.constant 0 : index
    %106 = vector.load %arg7[%c0_104, %c0_105] : memref<8x1xf32, #tpu.memory_space<vmem>>, vector<8x1xf32>
    %107 = vector.broadcast %106 : vector<8x1xf32> to vector<8x512xf32>
    %108 = arith.addf %105, %107 : vector<8x512xf32>
    %cst_106 = arith.constant 0.000000e+00 : f32
    %109 = vector.broadcast %cst_106 : f32 to vector<8x512xf32>
    %110 = arith.maximumf %108, %109 : vector<8x512xf32>
    %c0_107 = arith.constant 0 : index
    %c128_108 = arith.constant 128 : index
    %111 = vector.load %arg9[%c0_107, %c128_108] : memref<8x768xf32, #tpu.memory_space<vmem>>, vector<8x512xf32>
    tpu.vector_store %arg9[%c0_107, %c128_108], %110 {strides = array<i32>} : memref<8x768xf32, #tpu.memory_space<vmem>>, vector<8x512xf32>,
    %c0_109 = arith.constant 0 : index
    %c128_110 = arith.constant 128 : index
    %112 = vector.load %arg9[%c0_109, %c128_110] : memref<8x768xf32, #tpu.memory_space<vmem>>, vector<8x512xf32>
    %c0_111 = arith.constant 0 : index
    %c129_112 = arith.constant 129 : index
    %113 = vector.load %arg9[%c0_111, %c129_112] : memref<8x768xf32, #tpu.memory_space<vmem>>, vector<8x512xf32>
    %114 = arith.maximumf %112, %113 : vector<8x512xf32>
    %c0_113 = arith.constant 0 : index
    %c144_114 = arith.constant 144 : index
    %115 = vector.load %arg9[%c0_113, %c144_114] : memref<8x768xf32, #tpu.memory_space<vmem>>, vector<8x512xf32>
    %116 = arith.maximumf %114, %115 : vector<8x512xf32>
    %c0_115 = arith.constant 0 : index
    %c145_116 = arith.constant 145 : index
    %117 = vector.load %arg9[%c0_115, %c145_116] : memref<8x768xf32, #tpu.memory_space<vmem>>, vector<8x512xf32>
    %118 = arith.maximumf %116, %117 : vector<8x512xf32>
    %c0_117 = arith.constant 0 : index
    %c0_118 = arith.constant 0 : index
    %119 = vector.load %arg3[%c0_117, %c0_118] : memref<512x128xf32, #tpu.memory_space<vmem>>, vector<512x128xf32>
    %cst_119 = arith.constant dense<0.000000e+00> : vector<8x128xf32>
    %120 = tpu.matmul %118, %119, %cst_119 {dimension_numbers = #tpu.dot_dimension_numbers<[1], [0], [0], [1], [0, 0, 1, 1], [], []>, precision = #tpu.contract_precision<fp32>} : vector<8x512xf32>, vector<512x128xf32>, vector<8x128xf32> -> vector<8x128xf32>
    %c0_120 = arith.constant 0 : index
    %c0_121 = arith.constant 0 : index
    %121 = vector.load %arg8[%c0_120, %c0_121] : memref<8x128xf32, #tpu.memory_space<vmem>>, vector<8x128xf32>
    tpu.vector_store %arg8[%c0_120, %c0_121], %120 {strides = array<i32>} : memref<8x128xf32, #tpu.memory_space<vmem>>, vector<8x128xf32>,
    return
  }
  func.func @transform_0(%arg0: i32) -> (i32, i32) {
    %c0_i32 = arith.constant 0 : i32
    %c0_i32_0 = arith.constant 0 : i32
    %c0_i32_1 = arith.constant 0 : i32
    return %c0_i32, %c0_i32_0 : i32, i32
  }
  func.func @transform_1(%arg0: i32) -> (i32, i32) {
    %c0_i32 = arith.constant 0 : i32
    %c0_i32_0 = arith.constant 0 : i32
    %c0_i32_1 = arith.constant 0 : i32
    return %c0_i32, %c0_i32_0 : i32, i32
  }
  func.func @transform_2(%arg0: i32) -> (i32, i32) {
    %c0_i32 = arith.constant 0 : i32
    %c0_i32_0 = arith.constant 0 : i32
    %c0_i32_1 = arith.constant 0 : i32
    return %c0_i32, %c0_i32_0 : i32, i32
  }
  func.func @transform_3(%arg0: i32) -> (i32, i32) {
    %c0_i32 = arith.constant 0 : i32
    %c0_i32_0 = arith.constant 0 : i32
    %c0_i32_1 = arith.constant 0 : i32
    return %c0_i32, %c0_i32_0 : i32, i32
  }
  func.func @transform_4(%arg0: i32) -> (i32, i32) {
    %c0_i32 = arith.constant 0 : i32
    %c0_i32_0 = arith.constant 0 : i32
    %c0_i32_1 = arith.constant 0 : i32
    return %c0_i32, %c0_i32_0 : i32, i32
  }
  func.func @transform_5(%arg0: i32) -> (i32, i32) {
    %c0_i32 = arith.constant 0 : i32
    %c0_i32_0 = arith.constant 0 : i32
    %c0_i32_1 = arith.constant 0 : i32
    return %c0_i32, %c0_i32_0 : i32, i32
  }
  func.func @transform_6(%arg0: i32) -> (i32, i32) {
    %c0_i32 = arith.constant 0 : i32
    %c0_i32_0 = arith.constant 0 : i32
    %c0_i32_1 = arith.constant 0 : i32
    return %c0_i32, %c0_i32_0 : i32, i32
  }
  func.func @transform_7(%arg0: i32) -> (i32, i32) {
    %c0_i32 = arith.constant 0 : i32
    %c0_i32_0 = arith.constant 0 : i32
    %c0_i32_1 = arith.constant 0 : i32
    return %c0_i32, %c0_i32_0 : i32, i32
  }
}

</mosaic_0001>

<llo_original>
// kernel: tpu_custom_call.1
$region0: #{tpu_custom_call.1}
  #allocation0 [shape = 'u32[]', space=smem, size = 0x4, offset = 0x4, fixed_abs, tag = 'smem constant byte address 0x4 - core index']
  #allocation1 [shape = 'u32[72,128]{1,0:T(1,128)}', space=vmem, size = 0x9000, scoped, tag = 'internal scratch']
  #allocation2 [shape = 'f32[8,768]{1,0:T(8,128)}', space=vmem, size = 0x6000, scoped, tag = 'scratch operand']
  #allocation3 [shape = 'f32[72,512]{1,0:T(8,128)}', space=vmem, size = 0x24000, scoped, tag = 'scratch operand']
  %s0 = inlined_call_operand.hbm [shape: f32[8,512], index: 0, kind: input, shape index: {}]
  %s1 = inlined_call_operand.hbm [shape: f32[9,512], index: 1, kind: input, shape index: {}]
  %s2 = inlined_call_operand.hbm [shape: f32[512,128], index: 2, kind: input, shape index: {}]
  %s3 = inlined_call_operand.vmem [shape: f32[8,72], index: 3, kind: input, shape index: {}]
  %s4 = inlined_call_operand.vmem [shape: f32[8,1], index: 4, kind: input, shape index: {}]
  %s5 = inlined_call_operand.vmem [shape: f32[8,72], index: 5, kind: input, shape index: {}]
  %s6 = inlined_call_operand.vmem [shape: f32[8,1], index: 6, kind: input, shape index: {}]
  %s7 = inlined_call_operand.hbm [shape: f32[8,128], index: 7, kind: output, shape index: {}]
  %s8 = sld [smem:[#allocation0]]
  $region50: #{tpu_custom_call.1} parent=0
    _
  %s10 = ssub.s32 1, %s8
  %s11 = scalar_select 0, %s10, %s8
  $region1: #{tpu_custom_call.1} parent=0
    #allocation4 [shape = 'u8[16384]{0}', space=vmem, size = 0x4000, scoped, tag = 'input window, operand 0, single buffered']
    #allocation5 [shape = 's32[1]{0}', space=sflag, size = 0x4, scoped, tag = 'scoped memory for tpu_custom_call.1']
    #allocation6 [shape = 's32[1]{0}', space=sflag, size = 0x4, scoped, tag = 'scoped memory for tpu_custom_call.1']
    #allocation7 [shape = 'u8[32768]{0}', space=vmem, size = 0x8000, scoped, tag = 'input window, operand 1, single buffered']
    #allocation8 [shape = 's32[1]{0}', space=sflag, size = 0x4, scoped, tag = 'scoped memory for tpu_custom_call.1']
    #allocation9 [shape = 'u8[262144]{0}', space=vmem, size = 0x40000, scoped, tag = 'input window, operand 2, single buffered']
    #allocation10 [shape = 'u8[4096]{0}', space=vmem, size = 0x1000, scoped, tag = 'output window, operand 0, single buffered']
    %12 = vsyncpa [#allocation5], 0
    %13 = vsyncpa [#allocation8], 0
    %14 = vsyncpa [#allocation6], 0
    // Predicated region
    $region2: #{tpu_custom_call.1} parent=1 // pred_check
      _
    $region3: #{tpu_custom_call.1} parent=1 // pred_check_branch
      %16 = sbr.rel (0) target = $region5
    $region4: #{tpu_custom_call.1} parent=1 // pred_region
      %18 = vsyncadd [#allocation5], 0
      %s20 = sshll.u32 %s0, 4
      %s21 = int_to_ptr.hbm [resolvable:$true] %s20
      %s22 = sshll.u32 [#allocation4], 4
      %s23 = int_to_ptr.vmem [resolvable:$true] %s22
      %25 = dma.hbm_to_vmem [thread:$0]  %s21, 512, %s23, [#allocation5]
    $region5: #{tpu_custom_call.1} parent=1 // pred_fallthru
      _
    // Predicated region
    $region6: #{tpu_custom_call.1} parent=1 // pred_check
      _
    $region7: #{tpu_custom_call.1} parent=1 // pred_check_branch
      %27 = sbr.rel (0) target = $region9
    $region8: #{tpu_custom_call.1} parent=1 // pred_region
      %29 = vsyncadd [#allocation8], 0
      %s30 = sshll.u32 %s1, 4
      %s31 = int_to_ptr.hbm [resolvable:$true] %s30
      %s32 = sshll.u32 [#allocation7], 4
      %s33 = int_to_ptr.vmem [resolvable:$true] %s32
      %38 = dma.hbm_to_vmem [thread:$0]  %s31, 1024, %s33, [#allocation8], 512, 512, 32
    $region9: #{tpu_custom_call.1} parent=1 // pred_fallthru
      _
    // Predicated region
    $region10: #{tpu_custom_call.1} parent=1 // pred_check
      _
    $region11: #{tpu_custom_call.1} parent=1 // pred_check_branch
      %40 = sbr.rel (0) target = $region13
    $region12: #{tpu_custom_call.1} parent=1 // pred_region
      %42 = vsyncadd [#allocation8], 0
      %s43 = sshll.u32 %s2, 4
      %s44 = int_to_ptr.hbm [resolvable:$true] %s43
      %s45 = sshll.u32 [#allocation9], 4
      %s46 = int_to_ptr.vmem [resolvable:$true] %s45
      %51 = dma.hbm_to_vmem [thread:$0]  %s44, 8192, %s46, [#allocation8], 128, 128, 8
    $region13: #{tpu_custom_call.1} parent=1 // pred_fallthru
      _
    // Predicated region
    $region14: #{tpu_custom_call.1} parent=1 // pred_check
      _
    $region15: #{tpu_custom_call.1} parent=1 // pred_check_branch
      %53 = sbr.rel (0) target = $region17
    $region16: #{tpu_custom_call.1} parent=1 // pred_region
      _
    $region17: #{tpu_custom_call.1} parent=1 // pred_fallthru
      _
    // Predicated region
    $region18: #{tpu_custom_call.1} parent=1 // pred_check
      _
    $region19: #{tpu_custom_call.1} parent=1 // pred_check_branch
      %55 = sbr.rel (0) target = $region21
    $region20: #{tpu_custom_call.1} parent=1 // pred_region
      _
    $region21: #{tpu_custom_call.1} parent=1 // pred_fallthru
      _
    // Predicated region
    $region22: #{tpu_custom_call.1} parent=1 // pred_check
      _
    $region23: #{tpu_custom_call.1} parent=1 // pred_check_branch
      %57 = sbr.rel (0) target = $region25
    $region24: #{tpu_custom_call.1} parent=1 // pred_region
      _
    $region25: #{tpu_custom_call.1} parent=1 // pred_fallthru
      _
    // Predicated region
    $region26: #{tpu_custom_call.1} parent=1 // pred_check
      _
    $region27: #{tpu_custom_call.1} parent=1 // pred_check_branch
      %59 = sbr.rel (0) target = $region29
    $region28: #{tpu_custom_call.1} parent=1 // pred_region
      _
    $region29: #{tpu_custom_call.1} parent=1 // pred_fallthru
      _
    // Predicated region
    $region30: #{tpu_custom_call.1} parent=1 // pred_check
      _
    $region31: #{tpu_custom_call.1} parent=1 // pred_check_branch
      %61 = sbr.rel (0) target = $region33
    $region32: #{tpu_custom_call.1} parent=1 // pred_region
      %63 = dma.done [#allocation5], 512
    $region33: #{tpu_custom_call.1} parent=1 // pred_fallthru
      _
    // Predicated region
    $region34: #{tpu_custom_call.1} parent=1 // pred_check
      _
    $region35: #{tpu_custom_call.1} parent=1 // pred_check_branch
      %65 = sbr.rel (0) target = $region37
    $region36: #{tpu_custom_call.1} parent=1 // pred_region
      %67 = dma.done [#allocation8], 1024
    $region37: #{tpu_custom_call.1} parent=1 // pred_fallthru
      _
    // Predicated region
    $region38: #{tpu_custom_call.1} parent=1 // pred_check
      _
    $region39: #{tpu_custom_call.1} parent=1 // pred_check_branch
      %69 = sbr.rel (0) target = $region41
    $region40: #{tpu_custom_call.1} parent=1 // pred_region
      %71 = dma.done [#allocation8], 8192
    $region41: #{tpu_custom_call.1} parent=1 // pred_fallthru
      _
    %72 = vst [vmem:[#allocation2] sm:$0xff] 0.0
    %73 = vst [vmem:[#allocation2 + $0x8] sm:$0xff] 0.0
    %74 = vst [vmem:[#allocation2 + $0x10] sm:$0xff] 0.0
    %75 = vst [vmem:[#allocation2 + $0x18] sm:$0xff] 0.0
    %76 = vst [vmem:[#allocation2 + $0x20] sm:$0xff] 0.0
    %77 = vst [vmem:[#allocation2 + $0x28] sm:$0xff] 0.0
    %v78 = vld [vmem:[#allocation4] sm:$0xff]
    %v79 = vld [vmem:[#allocation4 + $0x8] sm:$0xff]
    %v80 = vld [vmem:[#allocation4 + $0x10] sm:$0xff]
    %v81 = vld [vmem:[#allocation4 + $0x18] sm:$0xff]
    %82 = vst [vmem:[#allocation2 + $0x8] sm:$0xff] %v78
    %83 = vst [vmem:[#allocation2 + $0x10] sm:$0xff] %v79
    %84 = vst [vmem:[#allocation2 + $0x18] sm:$0xff] %v80
    %85 = vst [vmem:[#allocation2 + $0x20] sm:$0xff] %v81
    %v86 = vld [vmem:[#allocation2] sm:$0xff]
    %v87 = vld [vmem:[#allocation2 + $0x8] sm:$0xff]
    %v88 = vld [vmem:[#allocation2 + $0x10] sm:$0xff]
    %v89 = vld [vmem:[#allocation2 + $0x18] sm:$0xff]
    %v90 = vld [vmem:[#allocation2 + $0x20] sm:$0xff]
    %v91 = vld [vmem:[#allocation7] ss:$8 sm:$0xf]
    %v93 = vperm.slane %v91, 0
    %v94 = vperm.slane %v91, 1
    %v95 = vperm.slane %v91, 2
    %v96 = vperm.slane %v91, 3
    %97 = vrot.lane.b32.xlu0 %v93, 111
    %v98 = vpop.permute.xlu0 %97
    %99 = vrot.lane.b32.xlu0 %v94, 111
    %v100 = vpop.permute.xlu0 %99
    %101 = vrot.lane.b32.xlu0 %v95, 111
    %v102 = vpop.permute.xlu0 %101
    %103 = vrot.lane.b32.xlu0 %v96, 111
    %v104 = vpop.permute.xlu0 %103
    %vm105 = vcmask 908288
    %v106 = vsel %vm105, %v98, %v100
    %v107 = vsel %vm105, %v100, %v102
    %v108 = vsel %vm105, %v102, %v104
    %v114 = vmul.f32 %v86, %v98
    %v115 = vmul.f32 %v87, %v106
    %v116 = vmul.f32 %v88, %v107
    %v117 = vmul.f32 %v89, %v108
    %v118 = vmul.f32 %v90, %v104
    %124 = vrot.lane.b32.xlu0 %v114, 17
    %v125 = vpop.permute.xlu0 %124
    %126 = vrot.lane.b32.xlu0 %v115, 17
    %v127 = vpop.permute.xlu0 %126
    %128 = vrot.lane.b32.xlu0 %v116, 17
    %v129 = vpop.permute.xlu0 %128
    %130 = vrot.lane.b32.xlu0 %v117, 17
    %v131 = vpop.permute.xlu0 %130
    %132 = vrot.lane.b32.xlu0 %v118, 17
    %v133 = vpop.permute.xlu0 %132
    %vm134 = vcmask 138240
    %v135 = vsel %vm134, %v125, %v127
    %v136 = vsel %vm134, %v127, %v129
    %v137 = vsel %vm134, %v129, %v131
    %v138 = vsel %vm134, %v131, %v133
    %143 = vst [vmem:[#allocation3] sm:$0xff] %v135
    %144 = vst [vmem:[#allocation3 + $0x8] sm:$0xff] %v136
    %145 = vst [vmem:[#allocation3 + $0x10] sm:$0xff] %v137
    %146 = vst [vmem:[#allocation3 + $0x18] sm:$0xff] %v138
    %v147 = vld [vmem:[#allocation2] sm:$0xff]
    %v148 = vld [vmem:[#allocation2 + $0x8] sm:$0xff]
    %v149 = vld [vmem:[#allocation2 + $0x10] sm:$0xff]
    %v150 = vld [vmem:[#allocation2 + $0x18] sm:$0xff]
    %v151 = vld [vmem:[#allocation2 + $0x20] sm:$0xff]
    %s152 = scalar_lea.vmem [#allocation7], 1
    %v153 = vld [vmem:[%s152] ss:$8 sm:$0xf]
    %v155 = vperm.slane %v153, 0
    %v156 = vperm.slane %v153, 1
    %v157 = vperm.slane %v153, 2
    %v158 = vperm.slane %v153, 3
    %159 = vrot.lane.b32.xlu0 %v155, 112
    %v160 = vpop.permute.xlu0 %159
    %161 = vrot.lane.b32.xlu0 %v156, 112
    %v162 = vpop.permute.xlu0 %161
    %163 = vrot.lane.b32.xlu0 %v157, 112
    %v164 = vpop.permute.xlu0 %163
    %165 = vrot.lane.b32.xlu0 %v158, 112
    %v166 = vpop.permute.xlu0 %165
    %vm167 = vcmask 916480
    %v168 = vsel %vm167, %v160, %v162
    %v169 = vsel %vm167, %v162, %v164
    %v170 = vsel %vm167, %v164, %v166
    %v176 = vmul.f32 %v147, %v160
    %v177 = vmul.f32 %v148, %v168
    %v178 = vmul.f32 %v149, %v169
    %v179 = vmul.f32 %v150, %v170
    %v180 = vmul.f32 %v151, %v166
    %186 = vrot.lane.b32.xlu0 %v176, 16
    %v187 = vpop.permute.xlu0 %186
    %188 = vrot.lane.b32.xlu0 %v177, 16
    %v189 = vpop.permute.xlu0 %188
    %190 = vrot.lane.b32.xlu0 %v178, 16
    %v191 = vpop.permute.xlu0 %190
    %192 = vrot.lane.b32.xlu0 %v179, 16
    %v193 = vpop.permute.xlu0 %192
    %194 = vrot.lane.b32.xlu0 %v180, 16
    %v195 = vpop.permute.xlu0 %194
    %vm196 = vcmask 130048
    %v197 = vsel %vm196, %v187, %v189
    %v198 = vsel %vm196, %v189, %v191
    %v199 = vsel %vm196, %v191, %v193
    %v200 = vsel %vm196, %v193, %v195
    %205 = vst [vmem:[#allocation3 + $0x20] sm:$0xff] %v197
    %206 = vst [vmem:[#allocation3 + $0x28] sm:$0xff] %v198
    %207 = vst [vmem:[#allocation3 + $0x30] sm:$0xff] %v199
    %208 = vst [vmem:[#allocation3 + $0x38] sm:$0xff] %v200
    %v209 = vld [vmem:[#allocation2] sm:$0xff]
    %v210 = vld [vmem:[#allocation2 + $0x8] sm:$0xff]
    %v211 = vld [vmem:[#allocation2 + $0x10] sm:$0xff]
    %v212 = vld [vmem:[#allocation2 + $0x18] sm:$0xff]
    %v213 = vld [vmem:[#allocation2 + $0x20] sm:$0xff]
    %s214 = scalar_lea.vmem [#allocation7], 2
    %v215 = vld [vmem:[%s214] ss:$8 sm:$0xf]
    %v217 = vperm.slane %v215, 0
    %v218 = vperm.slane %v215, 1
    %v219 = vperm.slane %v215, 2
    %v220 = vperm.slane %v215, 3
    %221 = vrot.lane.b32.xlu0 %v217, 113
    %v222 = vpop.permute.xlu0 %221
    %223 = vrot.lane.b32.xlu0 %v218, 113
    %v224 = vpop.permute.xlu0 %223
    %225 = vrot.lane.b32.xlu0 %v219, 113
    %v226 = vpop.permute.xlu0 %225
    %227 = vrot.lane.b32.xlu0 %v220, 113
    %v228 = vpop.permute.xlu0 %227
    %vm229 = vcmask 924672
    %v230 = vsel %vm229, %v222, %v224
    %v231 = vsel %vm229, %v224, %v226
    %v232 = vsel %vm229, %v226, %v228
    %v238 = vmul.f32 %v209, %v222
    %v239 = vmul.f32 %v210, %v230
    %v240 = vmul.f32 %v211, %v231
    %v241 = vmul.f32 %v212, %v232
    %v242 = vmul.f32 %v213, %v228
    %248 = vrot.lane.b32.xlu0 %v238, 15
    %v249 = vpop.permute.xlu0 %248
    %250 = vrot.lane.b32.xlu0 %v239, 15
    %v251 = vpop.permute.xlu0 %250
    %252 = vrot.lane.b32.xlu0 %v240, 15
    %v253 = vpop.permute.xlu0 %252
    %254 = vrot.lane.b32.xlu0 %v241, 15
    %v255 = vpop.permute.xlu0 %254
    %256 = vrot.lane.b32.xlu0 %v242, 15
    %v257 = vpop.permute.xlu0 %256
    %vm258 = vcmask 121856
    %v259 = vsel %vm258, %v249, %v251
    %v260 = vsel %vm258, %v251, %v253
    %v261 = vsel %vm258, %v253, %v255
    %v262 = vsel %vm258, %v255, %v257
    %267 = vst [vmem:[#allocation3 + $0x40] sm:$0xff] %v259
    %268 = vst [vmem:[#allocation3 + $0x48] sm:$0xff] %v260
    %269 = vst [vmem:[#allocation3 + $0x50] sm:$0xff] %v261
    %270 = vst [vmem:[#allocation3 + $0x58] sm:$0xff] %v262
    %v271 = vld [vmem:[#allocation2] sm:$0xff]
    %v272 = vld [vmem:[#allocation2 + $0x8] sm:$0xff]
    %v273 = vld [vmem:[#allocation2 + $0x10] sm:$0xff]
    %v274 = vld [vmem:[#allocation2 + $0x18] sm:$0xff]
    %v275 = vld [vmem:[#allocation2 + $0x20] sm:$0xff]
    %s276 = scalar_lea.vmem [#allocation7], 3
    %v277 = vld [vmem:[%s276] ss:$8 sm:$0xf]
    %v279 = vperm.slane %v277, 0
    %v280 = vperm.slane %v277, 1
    %v281 = vperm.slane %v277, 2
    %v282 = vperm.slane %v277, 3
    %283 = vrot.lane.b32.xlu0 %v279, 127
    %v284 = vpop.permute.xlu0 %283
    %285 = vrot.lane.b32.xlu0 %v280, 127
    %v286 = vpop.permute.xlu0 %285
    %287 = vrot.lane.b32.xlu0 %v281, 127
    %v288 = vpop.permute.xlu0 %287
    %289 = vrot.lane.b32.xlu0 %v282, 127
    %v290 = vpop.permute.xlu0 %289
    %vm291 = vcmask 1039360
    %v292 = vsel %vm291, %v284, %v286
    %v293 = vsel %vm291, %v286, %v288
    %v294 = vsel %vm291, %v288, %v290
    %v300 = vmul.f32 %v271, %v284
    %v301 = vmul.f32 %v272, %v292
    %v302 = vmul.f32 %v273, %v293
    %v303 = vmul.f32 %v274, %v294
    %v304 = vmul.f32 %v275, %v290
    %310 = vrot.lane.b32.xlu0 %v300, 1
    %v311 = vpop.permute.xlu0 %310
    %312 = vrot.lane.b32.xlu0 %v301, 1
    %v313 = vpop.permute.xlu0 %312
    %314 = vrot.lane.b32.xlu0 %v302, 1
    %v315 = vpop.permute.xlu0 %314
    %316 = vrot.lane.b32.xlu0 %v303, 1
    %v317 = vpop.permute.xlu0 %316
    %318 = vrot.lane.b32.xlu0 %v304, 1
    %v319 = vpop.permute.xlu0 %318
    %vm320 = vcmask 7168
    %v321 = vsel %vm320, %v311, %v313
    %v322 = vsel %vm320, %v313, %v315
    %v323 = vsel %vm320, %v315, %v317
    %v324 = vsel %vm320, %v317, %v319
    %329 = vst [vmem:[#allocation3 + $0x60] sm:$0xff] %v321
    %330 = vst [vmem:[#allocation3 + $0x68] sm:$0xff] %v322
    %331 = vst [vmem:[#allocation3 + $0x70] sm:$0xff] %v323
    %332 = vst [vmem:[#allocation3 + $0x78] sm:$0xff] %v324
    %v333 = vld [vmem:[#allocation2 + $0x8] sm:$0xff]
    %v334 = vld [vmem:[#allocation2 + $0x10] sm:$0xff]
    %v335 = vld [vmem:[#allocation2 + $0x18] sm:$0xff]
    %v336 = vld [vmem:[#allocation2 + $0x20] sm:$0xff]
    %s337 = scalar_lea.vmem [#allocation7], 4
    %v338 = vld [vmem:[%s337] ss:$8 sm:$0xf]
    %v340 = vperm.slane %v338, 0
    %v341 = vperm.slane %v338, 1
    %v342 = vperm.slane %v338, 2
    %v343 = vperm.slane %v338, 3
    %v348 = vmul.f32 %v333, %v340
    %v349 = vmul.f32 %v334, %v341
    %v350 = vmul.f32 %v335, %v342
    %v351 = vmul.f32 %v336, %v343
    %352 = vst [vmem:[#allocation3 + $0x80] sm:$0xff] %v348
    %353 = vst [vmem:[#allocation3 + $0x88] sm:$0xff] %v349
    %354 = vst [vmem:[#allocation3 + $0x90] sm:$0xff] %v350
    %355 = vst [vmem:[#allocation3 + $0x98] sm:$0xff] %v351
    %v356 = vld [vmem:[#allocation2 + $0x8] sm:$0xff]
    %v357 = vld [vmem:[#allocation2 + $0x10] sm:$0xff]
    %v358 = vld [vmem:[#allocation2 + $0x18] sm:$0xff]
    %v359 = vld [vmem:[#allocation2 + $0x20] sm:$0xff]
    %v360 = vld [vmem:[#allocation2 + $0x28] sm:$0xff]
    %s361 = scalar_lea.vmem [#allocation7], 5
    %v362 = vld [vmem:[%s361] ss:$8 sm:$0xf]
    %v364 = vperm.slane %v362, 0
    %v365 = vperm.slane %v362, 1
    %v366 = vperm.slane %v362, 2
    %v367 = vperm.slane %v362, 3
    %368 = vrot.lane.b32.xlu0 %v364, 1
    %v369 = vpop.permute.xlu0 %368
    %370 = vrot.lane.b32.xlu0 %v365, 1
    %v371 = vpop.permute.xlu0 %370
    %372 = vrot.lane.b32.xlu0 %v366, 1
    %v373 = vpop.permute.xlu0 %372
    %374 = vrot.lane.b32.xlu0 %v367, 1
    %v375 = vpop.permute.xlu0 %374
    %v376 = vsel %vm320, %v369, %v371
    %v377 = vsel %vm320, %v371, %v373
    %v378 = vsel %vm320, %v373, %v375
    %v384 = vmul.f32 %v356, %v369
    %v385 = vmul.f32 %v357, %v376
    %v386 = vmul.f32 %v358, %v377
    %v387 = vmul.f32 %v359, %v378
    %v388 = vmul.f32 %v360, %v375
    %394 = vrot.lane.b32.xlu0 %v384, 127
    %v395 = vpop.permute.xlu0 %394
    %396 = vrot.lane.b32.xlu0 %v385, 127
    %v397 = vpop.permute.xlu0 %396
    %398 = vrot.lane.b32.xlu0 %v386, 127
    %v399 = vpop.permute.xlu0 %398
    %400 = vrot.lane.b32.xlu0 %v387, 127
    %v401 = vpop.permute.xlu0 %400
    %402 = vrot.lane.b32.xlu0 %v388, 127
    %v403 = vpop.permute.xlu0 %402
    %v404 = vsel %vm291, %v395, %v397
    %v405 = vsel %vm291, %v397, %v399
    %v406 = vsel %vm291, %v399, %v401
    %v407 = vsel %vm291, %v401, %v403
    %412 = vst [vmem:[#allocation3 + $0xa0] sm:$0xff] %v404
    %413 = vst [vmem:[#allocation3 + $0xa8] sm:$0xff] %v405
    %414 = vst [vmem:[#allocation3 + $0xb0] sm:$0xff] %v406
    %415 = vst [vmem:[#allocation3 + $0xb8] sm:$0xff] %v407
    %v416 = vld [vmem:[#allocation2 + $0x8] sm:$0xff]
    %v417 = vld [vmem:[#allocation2 + $0x10] sm:$0xff]
    %v418 = vld [vmem:[#allocation2 + $0x18] sm:$0xff]
    %v419 = vld [vmem:[#allocation2 + $0x20] sm:$0xff]
    %v420 = vld [vmem:[#allocation2 + $0x28] sm:$0xff]
    %s421 = scalar_lea.vmem [#allocation7], 6
    %v422 = vld [vmem:[%s421] ss:$8 sm:$0xf]
    %v424 = vperm.slane %v422, 0
    %v425 = vperm.slane %v422, 1
    %v426 = vperm.slane %v422, 2
    %v427 = vperm.slane %v422, 3
    %428 = vrot.lane.b32.xlu0 %v424, 15
    %v429 = vpop.permute.xlu0 %428
    %430 = vrot.lane.b32.xlu0 %v425, 15
    %v431 = vpop.permute.xlu0 %430
    %432 = vrot.lane.b32.xlu0 %v426, 15
    %v433 = vpop.permute.xlu0 %432
    %434 = vrot.lane.b32.xlu0 %v427, 15
    %v435 = vpop.permute.xlu0 %434
    %v436 = vsel %vm258, %v429, %v431
    %v437 = vsel %vm258, %v431, %v433
    %v438 = vsel %vm258, %v433, %v435
    %v444 = vmul.f32 %v416, %v429
    %v445 = vmul.f32 %v417, %v436
    %v446 = vmul.f32 %v418, %v437
    %v447 = vmul.f32 %v419, %v438
    %v448 = vmul.f32 %v420, %v435
    %454 = vrot.lane.b32.xlu0 %v444, 113
    %v455 = vpop.permute.xlu0 %454
    %456 = vrot.lane.b32.xlu0 %v445, 113
    %v457 = vpop.permute.xlu0 %456
    %458 = vrot.lane.b32.xlu0 %v446, 113
    %v459 = vpop.permute.xlu0 %458
    %460 = vrot.lane.b32.xlu0 %v447, 113
    %v461 = vpop.permute.xlu0 %460
    %462 = vrot.lane.b32.xlu0 %v448, 113
    %v463 = vpop.permute.xlu0 %462
    %v464 = vsel %vm229, %v455, %v457
    %v465 = vsel %vm229, %v457, %v459
    %v466 = vsel %vm229, %v459, %v461
    %v467 = vsel %vm229, %v461, %v463
    %472 = vst [vmem:[#allocation3 + $0xc0] sm:$0xff] %v464
    %473 = vst [vmem:[#allocation3 + $0xc8] sm:$0xff] %v465
    %474 = vst [vmem:[#allocation3 + $0xd0] sm:$0xff] %v466
    %475 = vst [vmem:[#allocation3 + $0xd8] sm:$0xff] %v467
    %v476 = vld [vmem:[#allocation2 + $0x8] sm:$0xff]
    %v477 = vld [vmem:[#allocation2 + $0x10] sm:$0xff]
    %v478 = vld [vmem:[#allocation2 + $0x18] sm:$0xff]
    %v479 = vld [vmem:[#allocation2 + $0x20] sm:$0xff]
    %v480 = vld [vmem:[#allocation2 + $0x28] sm:$0xff]
    %s481 = scalar_lea.vmem [#allocation7], 7
    %v482 = vld [vmem:[%s481] ss:$8 sm:$0xf]
    %v484 = vperm.slane %v482, 0
    %v485 = vperm.slane %v482, 1
    %v486 = vperm.slane %v482, 2
    %v487 = vperm.slane %v482, 3
    %488 = vrot.lane.b32.xlu0 %v484, 16
    %v489 = vpop.permute.xlu0 %488
    %490 = vrot.lane.b32.xlu0 %v485, 16
    %v491 = vpop.permute.xlu0 %490
    %492 = vrot.lane.b32.xlu0 %v486, 16
    %v493 = vpop.permute.xlu0 %492
    %494 = vrot.lane.b32.xlu0 %v487, 16
    %v495 = vpop.permute.xlu0 %494
    %v496 = vsel %vm196, %v489, %v491
    %v497 = vsel %vm196, %v491, %v493
    %v498 = vsel %vm196, %v493, %v495
    %v504 = vmul.f32 %v476, %v489
    %v505 = vmul.f32 %v477, %v496
    %v506 = vmul.f32 %v478, %v497
    %v507 = vmul.f32 %v479, %v498
    %v508 = vmul.f32 %v480, %v495
    %514 = vrot.lane.b32.xlu0 %v504, 112
    %v515 = vpop.permute.xlu0 %514
    %516 = vrot.lane.b32.xlu0 %v505, 112
    %v517 = vpop.permute.xlu0 %516
    %518 = vrot.lane.b32.xlu0 %v506, 112
    %v519 = vpop.permute.xlu0 %518
    %520 = vrot.lane.b32.xlu0 %v507, 112
    %v521 = vpop.permute.xlu0 %520
    %522 = vrot.lane.b32.xlu0 %v508, 112
    %v523 = vpop.permute.xlu0 %522
    %v524 = vsel %vm167, %v515, %v517
    %v525 = vsel %vm167, %v517, %v519
    %v526 = vsel %vm167, %v519, %v521
    %v527 = vsel %vm167, %v521, %v523
    %532 = vst [vmem:[#allocation3 + $0xe0] sm:$0xff] %v524
    %533 = vst [vmem:[#allocation3 + $0xe8] sm:$0xff] %v525
    %534 = vst [vmem:[#allocation3 + $0xf0] sm:$0xff] %v526
    %535 = vst [vmem:[#allocation3 + $0xf8] sm:$0xff] %v527
    %v536 = vld [vmem:[#allocation2 + $0x8] sm:$0xff]
    %v537 = vld [vmem:[#allocation2 + $0x10] sm:$0xff]
    %v538 = vld [vmem:[#allocation2 + $0x18] sm:$0xff]
    %v539 = vld [vmem:[#allocation2 + $0x20] sm:$0xff]
    %v540 = vld [vmem:[#allocation2 + $0x28] sm:$0xff]
    %s541 = scalar_lea.vmem [#allocation7], 32
    %v542 = vld [vmem:[%s541] ss:$8 sm:$0xf]
    %v544 = vperm.slane %v542, 0
    %v545 = vperm.slane %v542, 1
    %v546 = vperm.slane %v542, 2
    %v547 = vperm.slane %v542, 3
    %548 = vrot.lane.b32.xlu0 %v544, 17
    %v549 = vpop.permute.xlu0 %548
    %550 = vrot.lane.b32.xlu0 %v545, 17
    %v551 = vpop.permute.xlu0 %550
    %552 = vrot.lane.b32.xlu0 %v546, 17
    %v553 = vpop.permute.xlu0 %552
    %554 = vrot.lane.b32.xlu0 %v547, 17
    %v555 = vpop.permute.xlu0 %554
    %v556 = vsel %vm134, %v549, %v551
    %v557 = vsel %vm134, %v551, %v553
    %v558 = vsel %vm134, %v553, %v555
    %v564 = vmul.f32 %v536, %v549
    %v565 = vmul.f32 %v537, %v556
    %v566 = vmul.f32 %v538, %v557
    %v567 = vmul.f32 %v539, %v558
    %v568 = vmul.f32 %v540, %v555
    %574 = vrot.lane.b32.xlu0 %v564, 111
    %v575 = vpop.permute.xlu0 %574
    %576 = vrot.lane.b32.xlu0 %v565, 111
    %v577 = vpop.permute.xlu0 %576
    %578 = vrot.lane.b32.xlu0 %v566, 111
    %v579 = vpop.permute.xlu0 %578
    %580 = vrot.lane.b32.xlu0 %v567, 111
    %v581 = vpop.permute.xlu0 %580
    %582 = vrot.lane.b32.xlu0 %v568, 111
    %v583 = vpop.permute.xlu0 %582
    %v584 = vsel %vm105, %v575, %v577
    %v585 = vsel %vm105, %v577, %v579
    %v586 = vsel %vm105, %v579, %v581
    %v587 = vsel %vm105, %v581, %v583
    %592 = vst [vmem:[#allocation3 + $0x100] sm:$0xff] %v584
    %593 = vst [vmem:[#allocation3 + $0x108] sm:$0xff] %v585
    %594 = vst [vmem:[#allocation3 + $0x110] sm:$0xff] %v586
    %595 = vst [vmem:[#allocation3 + $0x118] sm:$0xff] %v587
    %v596 = vld [vmem:[%s3] sm:$0xff]
    %v597 = vld [vmem:[#allocation3] sm:$0xff]
    %v598 = vld [vmem:[#allocation3 + $0x8] sm:$0xff]
    %v599 = vld [vmem:[#allocation3 + $0x10] sm:$0xff]
    %v600 = vld [vmem:[#allocation3 + $0x18] sm:$0xff]
    %v601 = vld [vmem:[#allocation3 + $0x20] sm:$0xff]
    %v602 = vld [vmem:[#allocation3 + $0x28] sm:$0xff]
    %v603 = vld [vmem:[#allocation3 + $0x30] sm:$0xff]
    %v604 = vld [vmem:[#allocation3 + $0x38] sm:$0xff]
    %v605 = vld [vmem:[#allocation3 + $0x40] sm:$0xff]
    %v606 = vld [vmem:[#allocation3 + $0x48] sm:$0xff]
    %v607 = vld [vmem:[#allocation3 + $0x50] sm:$0xff]
    %v608 = vld [vmem:[#allocation3 + $0x58] sm:$0xff]
    %v609 = vld [vmem:[#allocation3 + $0x60] sm:$0xff]
    %v610 = vld [vmem:[#allocation3 + $0x68] sm:$0xff]
    %v611 = vld [vmem:[#allocation3 + $0x70] sm:$0xff]
    %v612 = vld [vmem:[#allocation3 + $0x78] sm:$0xff]
    %v613 = vld [vmem:[#allocation3 + $0x80] sm:$0xff]
    %v614 = vld [vmem:[#allocation3 + $0x88] sm:$0xff]
    %v615 = vld [vmem:[#allocation3 + $0x90] sm:$0xff]
    %v616 = vld [vmem:[#allocation3 + $0x98] sm:$0xff]
    %v617 = vld [vmem:[#allocation3 + $0xa0] sm:$0xff]
    %v618 = vld [vmem:[#allocation3 + $0xa8] sm:$0xff]
    %v619 = vld [vmem:[#allocation3 + $0xb0] sm:$0xff]
    %v620 = vld [vmem:[#allocation3 + $0xb8] sm:$0xff]
    %v621 = vld [vmem:[#allocation3 + $0xc0] sm:$0xff]
    %v622 = vld [vmem:[#allocation3 + $0xc8] sm:$0xff]
    %v623 = vld [vmem:[#allocation3 + $0xd0] sm:$0xff]
    %v624 = vld [vmem:[#allocation3 + $0xd8] sm:$0xff]
    %v625 = vld [vmem:[#allocation3 + $0xe0] sm:$0xff]
    %v626 = vld [vmem:[#allocation3 + $0xe8] sm:$0xff]
    %v627 = vld [vmem:[#allocation3 + $0xf0] sm:$0xff]
    %v628 = vld [vmem:[#allocation3 + $0xf8] sm:$0xff]
    %v629 = vld [vmem:[#allocation3 + $0x100] sm:$0xff]
    %v630 = vld [vmem:[#allocation3 + $0x108] sm:$0xff]
    %v631 = vld [vmem:[#allocation3 + $0x110] sm:$0xff]
    %v632 = vld [vmem:[#allocation3 + $0x118] sm:$0xff]
    %v633 = vld [vmem:[%s4] sm:$0xff]
    %635 = vset.pattern.permute.xlu0 0
    %636 = vperm.xlu0 %635, %v633
    %v637 = vpop.permute.xlu0 %636
    %vm639 = vcmask 588800
    %v641 = vsel %vm639, %v596, 0
    %643 = vmatpush.msra.mxu0 0.0
    %644 = vmatpush.msra.mxu0 0.0
    %645 = vmatpush.msra.mxu0 0.0
    %646 = vmatpush.msra.mxu0 0.0
    %647 = vmatpush.msra.mxu0 0.0
    %648 = vmatpush.msra.mxu0 0.0
    %649 = vmatpush.msra.mxu0 0.0
    %v650 = vand.u32 %v629, 4294901760
    %651 = vmatpush.msra.mxu0 %v650
    %v652 = vand.u32 %v625, 4294901760
    %653 = vmatpush.msra.mxu0 %v652
    %v654 = vand.u32 %v621, 4294901760
    %655 = vmatpush.msra.mxu0 %v654
    %v656 = vand.u32 %v617, 4294901760
    %657 = vmatpush.msra.mxu0 %v656
    %v658 = vand.u32 %v613, 4294901760
    %659 = vmatpush.msra.mxu0 %v658
    %v660 = vand.u32 %v609, 4294901760
    %661 = vmatpush.msra.mxu0 %v660
    %v662 = vand.u32 %v605, 4294901760
    %663 = vmatpush.msra.mxu0 %v662
    %v664 = vand.u32 %v601, 4294901760
    %665 = vmatpush.msra.mxu0 %v664
    %v666 = vand.u32 %v597, 4294901760
    %667 = vmatpush.msra.mxu0 %v666
    %v668 = vand.u32 %v641, 4294901760
    %v669 = vsub.f32 %v641, %v668
    %v670 = vand.u32 %v669, 4294901760
    %v671 = vsub.f32 %v669, %v670
    %v672 = vand.u32 %v671, 4294901760
    %673 = vmatmul.f32.gmra.mxu0 %v672
    %v674 = vpop.f32.mrf.mxu0
    %v675 = vadd.f32 %v637, %v674
    %676 = vdwg.mxu0
    %677 = vmatpush.msra.mxu0 0.0
    %678 = vmatpush.msra.mxu0 0.0
    %679 = vmatpush.msra.mxu0 0.0
    %680 = vmatpush.msra.mxu0 0.0
    %681 = vmatpush.msra.mxu0 0.0
    %682 = vmatpush.msra.mxu0 0.0
    %683 = vmatpush.msra.mxu0 0.0
    %v684 = vand.u32 %v629, 4294901760
    %v685 = vsub.f32 %v629, %v684
    %v686 = vand.u32 %v685, 4294901760
    %v687 = vsub.f32 %v685, %v686
    %v688 = vand.u32 %v687, 4294901760
    %689 = vmatpush.msra.mxu0 %v688
    %v690 = vand.u32 %v625, 4294901760
    %v691 = vsub.f32 %v625, %v690
    %v692 = vand.u32 %v691, 4294901760
    %v693 = vsub.f32 %v691, %v692
    %v694 = vand.u32 %v693, 4294901760
    %695 = vmatpush.msra.mxu0 %v694
    %v696 = vand.u32 %v621, 4294901760
    %v697 = vsub.f32 %v621, %v696
    %v698 = vand.u32 %v697, 4294901760
    %v699 = vsub.f32 %v697, %v698
    %v700 = vand.u32 %v699, 4294901760
    %701 = vmatpush.msra.mxu0 %v700
    %v702 = vand.u32 %v617, 4294901760
    %v703 = vsub.f32 %v617, %v702
    %v704 = vand.u32 %v703, 4294901760
    %v705 = vsub.f32 %v703, %v704
    %v706 = vand.u32 %v705, 4294901760
    %707 = vmatpush.msra.mxu0 %v706
    %v708 = vand.u32 %v613, 4294901760
    %v709 = vsub.f32 %v613, %v708
    %v710 = vand.u32 %v709, 4294901760
    %v711 = vsub.f32 %v709, %v710
    %v712 = vand.u32 %v711, 4294901760
    %713 = vmatpush.msra.mxu0 %v712
    %v714 = vand.u32 %v609, 4294901760
    %v715 = vsub.f32 %v609, %v714
    %v716 = vand.u32 %v715, 4294901760
    %v717 = vsub.f32 %v715, %v716
    %v718 = vand.u32 %v717, 4294901760
    %719 = vmatpush.msra.mxu0 %v718
    %v720 = vand.u32 %v605, 4294901760
    %v721 = vsub.f32 %v605, %v720
    %v722 = vand.u32 %v721, 4294901760
    %v723 = vsub.f32 %v721, %v722
    %v724 = vand.u32 %v723, 4294901760
    %725 = vmatpush.msra.mxu0 %v724
    %v726 = vand.u32 %v601, 4294901760
    %v727 = vsub.f32 %v601, %v726
    %v728 = vand.u32 %v727, 4294901760
    %v729 = vsub.f32 %v727, %v728
    %v730 = vand.u32 %v729, 4294901760
    %731 = vmatpush.msra.mxu0 %v730
    %v732 = vand.u32 %v597, 4294901760
    %v733 = vsub.f32 %v597, %v732
    %v734 = vand.u32 %v733, 4294901760
    %v735 = vsub.f32 %v733, %v734
    %v736 = vand.u32 %v735, 4294901760
    %737 = vmatpush.msra.mxu0 %v736
    %v738 = vand.u32 %v641, 4294901760
    %739 = vmatmul.f32.gmra.mxu0 %v738
    %v740 = vpop.f32.mrf.mxu0
    %v741 = vadd.f32 %v675, %v740
    %742 = vdwg.mxu0
    %743 = vmatpush.msra.mxu0 0.0
    %744 = vmatpush.msra.mxu0 0.0
    %745 = vmatpush.msra.mxu0 0.0
    %746 = vmatpush.msra.mxu0 0.0
    %747 = vmatpush.msra.mxu0 0.0
    %748 = vmatpush.msra.mxu0 0.0
    %749 = vmatpush.msra.mxu0 0.0
    %v750 = vand.u32 %v629, 4294901760
    %v751 = vsub.f32 %v629, %v750
    %752 = vmatpush.msra.mxu0 %v751
    %v753 = vand.u32 %v625, 4294901760
    %v754 = vsub.f32 %v625, %v753
    %755 = vmatpush.msra.mxu0 %v754
    %v756 = vand.u32 %v621, 4294901760
    %v757 = vsub.f32 %v621, %v756
    %758 = vmatpush.msra.mxu0 %v757
    %v759 = vand.u32 %v617, 4294901760
    %v760 = vsub.f32 %v617, %v759
    %761 = vmatpush.msra.mxu0 %v760
    %v762 = vand.u32 %v613, 4294901760
    %v763 = vsub.f32 %v613, %v762
    %764 = vmatpush.msra.mxu0 %v763
    %v765 = vand.u32 %v609, 4294901760
    %v766 = vsub.f32 %v609, %v765
    %767 = vmatpush.msra.mxu0 %v766
    %v768 = vand.u32 %v605, 4294901760
    %v769 = vsub.f32 %v605, %v768
    %770 = vmatpush.msra.mxu0 %v769
    %v771 = vand.u32 %v601, 4294901760
    %v772 = vsub.f32 %v601, %v771
    %773 = vmatpush.msra.mxu0 %v772
    %v774 = vand.u32 %v597, 4294901760
    %v775 = vsub.f32 %v597, %v774
    %776 = vmatpush.msra.mxu0 %v775
    %v777 = vand.u32 %v641, 4294901760
    %v778 = vsub.f32 %v641, %v777
    %779 = vmatmul.f32.gmra.mxu0 %v778
    %v780 = vpop.f32.mrf.mxu0
    %v781 = vadd.f32 %v741, %v780
    %782 = vdwg.mxu0
    %783 = vmatpush.msra.mxu0 0.0
    %784 = vmatpush.msra.mxu0 0.0
    %785 = vmatpush.msra.mxu0 0.0
    %786 = vmatpush.msra.mxu0 0.0
    %787 = vmatpush.msra.mxu0 0.0
    %788 = vmatpush.msra.mxu0 0.0
    %789 = vmatpush.msra.mxu0 0.0
    %v790 = vand.u32 %v629, 4294901760
    %791 = vmatpush.msra.mxu0 %v790
    %v792 = vand.u32 %v625, 4294901760
    %793 = vmatpush.msra.mxu0 %v792
    %v794 = vand.u32 %v621, 4294901760
    %795 = vmatpush.msra.mxu0 %v794
    %v796 = vand.u32 %v617, 4294901760
    %797 = vmatpush.msra.mxu0 %v796
    %v798 = vand.u32 %v613, 4294901760
    %799 = vmatpush.msra.mxu0 %v798
    %v800 = vand.u32 %v609, 4294901760
    %801 = vmatpush.msra.mxu0 %v800
    %v802 = vand.u32 %v605, 4294901760
    %803 = vmatpush.msra.mxu0 %v802
    %v804 = vand.u32 %v601, 4294901760
    %805 = vmatpush.msra.mxu0 %v804
    %v806 = vand.u32 %v597, 4294901760
    %807 = vmatpush.msra.mxu0 %v806
    %v808 = vand.u32 %v641, 4294901760
    %v809 = vsub.f32 %v641, %v808
    %v810 = vand.u32 %v809, 4294901760
    %811 = vmatmul.f32.gmra.mxu0 %v810
    %v812 = vpop.f32.mrf.mxu0
    %v813 = vadd.f32 %v781, %v812
    %814 = vdwg.mxu0
    %815 = vmatpush.msra.mxu0 0.0
    %816 = vmatpush.msra.mxu0 0.0
    %817 = vmatpush.msra.mxu0 0.0
    %818 = vmatpush.msra.mxu0 0.0
    %819 = vmatpush.msra.mxu0 0.0
    %820 = vmatpush.msra.mxu0 0.0
    %821 = vmatpush.msra.mxu0 0.0
    %v822 = vand.u32 %v629, 4294901760
    %v823 = vsub.f32 %v629, %v822
    %v824 = vand.u32 %v823, 4294901760
    %825 = vmatpush.msra.mxu0 %v824
    %v826 = vand.u32 %v625, 4294901760
    %v827 = vsub.f32 %v625, %v826
    %v828 = vand.u32 %v827, 4294901760
    %829 = vmatpush.msra.mxu0 %v828
    %v830 = vand.u32 %v621, 4294901760
    %v831 = vsub.f32 %v621, %v830
    %v832 = vand.u32 %v831, 4294901760
    %833 = vmatpush.msra.mxu0 %v832
    %v834 = vand.u32 %v617, 4294901760
    %v835 = vsub.f32 %v617, %v834
    %v836 = vand.u32 %v835, 4294901760
    %837 = vmatpush.msra.mxu0 %v836
    %v838 = vand.u32 %v613, 4294901760
    %v839 = vsub.f32 %v613, %v838
    %v840 = vand.u32 %v839, 4294901760
    %841 = vmatpush.msra.mxu0 %v840
    %v842 = vand.u32 %v609, 4294901760
    %v843 = vsub.f32 %v609, %v842
    %v844 = vand.u32 %v843, 4294901760
    %845 = vmatpush.msra.mxu0 %v844
    %v846 = vand.u32 %v605, 4294901760
    %v847 = vsub.f32 %v605, %v846
    %v848 = vand.u32 %v847, 4294901760
    %849 = vmatpush.msra.mxu0 %v848
    %v850 = vand.u32 %v601, 4294901760
    %v851 = vsub.f32 %v601, %v850
    %v852 = vand.u32 %v851, 4294901760
    %853 = vmatpush.msra.mxu0 %v852
    %v854 = vand.u32 %v597, 4294901760
    %v855 = vsub.f32 %v597, %v854
    %v856 = vand.u32 %v855, 4294901760
    %857 = vmatpush.msra.mxu0 %v856
    %v858 = vand.u32 %v641, 4294901760
    %859 = vmatmul.f32.gmra.mxu0 %v858
    %v860 = vpop.f32.mrf.mxu0
    %v861 = vadd.f32 %v813, %v860
    %862 = vdwg.mxu0
    %863 = vmatpush.msra.mxu0 0.0
    %864 = vmatpush.msra.mxu0 0.0
    %865 = vmatpush.msra.mxu0 0.0
    %866 = vmatpush.msra.mxu0 0.0
    %867 = vmatpush.msra.mxu0 0.0
    %868 = vmatpush.msra.mxu0 0.0
    %869 = vmatpush.msra.mxu0 0.0
    %v870 = vand.u32 %v629, 4294901760
    %871 = vmatpush.msra.mxu0 %v870
    %v872 = vand.u32 %v625, 4294901760
    %873 = vmatpush.msra.mxu0 %v872
    %v874 = vand.u32 %v621, 4294901760
    %875 = vmatpush.msra.mxu0 %v874
    %v876 = vand.u32 %v617, 4294901760
    %877 = vmatpush.msra.mxu0 %v876
    %v878 = vand.u32 %v613, 4294901760
    %879 = vmatpush.msra.mxu0 %v878
    %v880 = vand.u32 %v609, 4294901760
    %881 = vmatpush.msra.mxu0 %v880
    %v882 = vand.u32 %v605, 4294901760
    %883 = vmatpush.msra.mxu0 %v882
    %v884 = vand.u32 %v601, 4294901760
    %885 = vmatpush.msra.mxu0 %v884
    %v886 = vand.u32 %v597, 4294901760
    %887 = vmatpush.msra.mxu0 %v886
    %v888 = vand.u32 %v641, 4294901760
    %889 = vmatmul.f32.gmra.mxu0 %v888
    %v890 = vpop.f32.mrf.mxu0
    %v891 = vadd.f32 %v861, %v890
    %892 = vdwg.mxu0
    %893 = vmatpush.msra.mxu0 0.0
    %894 = vmatpush.msra.mxu0 0.0
    %895 = vmatpush.msra.mxu0 0.0
    %896 = vmatpush.msra.mxu0 0.0
    %897 = vmatpush.msra.mxu0 0.0
    %898 = vmatpush.msra.mxu0 0.0
    %899 = vmatpush.msra.mxu0 0.0
    %v900 = vand.u32 %v630, 4294901760
    %901 = vmatpush.msra.mxu0 %v900
    %v902 = vand.u32 %v626, 4294901760
    %903 = vmatpush.msra.mxu0 %v902
    %v904 = vand.u32 %v622, 4294901760
    %905 = vmatpush.msra.mxu0 %v904
    %v906 = vand.u32 %v618, 4294901760
    %907 = vmatpush.msra.mxu0 %v906
    %v908 = vand.u32 %v614, 4294901760
    %909 = vmatpush.msra.mxu0 %v908
    %v910 = vand.u32 %v610, 4294901760
    %911 = vmatpush.msra.mxu0 %v910
    %v912 = vand.u32 %v606, 4294901760
    %913 = vmatpush.msra.mxu0 %v912
    %v914 = vand.u32 %v602, 4294901760
    %915 = vmatpush.msra.mxu0 %v914
    %v916 = vand.u32 %v598, 4294901760
    %917 = vmatpush.msra.mxu0 %v916
    %v918 = vand.u32 %v641, 4294901760
    %v919 = vsub.f32 %v641, %v918
    %v920 = vand.u32 %v919, 4294901760
    %v921 = vsub.f32 %v919, %v920
    %v922 = vand.u32 %v921, 4294901760
    %923 = vmatmul.f32.gmra.mxu0 %v922
    %v924 = vpop.f32.mrf.mxu0
    %v925 = vadd.f32 %v637, %v924
    %926 = vdwg.mxu0
    %927 = vmatpush.msra.mxu0 0.0
    %928 = vmatpush.msra.mxu0 0.0
    %929 = vmatpush.msra.mxu0 0.0
    %930 = vmatpush.msra.mxu0 0.0
    %931 = vmatpush.msra.mxu0 0.0
    %932 = vmatpush.msra.mxu0 0.0
    %933 = vmatpush.msra.mxu0 0.0
    %v934 = vand.u32 %v630, 4294901760
    %v935 = vsub.f32 %v630, %v934
    %v936 = vand.u32 %v935, 4294901760
    %v937 = vsub.f32 %v935, %v936
    %v938 = vand.u32 %v937, 4294901760
    %939 = vmatpush.msra.mxu0 %v938
    %v940 = vand.u32 %v626, 4294901760
    %v941 = vsub.f32 %v626, %v940
    %v942 = vand.u32 %v941, 4294901760
    %v943 = vsub.f32 %v941, %v942
    %v944 = vand.u32 %v943, 4294901760
    %945 = vmatpush.msra.mxu0 %v944
    %v946 = vand.u32 %v622, 4294901760
    %v947 = vsub.f32 %v622, %v946
    %v948 = vand.u32 %v947, 4294901760
    %v949 = vsub.f32 %v947, %v948
    %v950 = vand.u32 %v949, 4294901760
    %951 = vmatpush.msra.mxu0 %v950
    %v952 = vand.u32 %v618, 4294901760
    %v953 = vsub.f32 %v618, %v952
    %v954 = vand.u32 %v953, 4294901760
    %v955 = vsub.f32 %v953, %v954
    %v956 = vand.u32 %v955, 4294901760
    %957 = vmatpush.msra.mxu0 %v956
    %v958 = vand.u32 %v614, 4294901760
    %v959 = vsub.f32 %v614, %v958
    %v960 = vand.u32 %v959, 4294901760
    %v961 = vsub.f32 %v959, %v960
    %v962 = vand.u32 %v961, 4294901760
    %963 = vmatpush.msra.mxu0 %v962
    %v964 = vand.u32 %v610, 4294901760
    %v965 = vsub.f32 %v610, %v964
    %v966 = vand.u32 %v965, 4294901760
    %v967 = vsub.f32 %v965, %v966
    %v968 = vand.u32 %v967, 4294901760
    %969 = vmatpush.msra.mxu0 %v968
    %v970 = vand.u32 %v606, 4294901760
    %v971 = vsub.f32 %v606, %v970
    %v972 = vand.u32 %v971, 4294901760
    %v973 = vsub.f32 %v971, %v972
    %v974 = vand.u32 %v973, 4294901760
    %975 = vmatpush.msra.mxu0 %v974
    %v976 = vand.u32 %v602, 4294901760
    %v977 = vsub.f32 %v602, %v976
    %v978 = vand.u32 %v977, 4294901760
    %v979 = vsub.f32 %v977, %v978
    %v980 = vand.u32 %v979, 4294901760
    %981 = vmatpush.msra.mxu0 %v980
    %v982 = vand.u32 %v598, 4294901760
    %v983 = vsub.f32 %v598, %v982
    %v984 = vand.u32 %v983, 4294901760
    %v985 = vsub.f32 %v983, %v984
    %v986 = vand.u32 %v985, 4294901760
    %987 = vmatpush.msra.mxu0 %v986
    %v988 = vand.u32 %v641, 4294901760
    %989 = vmatmul.f32.gmra.mxu0 %v988
    %v990 = vpop.f32.mrf.mxu0
    %v991 = vadd.f32 %v925, %v990
    %992 = vdwg.mxu0
    %993 = vmatpush.msra.mxu0 0.0
    %994 = vmatpush.msra.mxu0 0.0
    %995 = vmatpush.msra.mxu0 0.0
    %996 = vmatpush.msra.mxu0 0.0
    %997 = vmatpush.msra.mxu0 0.0
    %998 = vmatpush.msra.mxu0 0.0
    %999 = vmatpush.msra.mxu0 0.0
    %v1000 = vand.u32 %v630, 4294901760
    %v1001 = vsub.f32 %v630, %v1000
    %1002 = vmatpush.msra.mxu0 %v1001
    %v1003 = vand.u32 %v626, 4294901760
    %v1004 = vsub.f32 %v626, %v1003
    %1005 = vmatpush.msra.mxu0 %v1004
    %v1006 = vand.u32 %v622, 4294901760
    %v1007 = vsub.f32 %v622, %v1006
    %1008 = vmatpush.msra.mxu0 %v1007
    %v1009 = vand.u32 %v618, 4294901760
    %v1010 = vsub.f32 %v618, %v1009
    %1011 = vmatpush.msra.mxu0 %v1010
    %v1012 = vand.u32 %v614, 4294901760
    %v1013 = vsub.f32 %v614, %v1012
    %1014 = vmatpush.msra.mxu0 %v1013
    %v1015 = vand.u32 %v610, 4294901760
    %v1016 = vsub.f32 %v610, %v1015
    %1017 = vmatpush.msra.mxu0 %v1016
    %v1018 = vand.u32 %v606, 4294901760
    %v1019 = vsub.f32 %v606, %v1018
    %1020 = vmatpush.msra.mxu0 %v1019
    %v1021 = vand.u32 %v602, 4294901760
    %v1022 = vsub.f32 %v602, %v1021
    %1023 = vmatpush.msra.mxu0 %v1022
    %v1024 = vand.u32 %v598, 4294901760
    %v1025 = vsub.f32 %v598, %v1024
    %1026 = vmatpush.msra.mxu0 %v1025
    %v1027 = vand.u32 %v641, 4294901760
    %v1028 = vsub.f32 %v641, %v1027
    %1029 = vmatmul.f32.gmra.mxu0 %v1028
    %v1030 = vpop.f32.mrf.mxu0
    %v1031 = vadd.f32 %v991, %v1030
    %1032 = vdwg.mxu0
    %1033 = vmatpush.msra.mxu0 0.0
    %1034 = vmatpush.msra.mxu0 0.0
    %1035 = vmatpush.msra.mxu0 0.0
    %1036 = vmatpush.msra.mxu0 0.0
    %1037 = vmatpush.msra.mxu0 0.0
    %1038 = vmatpush.msra.mxu0 0.0
    %1039 = vmatpush.msra.mxu0 0.0
    %v1040 = vand.u32 %v630, 4294901760
    %1041 = vmatpush.msra.mxu0 %v1040
    %v1042 = vand.u32 %v626, 4294901760
    %1043 = vmatpush.msra.mxu0 %v1042
    %v1044 = vand.u32 %v622, 4294901760
    %1045 = vmatpush.msra.mxu0 %v1044
    %v1046 = vand.u32 %v618, 4294901760
    %1047 = vmatpush.msra.mxu0 %v1046
    %v1048 = vand.u32 %v614, 4294901760
    %1049 = vmatpush.msra.mxu0 %v1048
    %v1050 = vand.u32 %v610, 4294901760
    %1051 = vmatpush.msra.mxu0 %v1050
    %v1052 = vand.u32 %v606, 4294901760
    %1053 = vmatpush.msra.mxu0 %v1052
    %v1054 = vand.u32 %v602, 4294901760
    %1055 = vmatpush.msra.mxu0 %v1054
    %v1056 = vand.u32 %v598, 4294901760
    %1057 = vmatpush.msra.mxu0 %v1056
    %v1058 = vand.u32 %v641, 4294901760
    %v1059 = vsub.f32 %v641, %v1058
    %v1060 = vand.u32 %v1059, 4294901760
    %1061 = vmatmul.f32.gmra.mxu0 %v1060
    %v1062 = vpop.f32.mrf.mxu0
    %v1063 = vadd.f32 %v1031, %v1062
    %1064 = vdwg.mxu0
    %1065 = vmatpush.msra.mxu0 0.0
    %1066 = vmatpush.msra.mxu0 0.0
    %1067 = vmatpush.msra.mxu0 0.0
    %1068 = vmatpush.msra.mxu0 0.0
    %1069 = vmatpush.msra.mxu0 0.0
    %1070 = vmatpush.msra.mxu0 0.0
    %1071 = vmatpush.msra.mxu0 0.0
    %v1072 = vand.u32 %v630, 4294901760
    %v1073 = vsub.f32 %v630, %v1072
    %v1074 = vand.u32 %v1073, 4294901760
    %1075 = vmatpush.msra.mxu0 %v1074
    %v1076 = vand.u32 %v626, 4294901760
    %v1077 = vsub.f32 %v626, %v1076
    %v1078 = vand.u32 %v1077, 4294901760
    %1079 = vmatpush.msra.mxu0 %v1078
    %v1080 = vand.u32 %v622, 4294901760
    %v1081 = vsub.f32 %v622, %v1080
    %v1082 = vand.u32 %v1081, 4294901760
    %1083 = vmatpush.msra.mxu0 %v1082
    %v1084 = vand.u32 %v618, 4294901760
    %v1085 = vsub.f32 %v618, %v1084
    %v1086 = vand.u32 %v1085, 4294901760
    %1087 = vmatpush.msra.mxu0 %v1086
    %v1088 = vand.u32 %v614, 4294901760
    %v1089 = vsub.f32 %v614, %v1088
    %v1090 = vand.u32 %v1089, 4294901760
    %1091 = vmatpush.msra.mxu0 %v1090
    %v1092 = vand.u32 %v610, 4294901760
    %v1093 = vsub.f32 %v610, %v1092
    %v1094 = vand.u32 %v1093, 4294901760
    %1095 = vmatpush.msra.mxu0 %v1094
    %v1096 = vand.u32 %v606, 4294901760
    %v1097 = vsub.f32 %v606, %v1096
    %v1098 = vand.u32 %v1097, 4294901760
    %1099 = vmatpush.msra.mxu0 %v1098
    %v1100 = vand.u32 %v602, 4294901760
    %v1101 = vsub.f32 %v602, %v1100
    %v1102 = vand.u32 %v1101, 4294901760
    %1103 = vmatpush.msra.mxu0 %v1102
    %v1104 = vand.u32 %v598, 4294901760
    %v1105 = vsub.f32 %v598, %v1104
    %v1106 = vand.u32 %v1105, 4294901760
    %1107 = vmatpush.msra.mxu0 %v1106
    %v1108 = vand.u32 %v641, 4294901760
    %1109 = vmatmul.f32.gmra.mxu0 %v1108
    %v1110 = vpop.f32.mrf.mxu0
    %v1111 = vadd.f32 %v1063, %v1110
    %1112 = vdwg.mxu0
    %1113 = vmatpush.msra.mxu0 0.0
    %1114 = vmatpush.msra.mxu0 0.0
    %1115 = vmatpush.msra.mxu0 0.0
    %1116 = vmatpush.msra.mxu0 0.0
    %1117 = vmatpush.msra.mxu0 0.0
    %1118 = vmatpush.msra.mxu0 0.0
    %1119 = vmatpush.msra.mxu0 0.0
    %v1120 = vand.u32 %v630, 4294901760
    %1121 = vmatpush.msra.mxu0 %v1120
    %v1122 = vand.u32 %v626, 4294901760
    %1123 = vmatpush.msra.mxu0 %v1122
    %v1124 = vand.u32 %v622, 4294901760
    %1125 = vmatpush.msra.mxu0 %v1124
    %v1126 = vand.u32 %v618, 4294901760
    %1127 = vmatpush.msra.mxu0 %v1126
    %v1128 = vand.u32 %v614, 4294901760
    %1129 = vmatpush.msra.mxu0 %v1128
    %v1130 = vand.u32 %v610, 4294901760
    %1131 = vmatpush.msra.mxu0 %v1130
    %v1132 = vand.u32 %v606, 4294901760
    %1133 = vmatpush.msra.mxu0 %v1132
    %v1134 = vand.u32 %v602, 4294901760
    %1135 = vmatpush.msra.mxu0 %v1134
    %v1136 = vand.u32 %v598, 4294901760
    %1137 = vmatpush.msra.mxu0 %v1136
    %v1138 = vand.u32 %v641, 4294901760
    %1139 = vmatmul.f32.gmra.mxu0 %v1138
    %v1140 = vpop.f32.mrf.mxu0
    %v1141 = vadd.f32 %v1111, %v1140
    %1142 = vdwg.mxu0
    %1143 = vmatpush.msra.mxu0 0.0
    %1144 = vmatpush.msra.mxu0 0.0
    %1145 = vmatpush.msra.mxu0 0.0
    %1146 = vmatpush.msra.mxu0 0.0
    %1147 = vmatpush.msra.mxu0 0.0
    %1148 = vmatpush.msra.mxu0 0.0
    %1149 = vmatpush.msra.mxu0 0.0
    %v1150 = vand.u32 %v631, 4294901760
    %1151 = vmatpush.msra.mxu0 %v1150
    %v1152 = vand.u32 %v627, 4294901760
    %1153 = vmatpush.msra.mxu0 %v1152
    %v1154 = vand.u32 %v623, 4294901760
    %1155 = vmatpush.msra.mxu0 %v1154
    %v1156 = vand.u32 %v619, 4294901760
    %1157 = vmatpush.msra.mxu0 %v1156
    %v1158 = vand.u32 %v615, 4294901760
    %1159 = vmatpush.msra.mxu0 %v1158
    %v1160 = vand.u32 %v611, 4294901760
    %1161 = vmatpush.msra.mxu0 %v1160
    %v1162 = vand.u32 %v607, 4294901760
    %1163 = vmatpush.msra.mxu0 %v1162
    %v1164 = vand.u32 %v603, 4294901760
    %1165 = vmatpush.msra.mxu0 %v1164
    %v1166 = vand.u32 %v599, 4294901760
    %1167 = vmatpush.msra.mxu0 %v1166
    %v1168 = vand.u32 %v641, 4294901760
    %v1169 = vsub.f32 %v641, %v1168
    %v1170 = vand.u32 %v1169, 4294901760
    %v1171 = vsub.f32 %v1169, %v1170
    %v1172 = vand.u32 %v1171, 4294901760
    %1173 = vmatmul.f32.gmra.mxu0 %v1172
    %v1174 = vpop.f32.mrf.mxu0
    %v1175 = vadd.f32 %v637, %v1174
    %1176 = vdwg.mxu0
    %1177 = vmatpush.msra.mxu0 0.0
    %1178 = vmatpush.msra.mxu0 0.0
    %1179 = vmatpush.msra.mxu0 0.0
    %1180 = vmatpush.msra.mxu0 0.0
    %1181 = vmatpush.msra.mxu0 0.0
    %1182 = vmatpush.msra.mxu0 0.0
    %1183 = vmatpush.msra.mxu0 0.0
    %v1184 = vand.u32 %v631, 4294901760
    %v1185 = vsub.f32 %v631, %v1184
    %v1186 = vand.u32 %v1185, 4294901760
    %v1187 = vsub.f32 %v1185, %v1186
    %v1188 = vand.u32 %v1187, 4294901760
    %1189 = vmatpush.msra.mxu0 %v1188
    %v1190 = vand.u32 %v627, 4294901760
    %v1191 = vsub.f32 %v627, %v1190
    %v1192 = vand.u32 %v1191, 4294901760
    %v1193 = vsub.f32 %v1191, %v1192
    %v1194 = vand.u32 %v1193, 4294901760
    %1195 = vmatpush.msra.mxu0 %v1194
    %v1196 = vand.u32 %v623, 4294901760
    %v1197 = vsub.f32 %v623, %v1196
    %v1198 = vand.u32 %v1197, 4294901760
    %v1199 = vsub.f32 %v1197, %v1198
    %v1200 = vand.u32 %v1199, 4294901760
    %1201 = vmatpush.msra.mxu0 %v1200
    %v1202 = vand.u32 %v619, 4294901760
    %v1203 = vsub.f32 %v619, %v1202
    %v1204 = vand.u32 %v1203, 4294901760
    %v1205 = vsub.f32 %v1203, %v1204
    %v1206 = vand.u32 %v1205, 4294901760
    %1207 = vmatpush.msra.mxu0 %v1206
    %v1208 = vand.u32 %v615, 4294901760
    %v1209 = vsub.f32 %v615, %v1208
    %v1210 = vand.u32 %v1209, 4294901760
    %v1211 = vsub.f32 %v1209, %v1210
    %v1212 = vand.u32 %v1211, 4294901760
    %1213 = vmatpush.msra.mxu0 %v1212
    %v1214 = vand.u32 %v611, 4294901760
    %v1215 = vsub.f32 %v611, %v1214
    %v1216 = vand.u32 %v1215, 4294901760
    %v1217 = vsub.f32 %v1215, %v1216
    %v1218 = vand.u32 %v1217, 4294901760
    %1219 = vmatpush.msra.mxu0 %v1218
    %v1220 = vand.u32 %v607, 4294901760
    %v1221 = vsub.f32 %v607, %v1220
    %v1222 = vand.u32 %v1221, 4294901760
    %v1223 = vsub.f32 %v1221, %v1222
    %v1224 = vand.u32 %v1223, 4294901760
    %1225 = vmatpush.msra.mxu0 %v1224
    %v1226 = vand.u32 %v603, 4294901760
    %v1227 = vsub.f32 %v603, %v1226
    %v1228 = vand.u32 %v1227, 4294901760
    %v1229 = vsub.f32 %v1227, %v1228
    %v1230 = vand.u32 %v1229, 4294901760
    %1231 = vmatpush.msra.mxu0 %v1230
    %v1232 = vand.u32 %v599, 4294901760
    %v1233 = vsub.f32 %v599, %v1232
    %v1234 = vand.u32 %v1233, 4294901760
    %v1235 = vsub.f32 %v1233, %v1234
    %v1236 = vand.u32 %v1235, 4294901760
    %1237 = vmatpush.msra.mxu0 %v1236
    %v1238 = vand.u32 %v641, 4294901760
    %1239 = vmatmul.f32.gmra.mxu0 %v1238
    %v1240 = vpop.f32.mrf.mxu0
    %v1241 = vadd.f32 %v1175, %v1240
    %1242 = vdwg.mxu0
    %1243 = vmatpush.msra.mxu0 0.0
    %1244 = vmatpush.msra.mxu0 0.0
    %1245 = vmatpush.msra.mxu0 0.0
    %1246 = vmatpush.msra.mxu0 0.0
    %1247 = vmatpush.msra.mxu0 0.0
    %1248 = vmatpush.msra.mxu0 0.0
    %1249 = vmatpush.msra.mxu0 0.0
    %v1250 = vand.u32 %v631, 4294901760
    %v1251 = vsub.f32 %v631, %v1250
    %1252 = vmatpush.msra.mxu0 %v1251
    %v1253 = vand.u32 %v627, 4294901760
    %v1254 = vsub.f32 %v627, %v1253
    %1255 = vmatpush.msra.mxu0 %v1254
    %v1256 = vand.u32 %v623, 4294901760
    %v1257 = vsub.f32 %v623, %v1256
    %1258 = vmatpush.msra.mxu0 %v1257
    %v1259 = vand.u32 %v619, 4294901760
    %v1260 = vsub.f32 %v619, %v1259
    %1261 = vmatpush.msra.mxu0 %v1260
    %v1262 = vand.u32 %v615, 4294901760
    %v1263 = vsub.f32 %v615, %v1262
    %1264 = vmatpush.msra.mxu0 %v1263
    %v1265 = vand.u32 %v611, 4294901760
    %v1266 = vsub.f32 %v611, %v1265
    %1267 = vmatpush.msra.mxu0 %v1266
    %v1268 = vand.u32 %v607, 4294901760
    %v1269 = vsub.f32 %v607, %v1268
    %1270 = vmatpush.msra.mxu0 %v1269
    %v1271 = vand.u32 %v603, 4294901760
    %v1272 = vsub.f32 %v603, %v1271
    %1273 = vmatpush.msra.mxu0 %v1272
    %v1274 = vand.u32 %v599, 4294901760
    %v1275 = vsub.f32 %v599, %v1274
    %1276 = vmatpush.msra.mxu0 %v1275
    %v1277 = vand.u32 %v641, 4294901760
    %v1278 = vsub.f32 %v641, %v1277
    %1279 = vmatmul.f32.gmra.mxu0 %v1278
    %v1280 = vpop.f32.mrf.mxu0
    %v1281 = vadd.f32 %v1241, %v1280
    %1282 = vdwg.mxu0
    %1283 = vmatpush.msra.mxu0 0.0
    %1284 = vmatpush.msra.mxu0 0.0
    %1285 = vmatpush.msra.mxu0 0.0
    %1286 = vmatpush.msra.mxu0 0.0
    %1287 = vmatpush.msra.mxu0 0.0
    %1288 = vmatpush.msra.mxu0 0.0
    %1289 = vmatpush.msra.mxu0 0.0
    %v1290 = vand.u32 %v631, 4294901760
    %1291 = vmatpush.msra.mxu0 %v1290
    %v1292 = vand.u32 %v627, 4294901760
    %1293 = vmatpush.msra.mxu0 %v1292
    %v1294 = vand.u32 %v623, 4294901760
    %1295 = vmatpush.msra.mxu0 %v1294
    %v1296 = vand.u32 %v619, 4294901760
    %1297 = vmatpush.msra.mxu0 %v1296
    %v1298 = vand.u32 %v615, 4294901760
    %1299 = vmatpush.msra.mxu0 %v1298
    %v1300 = vand.u32 %v611, 4294901760
    %1301 = vmatpush.msra.mxu0 %v1300
    %v1302 = vand.u32 %v607, 4294901760
    %1303 = vmatpush.msra.mxu0 %v1302
    %v1304 = vand.u32 %v603, 4294901760
    %1305 = vmatpush.msra.mxu0 %v1304
    %v1306 = vand.u32 %v599, 4294901760
    %1307 = vmatpush.msra.mxu0 %v1306
    %v1308 = vand.u32 %v641, 4294901760
    %v1309 = vsub.f32 %v641, %v1308
    %v1310 = vand.u32 %v1309, 4294901760
    %1311 = vmatmul.f32.gmra.mxu0 %v1310
    %v1312 = vpop.f32.mrf.mxu0
    %v1313 = vadd.f32 %v1281, %v1312
    %1314 = vdwg.mxu0
    %1315 = vmatpush.msra.mxu0 0.0
    %1316 = vmatpush.msra.mxu0 0.0
    %1317 = vmatpush.msra.mxu0 0.0
    %1318 = vmatpush.msra.mxu0 0.0
    %1319 = vmatpush.msra.mxu0 0.0
    %1320 = vmatpush.msra.mxu0 0.0
    %1321 = vmatpush.msra.mxu0 0.0
    %v1322 = vand.u32 %v631, 4294901760
    %v1323 = vsub.f32 %v631, %v1322
    %v1324 = vand.u32 %v1323, 4294901760
    %1325 = vmatpush.msra.mxu0 %v1324
    %v1326 = vand.u32 %v627, 4294901760
    %v1327 = vsub.f32 %v627, %v1326
    %v1328 = vand.u32 %v1327, 4294901760
    %1329 = vmatpush.msra.mxu0 %v1328
    %v1330 = vand.u32 %v623, 4294901760
    %v1331 = vsub.f32 %v623, %v1330
    %v1332 = vand.u32 %v1331, 4294901760
    %1333 = vmatpush.msra.mxu0 %v1332
    %v1334 = vand.u32 %v619, 4294901760
    %v1335 = vsub.f32 %v619, %v1334
    %v1336 = vand.u32 %v1335, 4294901760
    %1337 = vmatpush.msra.mxu0 %v1336
    %v1338 = vand.u32 %v615, 4294901760
    %v1339 = vsub.f32 %v615, %v1338
    %v1340 = vand.u32 %v1339, 4294901760
    %1341 = vmatpush.msra.mxu0 %v1340
    %v1342 = vand.u32 %v611, 4294901760
    %v1343 = vsub.f32 %v611, %v1342
    %v1344 = vand.u32 %v1343, 4294901760
    %1345 = vmatpush.msra.mxu0 %v1344
    %v1346 = vand.u32 %v607, 4294901760
    %v1347 = vsub.f32 %v607, %v1346
    %v1348 = vand.u32 %v1347, 4294901760
    %1349 = vmatpush.msra.mxu0 %v1348
    %v1350 = vand.u32 %v603, 4294901760
    %v1351 = vsub.f32 %v603, %v1350
    %v1352 = vand.u32 %v1351, 4294901760
    %1353 = vmatpush.msra.mxu0 %v1352
    %v1354 = vand.u32 %v599, 4294901760
    %v1355 = vsub.f32 %v599, %v1354
    %v1356 = vand.u32 %v1355, 4294901760
    %1357 = vmatpush.msra.mxu0 %v1356
    %v1358 = vand.u32 %v641, 4294901760
    %1359 = vmatmul.f32.gmra.mxu0 %v1358
    %v1360 = vpop.f32.mrf.mxu0
    %v1361 = vadd.f32 %v1313, %v1360
    %1362 = vdwg.mxu0
    %1363 = vmatpush.msra.mxu0 0.0
    %1364 = vmatpush.msra.mxu0 0.0
    %1365 = vmatpush.msra.mxu0 0.0
    %1366 = vmatpush.msra.mxu0 0.0
    %1367 = vmatpush.msra.mxu0 0.0
    %1368 = vmatpush.msra.mxu0 0.0
    %1369 = vmatpush.msra.mxu0 0.0
    %v1370 = vand.u32 %v631, 4294901760
    %1371 = vmatpush.msra.mxu0 %v1370
    %v1372 = vand.u32 %v627, 4294901760
    %1373 = vmatpush.msra.mxu0 %v1372
    %v1374 = vand.u32 %v623, 4294901760
    %1375 = vmatpush.msra.mxu0 %v1374
    %v1376 = vand.u32 %v619, 4294901760
    %1377 = vmatpush.msra.mxu0 %v1376
    %v1378 = vand.u32 %v615, 4294901760
    %1379 = vmatpush.msra.mxu0 %v1378
    %v1380 = vand.u32 %v611, 4294901760
    %1381 = vmatpush.msra.mxu0 %v1380
    %v1382 = vand.u32 %v607, 4294901760
    %1383 = vmatpush.msra.mxu0 %v1382
    %v1384 = vand.u32 %v603, 4294901760
    %1385 = vmatpush.msra.mxu0 %v1384
    %v1386 = vand.u32 %v599, 4294901760
    %1387 = vmatpush.msra.mxu0 %v1386
    %v1388 = vand.u32 %v641, 4294901760
    %1389 = vmatmul.f32.gmra.mxu0 %v1388
    %v1390 = vpop.f32.mrf.mxu0
    %v1391 = vadd.f32 %v1361, %v1390
    %1392 = vdwg.mxu0
    %1393 = vmatpush.msra.mxu0 0.0
    %1394 = vmatpush.msra.mxu0 0.0
    %1395 = vmatpush.msra.mxu0 0.0
    %1396 = vmatpush.msra.mxu0 0.0
    %1397 = vmatpush.msra.mxu0 0.0
    %1398 = vmatpush.msra.mxu0 0.0
    %1399 = vmatpush.msra.mxu0 0.0
    %v1400 = vand.u32 %v632, 4294901760
    %1401 = vmatpush.msra.mxu0 %v1400
    %v1402 = vand.u32 %v628, 4294901760
    %1403 = vmatpush.msra.mxu0 %v1402
    %v1404 = vand.u32 %v624, 4294901760
    %1405 = vmatpush.msra.mxu0 %v1404
    %v1406 = vand.u32 %v620, 4294901760
    %1407 = vmatpush.msra.mxu0 %v1406
    %v1408 = vand.u32 %v616, 4294901760
    %1409 = vmatpush.msra.mxu0 %v1408
    %v1410 = vand.u32 %v612, 4294901760
    %1411 = vmatpush.msra.mxu0 %v1410
    %v1412 = vand.u32 %v608, 4294901760
    %1413 = vmatpush.msra.mxu0 %v1412
    %v1414 = vand.u32 %v604, 4294901760
    %1415 = vmatpush.msra.mxu0 %v1414
    %v1416 = vand.u32 %v600, 4294901760
    %1417 = vmatpush.msra.mxu0 %v1416
    %v1418 = vand.u32 %v641, 4294901760
    %v1419 = vsub.f32 %v641, %v1418
    %v1420 = vand.u32 %v1419, 4294901760
    %v1421 = vsub.f32 %v1419, %v1420
    %v1422 = vand.u32 %v1421, 4294901760
    %1423 = vmatmul.f32.gmra.mxu0 %v1422
    %v1424 = vpop.f32.mrf.mxu0
    %v1425 = vadd.f32 %v637, %v1424
    %1426 = vdwg.mxu0
    %1427 = vmatpush.msra.mxu0 0.0
    %1428 = vmatpush.msra.mxu0 0.0
    %1429 = vmatpush.msra.mxu0 0.0
    %1430 = vmatpush.msra.mxu0 0.0
    %1431 = vmatpush.msra.mxu0 0.0
    %1432 = vmatpush.msra.mxu0 0.0
    %1433 = vmatpush.msra.mxu0 0.0
    %v1434 = vand.u32 %v632, 4294901760
    %v1435 = vsub.f32 %v632, %v1434
    %v1436 = vand.u32 %v1435, 4294901760
    %v1437 = vsub.f32 %v1435, %v1436
    %v1438 = vand.u32 %v1437, 4294901760
    %1439 = vmatpush.msra.mxu0 %v1438
    %v1440 = vand.u32 %v628, 4294901760
    %v1441 = vsub.f32 %v628, %v1440
    %v1442 = vand.u32 %v1441, 4294901760
    %v1443 = vsub.f32 %v1441, %v1442
    %v1444 = vand.u32 %v1443, 4294901760
    %1445 = vmatpush.msra.mxu0 %v1444
    %v1446 = vand.u32 %v624, 4294901760
    %v1447 = vsub.f32 %v624, %v1446
    %v1448 = vand.u32 %v1447, 4294901760
    %v1449 = vsub.f32 %v1447, %v1448
    %v1450 = vand.u32 %v1449, 4294901760
    %1451 = vmatpush.msra.mxu0 %v1450
    %v1452 = vand.u32 %v620, 4294901760
    %v1453 = vsub.f32 %v620, %v1452
    %v1454 = vand.u32 %v1453, 4294901760
    %v1455 = vsub.f32 %v1453, %v1454
    %v1456 = vand.u32 %v1455, 4294901760
    %1457 = vmatpush.msra.mxu0 %v1456
    %v1458 = vand.u32 %v616, 4294901760
    %v1459 = vsub.f32 %v616, %v1458
    %v1460 = vand.u32 %v1459, 4294901760
    %v1461 = vsub.f32 %v1459, %v1460
    %v1462 = vand.u32 %v1461, 4294901760
    %1463 = vmatpush.msra.mxu0 %v1462
    %v1464 = vand.u32 %v612, 4294901760
    %v1465 = vsub.f32 %v612, %v1464
    %v1466 = vand.u32 %v1465, 4294901760
    %v1467 = vsub.f32 %v1465, %v1466
    %v1468 = vand.u32 %v1467, 4294901760
    %1469 = vmatpush.msra.mxu0 %v1468
    %v1470 = vand.u32 %v608, 4294901760
    %v1471 = vsub.f32 %v608, %v1470
    %v1472 = vand.u32 %v1471, 4294901760
    %v1473 = vsub.f32 %v1471, %v1472
    %v1474 = vand.u32 %v1473, 4294901760
    %1475 = vmatpush.msra.mxu0 %v1474
    %v1476 = vand.u32 %v604, 4294901760
    %v1477 = vsub.f32 %v604, %v1476
    %v1478 = vand.u32 %v1477, 4294901760
    %v1479 = vsub.f32 %v1477, %v1478
    %v1480 = vand.u32 %v1479, 4294901760
    %1481 = vmatpush.msra.mxu0 %v1480
    %v1482 = vand.u32 %v600, 4294901760
    %v1483 = vsub.f32 %v600, %v1482
    %v1484 = vand.u32 %v1483, 4294901760
    %v1485 = vsub.f32 %v1483, %v1484
    %v1486 = vand.u32 %v1485, 4294901760
    %1487 = vmatpush.msra.mxu0 %v1486
    %v1488 = vand.u32 %v641, 4294901760
    %1489 = vmatmul.f32.gmra.mxu0 %v1488
    %v1490 = vpop.f32.mrf.mxu0
    %v1491 = vadd.f32 %v1425, %v1490
    %1492 = vdwg.mxu0
    %1493 = vmatpush.msra.mxu0 0.0
    %1494 = vmatpush.msra.mxu0 0.0
    %1495 = vmatpush.msra.mxu0 0.0
    %1496 = vmatpush.msra.mxu0 0.0
    %1497 = vmatpush.msra.mxu0 0.0
    %1498 = vmatpush.msra.mxu0 0.0
    %1499 = vmatpush.msra.mxu0 0.0
    %v1500 = vand.u32 %v632, 4294901760
    %v1501 = vsub.f32 %v632, %v1500
    %1502 = vmatpush.msra.mxu0 %v1501
    %v1503 = vand.u32 %v628, 4294901760
    %v1504 = vsub.f32 %v628, %v1503
    %1505 = vmatpush.msra.mxu0 %v1504
    %v1506 = vand.u32 %v624, 4294901760
    %v1507 = vsub.f32 %v624, %v1506
    %1508 = vmatpush.msra.mxu0 %v1507
    %v1509 = vand.u32 %v620, 4294901760
    %v1510 = vsub.f32 %v620, %v1509
    %1511 = vmatpush.msra.mxu0 %v1510
    %v1512 = vand.u32 %v616, 4294901760
    %v1513 = vsub.f32 %v616, %v1512
    %1514 = vmatpush.msra.mxu0 %v1513
    %v1515 = vand.u32 %v612, 4294901760
    %v1516 = vsub.f32 %v612, %v1515
    %1517 = vmatpush.msra.mxu0 %v1516
    %v1518 = vand.u32 %v608, 4294901760
    %v1519 = vsub.f32 %v608, %v1518
    %1520 = vmatpush.msra.mxu0 %v1519
    %v1521 = vand.u32 %v604, 4294901760
    %v1522 = vsub.f32 %v604, %v1521
    %1523 = vmatpush.msra.mxu0 %v1522
    %v1524 = vand.u32 %v600, 4294901760
    %v1525 = vsub.f32 %v600, %v1524
    %1526 = vmatpush.msra.mxu0 %v1525
    %v1527 = vand.u32 %v641, 4294901760
    %v1528 = vsub.f32 %v641, %v1527
    %1529 = vmatmul.f32.gmra.mxu0 %v1528
    %v1530 = vpop.f32.mrf.mxu0
    %v1531 = vadd.f32 %v1491, %v1530
    %1532 = vdwg.mxu0
    %1533 = vmatpush.msra.mxu0 0.0
    %1534 = vmatpush.msra.mxu0 0.0
    %1535 = vmatpush.msra.mxu0 0.0
    %1536 = vmatpush.msra.mxu0 0.0
    %1537 = vmatpush.msra.mxu0 0.0
    %1538 = vmatpush.msra.mxu0 0.0
    %1539 = vmatpush.msra.mxu0 0.0
    %v1540 = vand.u32 %v632, 4294901760
    %1541 = vmatpush.msra.mxu0 %v1540
    %v1542 = vand.u32 %v628, 4294901760
    %1543 = vmatpush.msra.mxu0 %v1542
    %v1544 = vand.u32 %v624, 4294901760
    %1545 = vmatpush.msra.mxu0 %v1544
    %v1546 = vand.u32 %v620, 4294901760
    %1547 = vmatpush.msra.mxu0 %v1546
    %v1548 = vand.u32 %v616, 4294901760
    %1549 = vmatpush.msra.mxu0 %v1548
    %v1550 = vand.u32 %v612, 4294901760
    %1551 = vmatpush.msra.mxu0 %v1550
    %v1552 = vand.u32 %v608, 4294901760
    %1553 = vmatpush.msra.mxu0 %v1552
    %v1554 = vand.u32 %v604, 4294901760
    %1555 = vmatpush.msra.mxu0 %v1554
    %v1556 = vand.u32 %v600, 4294901760
    %1557 = vmatpush.msra.mxu0 %v1556
    %v1558 = vand.u32 %v641, 4294901760
    %v1559 = vsub.f32 %v641, %v1558
    %v1560 = vand.u32 %v1559, 4294901760
    %1561 = vmatmul.f32.gmra.mxu0 %v1560
    %v1562 = vpop.f32.mrf.mxu0
    %v1563 = vadd.f32 %v1531, %v1562
    %1564 = vdwg.mxu0
    %1565 = vmatpush.msra.mxu0 0.0
    %1566 = vmatpush.msra.mxu0 0.0
    %1567 = vmatpush.msra.mxu0 0.0
    %1568 = vmatpush.msra.mxu0 0.0
    %1569 = vmatpush.msra.mxu0 0.0
    %1570 = vmatpush.msra.mxu0 0.0
    %1571 = vmatpush.msra.mxu0 0.0
    %v1572 = vand.u32 %v632, 4294901760
    %v1573 = vsub.f32 %v632, %v1572
    %v1574 = vand.u32 %v1573, 4294901760
    %1575 = vmatpush.msra.mxu0 %v1574
    %v1576 = vand.u32 %v628, 4294901760
    %v1577 = vsub.f32 %v628, %v1576
    %v1578 = vand.u32 %v1577, 4294901760
    %1579 = vmatpush.msra.mxu0 %v1578
    %v1580 = vand.u32 %v624, 4294901760
    %v1581 = vsub.f32 %v624, %v1580
    %v1582 = vand.u32 %v1581, 4294901760
    %1583 = vmatpush.msra.mxu0 %v1582
    %v1584 = vand.u32 %v620, 4294901760
    %v1585 = vsub.f32 %v620, %v1584
    %v1586 = vand.u32 %v1585, 4294901760
    %1587 = vmatpush.msra.mxu0 %v1586
    %v1588 = vand.u32 %v616, 4294901760
    %v1589 = vsub.f32 %v616, %v1588
    %v1590 = vand.u32 %v1589, 4294901760
    %1591 = vmatpush.msra.mxu0 %v1590
    %v1592 = vand.u32 %v612, 4294901760
    %v1593 = vsub.f32 %v612, %v1592
    %v1594 = vand.u32 %v1593, 4294901760
    %1595 = vmatpush.msra.mxu0 %v1594
    %v1596 = vand.u32 %v608, 4294901760
    %v1597 = vsub.f32 %v608, %v1596
    %v1598 = vand.u32 %v1597, 4294901760
    %1599 = vmatpush.msra.mxu0 %v1598
    %v1600 = vand.u32 %v604, 4294901760
    %v1601 = vsub.f32 %v604, %v1600
    %v1602 = vand.u32 %v1601, 4294901760
    %1603 = vmatpush.msra.mxu0 %v1602
    %v1604 = vand.u32 %v600, 4294901760
    %v1605 = vsub.f32 %v600, %v1604
    %v1606 = vand.u32 %v1605, 4294901760
    %1607 = vmatpush.msra.mxu0 %v1606
    %v1608 = vand.u32 %v641, 4294901760
    %1609 = vmatmul.f32.gmra.mxu0 %v1608
    %v1610 = vpop.f32.mrf.mxu0
    %v1611 = vadd.f32 %v1563, %v1610
    %1612 = vdwg.mxu0
    %1613 = vmatpush.msra.mxu0 0.0
    %1614 = vmatpush.msra.mxu0 0.0
    %1615 = vmatpush.msra.mxu0 0.0
    %1616 = vmatpush.msra.mxu0 0.0
    %1617 = vmatpush.msra.mxu0 0.0
    %1618 = vmatpush.msra.mxu0 0.0
    %1619 = vmatpush.msra.mxu0 0.0
    %v1620 = vand.u32 %v632, 4294901760
    %1621 = vmatpush.msra.mxu0 %v1620
    %v1622 = vand.u32 %v628, 4294901760
    %1623 = vmatpush.msra.mxu0 %v1622
    %v1624 = vand.u32 %v624, 4294901760
    %1625 = vmatpush.msra.mxu0 %v1624
    %v1626 = vand.u32 %v620, 4294901760
    %1627 = vmatpush.msra.mxu0 %v1626
    %v1628 = vand.u32 %v616, 4294901760
    %1629 = vmatpush.msra.mxu0 %v1628
    %v1630 = vand.u32 %v612, 4294901760
    %1631 = vmatpush.msra.mxu0 %v1630
    %v1632 = vand.u32 %v608, 4294901760
    %1633 = vmatpush.msra.mxu0 %v1632
    %v1634 = vand.u32 %v604, 4294901760
    %1635 = vmatpush.msra.mxu0 %v1634
    %v1636 = vand.u32 %v600, 4294901760
    %1637 = vmatpush.msra.mxu0 %v1636
    %v1638 = vand.u32 %v641, 4294901760
    %1639 = vmatmul.f32.gmra.mxu0 %v1638
    %v1640 = vpop.f32.mrf.mxu0
    %v1641 = vadd.f32 %v1611, %v1640
    %1642 = vdwg.mxu0
    %v1643 = vmax.f32 %v891, 0.0
    %v1644 = vmax.f32 %v1141, 0.0
    %v1645 = vmax.f32 %v1391, 0.0
    %v1646 = vmax.f32 %v1641, 0.0
    %1647 = vst [vmem:[#allocation2 + $0x8] sm:$0xff] %v1643
    %1648 = vst [vmem:[#allocation2 + $0x10] sm:$0xff] %v1644
    %1649 = vst [vmem:[#allocation2 + $0x18] sm:$0xff] %v1645
    %1650 = vst [vmem:[#allocation2 + $0x20] sm:$0xff] %v1646
    %v1651 = vld [vmem:[#allocation2] sm:$0xff]
    %v1652 = vld [vmem:[#allocation2 + $0x8] sm:$0xff]
    %v1653 = vld [vmem:[#allocation2 + $0x10] sm:$0xff]
    %v1654 = vld [vmem:[#allocation2 + $0x18] sm:$0xff]
    %v1655 = vld [vmem:[#allocation2 + $0x20] sm:$0xff]
    %v1656 = vld [vmem:[#allocation7] ss:$8 sm:$0xf]
    %v1658 = vperm.slane %v1656, 0
    %v1659 = vperm.slane %v1656, 1
    %v1660 = vperm.slane %v1656, 2
    %v1661 = vperm.slane %v1656, 3
    %1662 = vrot.lane.b32.xlu0 %v1658, 111
    %v1663 = vpop.permute.xlu0 %1662
    %1664 = vrot.lane.b32.xlu0 %v1659, 111
    %v1665 = vpop.permute.xlu0 %1664
    %1666 = vrot.lane.b32.xlu0 %v1660, 111
    %v1667 = vpop.permute.xlu0 %1666
    %1668 = vrot.lane.b32.xlu0 %v1661, 111
    %v1669 = vpop.permute.xlu0 %1668
    %v1670 = vsel %vm105, %v1663, %v1665
    %v1671 = vsel %vm105, %v1665, %v1667
    %v1672 = vsel %vm105, %v1667, %v1669
    %v1678 = vmul.f32 %v1651, %v1663
    %v1679 = vmul.f32 %v1652, %v1670
    %v1680 = vmul.f32 %v1653, %v1671
    %v1681 = vmul.f32 %v1654, %v1672
    %v1682 = vmul.f32 %v1655, %v1669
    %1688 = vrot.lane.b32.xlu0 %v1678, 17
    %v1689 = vpop.permute.xlu0 %1688
    %1690 = vrot.lane.b32.xlu0 %v1679, 17
    %v1691 = vpop.permute.xlu0 %1690
    %1692 = vrot.lane.b32.xlu0 %v1680, 17
    %v1693 = vpop.permute.xlu0 %1692
    %1694 = vrot.lane.b32.xlu0 %v1681, 17
    %v1695 = vpop.permute.xlu0 %1694
    %1696 = vrot.lane.b32.xlu0 %v1682, 17
    %v1697 = vpop.permute.xlu0 %1696
    %v1698 = vsel %vm134, %v1689, %v1691
    %v1699 = vsel %vm134, %v1691, %v1693
    %v1700 = vsel %vm134, %v1693, %v1695
    %v1701 = vsel %vm134, %v1695, %v1697
    %1706 = vst [vmem:[#allocation3] sm:$0xff] %v1698
    %1707 = vst [vmem:[#allocation3 + $0x8] sm:$0xff] %v1699
    %1708 = vst [vmem:[#allocation3 + $0x10] sm:$0xff] %v1700
    %1709 = vst [vmem:[#allocation3 + $0x18] sm:$0xff] %v1701
    %v1710 = vld [vmem:[#allocation2] sm:$0xff]
    %v1711 = vld [vmem:[#allocation2 + $0x8] sm:$0xff]
    %v1712 = vld [vmem:[#allocation2 + $0x10] sm:$0xff]
    %v1713 = vld [vmem:[#allocation2 + $0x18] sm:$0xff]
    %v1714 = vld [vmem:[#allocation2 + $0x20] sm:$0xff]
    %v1715 = vld [vmem:[%s152] ss:$8 sm:$0xf]
    %v1717 = vperm.slane %v1715, 0
    %v1718 = vperm.slane %v1715, 1
    %v1719 = vperm.slane %v1715, 2
    %v1720 = vperm.slane %v1715, 3
    %1721 = vrot.lane.b32.xlu0 %v1717, 112
    %v1722 = vpop.permute.xlu0 %1721
    %1723 = vrot.lane.b32.xlu0 %v1718, 112
    %v1724 = vpop.permute.xlu0 %1723
    %1725 = vrot.lane.b32.xlu0 %v1719, 112
    %v1726 = vpop.permute.xlu0 %1725
    %1727 = vrot.lane.b32.xlu0 %v1720, 112
    %v1728 = vpop.permute.xlu0 %1727
    %v1729 = vsel %vm167, %v1722, %v1724
    %v1730 = vsel %vm167, %v1724, %v1726
    %v1731 = vsel %vm167, %v1726, %v1728
    %v1737 = vmul.f32 %v1710, %v1722
    %v1738 = vmul.f32 %v1711, %v1729
    %v1739 = vmul.f32 %v1712, %v1730
    %v1740 = vmul.f32 %v1713, %v1731
    %v1741 = vmul.f32 %v1714, %v1728
    %1747 = vrot.lane.b32.xlu0 %v1737, 16
    %v1748 = vpop.permute.xlu0 %1747
    %1749 = vrot.lane.b32.xlu0 %v1738, 16
    %v1750 = vpop.permute.xlu0 %1749
    %1751 = vrot.lane.b32.xlu0 %v1739, 16
    %v1752 = vpop.permute.xlu0 %1751
    %1753 = vrot.lane.b32.xlu0 %v1740, 16
    %v1754 = vpop.permute.xlu0 %1753
    %1755 = vrot.lane.b32.xlu0 %v1741, 16
    %v1756 = vpop.permute.xlu0 %1755
    %v1757 = vsel %vm196, %v1748, %v1750
    %v1758 = vsel %vm196, %v1750, %v1752
    %v1759 = vsel %vm196, %v1752, %v1754
    %v1760 = vsel %vm196, %v1754, %v1756
    %1765 = vst [vmem:[#allocation3 + $0x20] sm:$0xff] %v1757
    %1766 = vst [vmem:[#allocation3 + $0x28] sm:$0xff] %v1758
    %1767 = vst [vmem:[#allocation3 + $0x30] sm:$0xff] %v1759
    %1768 = vst [vmem:[#allocation3 + $0x38] sm:$0xff] %v1760
    %v1769 = vld [vmem:[#allocation2] sm:$0xff]
    %v1770 = vld [vmem:[#allocation2 + $0x8] sm:$0xff]
    %v1771 = vld [vmem:[#allocation2 + $0x10] sm:$0xff]
    %v1772 = vld [vmem:[#allocation2 + $0x18] sm:$0xff]
    %v1773 = vld [vmem:[#allocation2 + $0x20] sm:$0xff]
    %v1774 = vld [vmem:[%s214] ss:$8 sm:$0xf]
    %v1776 = vperm.slane %v1774, 0
    %v1777 = vperm.slane %v1774, 1
    %v1778 = vperm.slane %v1774, 2
    %v1779 = vperm.slane %v1774, 3
    %1780 = vrot.lane.b32.xlu0 %v1776, 113
    %v1781 = vpop.permute.xlu0 %1780
    %1782 = vrot.lane.b32.xlu0 %v1777, 113
    %v1783 = vpop.permute.xlu0 %1782
    %1784 = vrot.lane.b32.xlu0 %v1778, 113
    %v1785 = vpop.permute.xlu0 %1784
    %1786 = vrot.lane.b32.xlu0 %v1779, 113
    %v1787 = vpop.permute.xlu0 %1786
    %v1788 = vsel %vm229, %v1781, %v1783
    %v1789 = vsel %vm229, %v1783, %v1785
    %v1790 = vsel %vm229, %v1785, %v1787
    %v1796 = vmul.f32 %v1769, %v1781
    %v1797 = vmul.f32 %v1770, %v1788
    %v1798 = vmul.f32 %v1771, %v1789
    %v1799 = vmul.f32 %v1772, %v1790
    %v1800 = vmul.f32 %v1773, %v1787
    %1806 = vrot.lane.b32.xlu0 %v1796, 15
    %v1807 = vpop.permute.xlu0 %1806
    %1808 = vrot.lane.b32.xlu0 %v1797, 15
    %v1809 = vpop.permute.xlu0 %1808
    %1810 = vrot.lane.b32.xlu0 %v1798, 15
    %v1811 = vpop.permute.xlu0 %1810
    %1812 = vrot.lane.b32.xlu0 %v1799, 15
    %v1813 = vpop.permute.xlu0 %1812
    %1814 = vrot.lane.b32.xlu0 %v1800, 15
    %v1815 = vpop.permute.xlu0 %1814
    %v1816 = vsel %vm258, %v1807, %v1809
    %v1817 = vsel %vm258, %v1809, %v1811
    %v1818 = vsel %vm258, %v1811, %v1813
    %v1819 = vsel %vm258, %v1813, %v1815
    %1824 = vst [vmem:[#allocation3 + $0x40] sm:$0xff] %v1816
    %1825 = vst [vmem:[#allocation3 + $0x48] sm:$0xff] %v1817
    %1826 = vst [vmem:[#allocation3 + $0x50] sm:$0xff] %v1818
    %1827 = vst [vmem:[#allocation3 + $0x58] sm:$0xff] %v1819
    %v1828 = vld [vmem:[#allocation2] sm:$0xff]
    %v1829 = vld [vmem:[#allocation2 + $0x8] sm:$0xff]
    %v1830 = vld [vmem:[#allocation2 + $0x10] sm:$0xff]
    %v1831 = vld [vmem:[#allocation2 + $0x18] sm:$0xff]
    %v1832 = vld [vmem:[#allocation2 + $0x20] sm:$0xff]
    %v1833 = vld [vmem:[%s276] ss:$8 sm:$0xf]
    %v1835 = vperm.slane %v1833, 0
    %v1836 = vperm.slane %v1833, 1
    %v1837 = vperm.slane %v1833, 2
    %v1838 = vperm.slane %v1833, 3
    %1839 = vrot.lane.b32.xlu0 %v1835, 127
    %v1840 = vpop.permute.xlu0 %1839
    %1841 = vrot.lane.b32.xlu0 %v1836, 127
    %v1842 = vpop.permute.xlu0 %1841
    %1843 = vrot.lane.b32.xlu0 %v1837, 127
    %v1844 = vpop.permute.xlu0 %1843
    %1845 = vrot.lane.b32.xlu0 %v1838, 127
    %v1846 = vpop.permute.xlu0 %1845
    %v1847 = vsel %vm291, %v1840, %v1842
    %v1848 = vsel %vm291, %v1842, %v1844
    %v1849 = vsel %vm291, %v1844, %v1846
    %v1855 = vmul.f32 %v1828, %v1840
    %v1856 = vmul.f32 %v1829, %v1847
    %v1857 = vmul.f32 %v1830, %v1848
    %v1858 = vmul.f32 %v1831, %v1849
    %v1859 = vmul.f32 %v1832, %v1846
    %1865 = vrot.lane.b32.xlu0 %v1855, 1
    %v1866 = vpop.permute.xlu0 %1865
    %1867 = vrot.lane.b32.xlu0 %v1856, 1
    %v1868 = vpop.permute.xlu0 %1867
    %1869 = vrot.lane.b32.xlu0 %v1857, 1
    %v1870 = vpop.permute.xlu0 %1869
    %1871 = vrot.lane.b32.xlu0 %v1858, 1
    %v1872 = vpop.permute.xlu0 %1871
    %1873 = vrot.lane.b32.xlu0 %v1859, 1
    %v1874 = vpop.permute.xlu0 %1873
    %v1875 = vsel %vm320, %v1866, %v1868
    %v1876 = vsel %vm320, %v1868, %v1870
    %v1877 = vsel %vm320, %v1870, %v1872
    %v1878 = vsel %vm320, %v1872, %v1874
    %1883 = vst [vmem:[#allocation3 + $0x60] sm:$0xff] %v1875
    %1884 = vst [vmem:[#allocation3 + $0x68] sm:$0xff] %v1876
    %1885 = vst [vmem:[#allocation3 + $0x70] sm:$0xff] %v1877
    %1886 = vst [vmem:[#allocation3 + $0x78] sm:$0xff] %v1878
    %v1887 = vld [vmem:[#allocation2 + $0x8] sm:$0xff]
    %v1888 = vld [vmem:[#allocation2 + $0x10] sm:$0xff]
    %v1889 = vld [vmem:[#allocation2 + $0x18] sm:$0xff]
    %v1890 = vld [vmem:[#allocation2 + $0x20] sm:$0xff]
    %v1891 = vld [vmem:[%s337] ss:$8 sm:$0xf]
    %v1893 = vperm.slane %v1891, 0
    %v1894 = vperm.slane %v1891, 1
    %v1895 = vperm.slane %v1891, 2
    %v1896 = vperm.slane %v1891, 3
    %v1901 = vmul.f32 %v1887, %v1893
    %v1902 = vmul.f32 %v1888, %v1894
    %v1903 = vmul.f32 %v1889, %v1895
    %v1904 = vmul.f32 %v1890, %v1896
    %1905 = vst [vmem:[#allocation3 + $0x80] sm:$0xff] %v1901
    %1906 = vst [vmem:[#allocation3 + $0x88] sm:$0xff] %v1902
    %1907 = vst [vmem:[#allocation3 + $0x90] sm:$0xff] %v1903
    %1908 = vst [vmem:[#allocation3 + $0x98] sm:$0xff] %v1904
    %v1909 = vld [vmem:[#allocation2 + $0x8] sm:$0xff]
    %v1910 = vld [vmem:[#allocation2 + $0x10] sm:$0xff]
    %v1911 = vld [vmem:[#allocation2 + $0x18] sm:$0xff]
    %v1912 = vld [vmem:[#allocation2 + $0x20] sm:$0xff]
    %v1913 = vld [vmem:[#allocation2 + $0x28] sm:$0xff]
    %v1914 = vld [vmem:[%s361] ss:$8 sm:$0xf]
    %v1916 = vperm.slane %v1914, 0
    %v1917 = vperm.slane %v1914, 1
    %v1918 = vperm.slane %v1914, 2
    %v1919 = vperm.slane %v1914, 3
    %1920 = vrot.lane.b32.xlu0 %v1916, 1
    %v1921 = vpop.permute.xlu0 %1920
    %1922 = vrot.lane.b32.xlu0 %v1917, 1
    %v1923 = vpop.permute.xlu0 %1922
    %1924 = vrot.lane.b32.xlu0 %v1918, 1
    %v1925 = vpop.permute.xlu0 %1924
    %1926 = vrot.lane.b32.xlu0 %v1919, 1
    %v1927 = vpop.permute.xlu0 %1926
    %v1928 = vsel %vm320, %v1921, %v1923
    %v1929 = vsel %vm320, %v1923, %v1925
    %v1930 = vsel %vm320, %v1925, %v1927
    %v1936 = vmul.f32 %v1909, %v1921
    %v1937 = vmul.f32 %v1910, %v1928
    %v1938 = vmul.f32 %v1911, %v1929
    %v1939 = vmul.f32 %v1912, %v1930
    %v1940 = vmul.f32 %v1913, %v1927
    %1946 = vrot.lane.b32.xlu0 %v1936, 127
    %v1947 = vpop.permute.xlu0 %1946
    %1948 = vrot.lane.b32.xlu0 %v1937, 127
    %v1949 = vpop.permute.xlu0 %1948
    %1950 = vrot.lane.b32.xlu0 %v1938, 127
    %v1951 = vpop.permute.xlu0 %1950
    %1952 = vrot.lane.b32.xlu0 %v1939, 127
    %v1953 = vpop.permute.xlu0 %1952
    %1954 = vrot.lane.b32.xlu0 %v1940, 127
    %v1955 = vpop.permute.xlu0 %1954
    %v1956 = vsel %vm291, %v1947, %v1949
    %v1957 = vsel %vm291, %v1949, %v1951
    %v1958 = vsel %vm291, %v1951, %v1953
    %v1959 = vsel %vm291, %v1953, %v1955
    %1964 = vst [vmem:[#allocation3 + $0xa0] sm:$0xff] %v1956
    %1965 = vst [vmem:[#allocation3 + $0xa8] sm:$0xff] %v1957
    %1966 = vst [vmem:[#allocation3 + $0xb0] sm:$0xff] %v1958
    %1967 = vst [vmem:[#allocation3 + $0xb8] sm:$0xff] %v1959
    %v1968 = vld [vmem:[#allocation2 + $0x8] sm:$0xff]
    %v1969 = vld [vmem:[#allocation2 + $0x10] sm:$0xff]
    %v1970 = vld [vmem:[#allocation2 + $0x18] sm:$0xff]
    %v1971 = vld [vmem:[#allocation2 + $0x20] sm:$0xff]
    %v1972 = vld [vmem:[#allocation2 + $0x28] sm:$0xff]
    %v1973 = vld [vmem:[%s421] ss:$8 sm:$0xf]
    %v1975 = vperm.slane %v1973, 0
    %v1976 = vperm.slane %v1973, 1
    %v1977 = vperm.slane %v1973, 2
    %v1978 = vperm.slane %v1973, 3
    %1979 = vrot.lane.b32.xlu0 %v1975, 15
    %v1980 = vpop.permute.xlu0 %1979
    %1981 = vrot.lane.b32.xlu0 %v1976, 15
    %v1982 = vpop.permute.xlu0 %1981
    %1983 = vrot.lane.b32.xlu0 %v1977, 15
    %v1984 = vpop.permute.xlu0 %1983
    %1985 = vrot.lane.b32.xlu0 %v1978, 15
    %v1986 = vpop.permute.xlu0 %1985
    %v1987 = vsel %vm258, %v1980, %v1982
    %v1988 = vsel %vm258, %v1982, %v1984
    %v1989 = vsel %vm258, %v1984, %v1986
    %v1995 = vmul.f32 %v1968, %v1980
    %v1996 = vmul.f32 %v1969, %v1987
    %v1997 = vmul.f32 %v1970, %v1988
    %v1998 = vmul.f32 %v1971, %v1989
    %v1999 = vmul.f32 %v1972, %v1986
    %2005 = vrot.lane.b32.xlu0 %v1995, 113
    %v2006 = vpop.permute.xlu0 %2005
    %2007 = vrot.lane.b32.xlu0 %v1996, 113
    %v2008 = vpop.permute.xlu0 %2007
    %2009 = vrot.lane.b32.xlu0 %v1997, 113
    %v2010 = vpop.permute.xlu0 %2009
    %2011 = vrot.lane.b32.xlu0 %v1998, 113
    %v2012 = vpop.permute.xlu0 %2011
    %2013 = vrot.lane.b32.xlu0 %v1999, 113
    %v2014 = vpop.permute.xlu0 %2013
    %v2015 = vsel %vm229, %v2006, %v2008
    %v2016 = vsel %vm229, %v2008, %v2010
    %v2017 = vsel %vm229, %v2010, %v2012
    %v2018 = vsel %vm229, %v2012, %v2014
    %2023 = vst [vmem:[#allocation3 + $0xc0] sm:$0xff] %v2015
    %2024 = vst [vmem:[#allocation3 + $0xc8] sm:$0xff] %v2016
    %2025 = vst [vmem:[#allocation3 + $0xd0] sm:$0xff] %v2017
    %2026 = vst [vmem:[#allocation3 + $0xd8] sm:$0xff] %v2018
    %v2027 = vld [vmem:[#allocation2 + $0x8] sm:$0xff]
    %v2028 = vld [vmem:[#allocation2 + $0x10] sm:$0xff]
    %v2029 = vld [vmem:[#allocation2 + $0x18] sm:$0xff]
    %v2030 = vld [vmem:[#allocation2 + $0x20] sm:$0xff]
    %v2031 = vld [vmem:[#allocation2 + $0x28] sm:$0xff]
    %v2032 = vld [vmem:[%s481] ss:$8 sm:$0xf]
    %v2034 = vperm.slane %v2032, 0
    %v2035 = vperm.slane %v2032, 1
    %v2036 = vperm.slane %v2032, 2
    %v2037 = vperm.slane %v2032, 3
    %2038 = vrot.lane.b32.xlu0 %v2034, 16
    %v2039 = vpop.permute.xlu0 %2038
    %2040 = vrot.lane.b32.xlu0 %v2035, 16
    %v2041 = vpop.permute.xlu0 %2040
    %2042 = vrot.lane.b32.xlu0 %v2036, 16
    %v2043 = vpop.permute.xlu0 %2042
    %2044 = vrot.lane.b32.xlu0 %v2037, 16
    %v2045 = vpop.permute.xlu0 %2044
    %v2046 = vsel %vm196, %v2039, %v2041
    %v2047 = vsel %vm196, %v2041, %v2043
    %v2048 = vsel %vm196, %v2043, %v2045
    %v2054 = vmul.f32 %v2027, %v2039
    %v2055 = vmul.f32 %v2028, %v2046
    %v2056 = vmul.f32 %v2029, %v2047
    %v2057 = vmul.f32 %v2030, %v2048
    %v2058 = vmul.f32 %v2031, %v2045
    %2064 = vrot.lane.b32.xlu0 %v2054, 112
    %v2065 = vpop.permute.xlu0 %2064
    %2066 = vrot.lane.b32.xlu0 %v2055, 112
    %v2067 = vpop.permute.xlu0 %2066
    %2068 = vrot.lane.b32.xlu0 %v2056, 112
    %v2069 = vpop.permute.xlu0 %2068
    %2070 = vrot.lane.b32.xlu0 %v2057, 112
    %v2071 = vpop.permute.xlu0 %2070
    %2072 = vrot.lane.b32.xlu0 %v2058, 112
    %v2073 = vpop.permute.xlu0 %2072
    %v2074 = vsel %vm167, %v2065, %v2067
    %v2075 = vsel %vm167, %v2067, %v2069
    %v2076 = vsel %vm167, %v2069, %v2071
    %v2077 = vsel %vm167, %v2071, %v2073
    %2082 = vst [vmem:[#allocation3 + $0xe0] sm:$0xff] %v2074
    %2083 = vst [vmem:[#allocation3 + $0xe8] sm:$0xff] %v2075
    %2084 = vst [vmem:[#allocation3 + $0xf0] sm:$0xff] %v2076
    %2085 = vst [vmem:[#allocation3 + $0xf8] sm:$0xff] %v2077
    %v2086 = vld [vmem:[#allocation2 + $0x8] sm:$0xff]
    %v2087 = vld [vmem:[#allocation2 + $0x10] sm:$0xff]
    %v2088 = vld [vmem:[#allocation2 + $0x18] sm:$0xff]
    %v2089 = vld [vmem:[#allocation2 + $0x20] sm:$0xff]
    %v2090 = vld [vmem:[#allocation2 + $0x28] sm:$0xff]
    %v2091 = vld [vmem:[%s541] ss:$8 sm:$0xf]
    %v2093 = vperm.slane %v2091, 0
    %v2094 = vperm.slane %v2091, 1
    %v2095 = vperm.slane %v2091, 2
    %v2096 = vperm.slane %v2091, 3
    %2097 = vrot.lane.b32.xlu0 %v2093, 17
    %v2098 = vpop.permute.xlu0 %2097
    %2099 = vrot.lane.b32.xlu0 %v2094, 17
    %v2100 = vpop.permute.xlu0 %2099
    %2101 = vrot.lane.b32.xlu0 %v2095, 17
    %v2102 = vpop.permute.xlu0 %2101
    %2103 = vrot.lane.b32.xlu0 %v2096, 17
    %v2104 = vpop.permute.xlu0 %2103
    %v2105 = vsel %vm134, %v2098, %v2100
    %v2106 = vsel %vm134, %v2100, %v2102
    %v2107 = vsel %vm134, %v2102, %v2104
    %v2113 = vmul.f32 %v2086, %v2098
    %v2114 = vmul.f32 %v2087, %v2105
    %v2115 = vmul.f32 %v2088, %v2106
    %v2116 = vmul.f32 %v2089, %v2107
    %v2117 = vmul.f32 %v2090, %v2104
    %2123 = vrot.lane.b32.xlu0 %v2113, 111
    %v2124 = vpop.permute.xlu0 %2123
    %2125 = vrot.lane.b32.xlu0 %v2114, 111
    %v2126 = vpop.permute.xlu0 %2125
    %2127 = vrot.lane.b32.xlu0 %v2115, 111
    %v2128 = vpop.permute.xlu0 %2127
    %2129 = vrot.lane.b32.xlu0 %v2116, 111
    %v2130 = vpop.permute.xlu0 %2129
    %2131 = vrot.lane.b32.xlu0 %v2117, 111
    %v2132 = vpop.permute.xlu0 %2131
    %v2133 = vsel %vm105, %v2124, %v2126
    %v2134 = vsel %vm105, %v2126, %v2128
    %v2135 = vsel %vm105, %v2128, %v2130
    %v2136 = vsel %vm105, %v2130, %v2132
    %2141 = vst [vmem:[#allocation3 + $0x100] sm:$0xff] %v2133
    %2142 = vst [vmem:[#allocation3 + $0x108] sm:$0xff] %v2134
    %2143 = vst [vmem:[#allocation3 + $0x110] sm:$0xff] %v2135
    %2144 = vst [vmem:[#allocation3 + $0x118] sm:$0xff] %v2136
    %v2145 = vld [vmem:[%s5] sm:$0xff]
    %v2146 = vld [vmem:[#allocation3] sm:$0xff]
    %v2147 = vld [vmem:[#allocation3 + $0x8] sm:$0xff]
    %v2148 = vld [vmem:[#allocation3 + $0x10] sm:$0xff]
    %v2149 = vld [vmem:[#allocation3 + $0x18] sm:$0xff]
    %v2150 = vld [vmem:[#allocation3 + $0x20] sm:$0xff]
    %v2151 = vld [vmem:[#allocation3 + $0x28] sm:$0xff]
    %v2152 = vld [vmem:[#allocation3 + $0x30] sm:$0xff]
    %v2153 = vld [vmem:[#allocation3 + $0x38] sm:$0xff]
    %v2154 = vld [vmem:[#allocation3 + $0x40] sm:$0xff]
    %v2155 = vld [vmem:[#allocation3 + $0x48] sm:$0xff]
    %v2156 = vld [vmem:[#allocation3 + $0x50] sm:$0xff]
    %v2157 = vld [vmem:[#allocation3 + $0x58] sm:$0xff]
    %v2158 = vld [vmem:[#allocation3 + $0x60] sm:$0xff]
    %v2159 = vld [vmem:[#allocation3 + $0x68] sm:$0xff]
    %v2160 = vld [vmem:[#allocation3 + $0x70] sm:$0xff]
    %v2161 = vld [vmem:[#allocation3 + $0x78] sm:$0xff]
    %v2162 = vld [vmem:[#allocation3 + $0x80] sm:$0xff]
    %v2163 = vld [vmem:[#allocation3 + $0x88] sm:$0xff]
    %v2164 = vld [vmem:[#allocation3 + $0x90] sm:$0xff]
    %v2165 = vld [vmem:[#allocation3 + $0x98] sm:$0xff]
    %v2166 = vld [vmem:[#allocation3 + $0xa0] sm:$0xff]
    %v2167 = vld [vmem:[#allocation3 + $0xa8] sm:$0xff]
    %v2168 = vld [vmem:[#allocation3 + $0xb0] sm:$0xff]
    %v2169 = vld [vmem:[#allocation3 + $0xb8] sm:$0xff]
    %v2170 = vld [vmem:[#allocation3 + $0xc0] sm:$0xff]
    %v2171 = vld [vmem:[#allocation3 + $0xc8] sm:$0xff]
    %v2172 = vld [vmem:[#allocation3 + $0xd0] sm:$0xff]
    %v2173 = vld [vmem:[#allocation3 + $0xd8] sm:$0xff]
    %v2174 = vld [vmem:[#allocation3 + $0xe0] sm:$0xff]
    %v2175 = vld [vmem:[#allocation3 + $0xe8] sm:$0xff]
    %v2176 = vld [vmem:[#allocation3 + $0xf0] sm:$0xff]
    %v2177 = vld [vmem:[#allocation3 + $0xf8] sm:$0xff]
    %v2178 = vld [vmem:[#allocation3 + $0x100] sm:$0xff]
    %v2179 = vld [vmem:[#allocation3 + $0x108] sm:$0xff]
    %v2180 = vld [vmem:[#allocation3 + $0x110] sm:$0xff]
    %v2181 = vld [vmem:[#allocation3 + $0x118] sm:$0xff]
    %v2182 = vld [vmem:[%s6] sm:$0xff]
    %2184 = vset.pattern.permute.xlu0 0
    %2185 = vperm.xlu0 %2184, %v2182
    %v2186 = vpop.permute.xlu0 %2185
    %v2189 = vsel %vm639, %v2145, 0
    %2191 = vmatpush.msra.mxu0 0.0
    %2192 = vmatpush.msra.mxu0 0.0
    %2193 = vmatpush.msra.mxu0 0.0
    %2194 = vmatpush.msra.mxu0 0.0
    %2195 = vmatpush.msra.mxu0 0.0
    %2196 = vmatpush.msra.mxu0 0.0
    %2197 = vmatpush.msra.mxu0 0.0
    %v2198 = vand.u32 %v2178, 4294901760
    %2199 = vmatpush.msra.mxu0 %v2198
    %v2200 = vand.u32 %v2174, 4294901760
    %2201 = vmatpush.msra.mxu0 %v2200
    %v2202 = vand.u32 %v2170, 4294901760
    %2203 = vmatpush.msra.mxu0 %v2202
    %v2204 = vand.u32 %v2166, 4294901760
    %2205 = vmatpush.msra.mxu0 %v2204
    %v2206 = vand.u32 %v2162, 4294901760
    %2207 = vmatpush.msra.mxu0 %v2206
    %v2208 = vand.u32 %v2158, 4294901760
    %2209 = vmatpush.msra.mxu0 %v2208
    %v2210 = vand.u32 %v2154, 4294901760
    %2211 = vmatpush.msra.mxu0 %v2210
    %v2212 = vand.u32 %v2150, 4294901760
    %2213 = vmatpush.msra.mxu0 %v2212
    %v2214 = vand.u32 %v2146, 4294901760
    %2215 = vmatpush.msra.mxu0 %v2214
    %v2216 = vand.u32 %v2189, 4294901760
    %v2217 = vsub.f32 %v2189, %v2216
    %v2218 = vand.u32 %v2217, 4294901760
    %v2219 = vsub.f32 %v2217, %v2218
    %v2220 = vand.u32 %v2219, 4294901760
    %2221 = vmatmul.f32.gmra.mxu0 %v2220
    %v2222 = vpop.f32.mrf.mxu0
    %v2223 = vadd.f32 %v2186, %v2222
    %2224 = vdwg.mxu0
    %2225 = vmatpush.msra.mxu0 0.0
    %2226 = vmatpush.msra.mxu0 0.0
    %2227 = vmatpush.msra.mxu0 0.0
    %2228 = vmatpush.msra.mxu0 0.0
    %2229 = vmatpush.msra.mxu0 0.0
    %2230 = vmatpush.msra.mxu0 0.0
    %2231 = vmatpush.msra.mxu0 0.0
    %v2232 = vand.u32 %v2178, 4294901760
    %v2233 = vsub.f32 %v2178, %v2232
    %v2234 = vand.u32 %v2233, 4294901760
    %v2235 = vsub.f32 %v2233, %v2234
    %v2236 = vand.u32 %v2235, 4294901760
    %2237 = vmatpush.msra.mxu0 %v2236
    %v2238 = vand.u32 %v2174, 4294901760
    %v2239 = vsub.f32 %v2174, %v2238
    %v2240 = vand.u32 %v2239, 4294901760
    %v2241 = vsub.f32 %v2239, %v2240
    %v2242 = vand.u32 %v2241, 4294901760
    %2243 = vmatpush.msra.mxu0 %v2242
    %v2244 = vand.u32 %v2170, 4294901760
    %v2245 = vsub.f32 %v2170, %v2244
    %v2246 = vand.u32 %v2245, 4294901760
    %v2247 = vsub.f32 %v2245, %v2246
    %v2248 = vand.u32 %v2247, 4294901760
    %2249 = vmatpush.msra.mxu0 %v2248
    %v2250 = vand.u32 %v2166, 4294901760
    %v2251 = vsub.f32 %v2166, %v2250
    %v2252 = vand.u32 %v2251, 4294901760
    %v2253 = vsub.f32 %v2251, %v2252
    %v2254 = vand.u32 %v2253, 4294901760
    %2255 = vmatpush.msra.mxu0 %v2254
    %v2256 = vand.u32 %v2162, 4294901760
    %v2257 = vsub.f32 %v2162, %v2256
    %v2258 = vand.u32 %v2257, 4294901760
    %v2259 = vsub.f32 %v2257, %v2258
    %v2260 = vand.u32 %v2259, 4294901760
    %2261 = vmatpush.msra.mxu0 %v2260
    %v2262 = vand.u32 %v2158, 4294901760
    %v2263 = vsub.f32 %v2158, %v2262
    %v2264 = vand.u32 %v2263, 4294901760
    %v2265 = vsub.f32 %v2263, %v2264
    %v2266 = vand.u32 %v2265, 4294901760
    %2267 = vmatpush.msra.mxu0 %v2266
    %v2268 = vand.u32 %v2154, 4294901760
    %v2269 = vsub.f32 %v2154, %v2268
    %v2270 = vand.u32 %v2269, 4294901760
    %v2271 = vsub.f32 %v2269, %v2270
    %v2272 = vand.u32 %v2271, 4294901760
    %2273 = vmatpush.msra.mxu0 %v2272
    %v2274 = vand.u32 %v2150, 4294901760
    %v2275 = vsub.f32 %v2150, %v2274
    %v2276 = vand.u32 %v2275, 4294901760
    %v2277 = vsub.f32 %v2275, %v2276
    %v2278 = vand.u32 %v2277, 4294901760
    %2279 = vmatpush.msra.mxu0 %v2278
    %v2280 = vand.u32 %v2146, 4294901760
    %v2281 = vsub.f32 %v2146, %v2280
    %v2282 = vand.u32 %v2281, 4294901760
    %v2283 = vsub.f32 %v2281, %v2282
    %v2284 = vand.u32 %v2283, 4294901760
    %2285 = vmatpush.msra.mxu0 %v2284
    %v2286 = vand.u32 %v2189, 4294901760
    %2287 = vmatmul.f32.gmra.mxu0 %v2286
    %v2288 = vpop.f32.mrf.mxu0
    %v2289 = vadd.f32 %v2223, %v2288
    %2290 = vdwg.mxu0
    %2291 = vmatpush.msra.mxu0 0.0
    %2292 = vmatpush.msra.mxu0 0.0
    %2293 = vmatpush.msra.mxu0 0.0
    %2294 = vmatpush.msra.mxu0 0.0
    %2295 = vmatpush.msra.mxu0 0.0
    %2296 = vmatpush.msra.mxu0 0.0
    %2297 = vmatpush.msra.mxu0 0.0
    %v2298 = vand.u32 %v2178, 4294901760
    %v2299 = vsub.f32 %v2178, %v2298
    %2300 = vmatpush.msra.mxu0 %v2299
    %v2301 = vand.u32 %v2174, 4294901760
    %v2302 = vsub.f32 %v2174, %v2301
    %2303 = vmatpush.msra.mxu0 %v2302
    %v2304 = vand.u32 %v2170, 4294901760
    %v2305 = vsub.f32 %v2170, %v2304
    %2306 = vmatpush.msra.mxu0 %v2305
    %v2307 = vand.u32 %v2166, 4294901760
    %v2308 = vsub.f32 %v2166, %v2307
    %2309 = vmatpush.msra.mxu0 %v2308
    %v2310 = vand.u32 %v2162, 4294901760
    %v2311 = vsub.f32 %v2162, %v2310
    %2312 = vmatpush.msra.mxu0 %v2311
    %v2313 = vand.u32 %v2158, 4294901760
    %v2314 = vsub.f32 %v2158, %v2313
    %2315 = vmatpush.msra.mxu0 %v2314
    %v2316 = vand.u32 %v2154, 4294901760
    %v2317 = vsub.f32 %v2154, %v2316
    %2318 = vmatpush.msra.mxu0 %v2317
    %v2319 = vand.u32 %v2150, 4294901760
    %v2320 = vsub.f32 %v2150, %v2319
    %2321 = vmatpush.msra.mxu0 %v2320
    %v2322 = vand.u32 %v2146, 4294901760
    %v2323 = vsub.f32 %v2146, %v2322
    %2324 = vmatpush.msra.mxu0 %v2323
    %v2325 = vand.u32 %v2189, 4294901760
    %v2326 = vsub.f32 %v2189, %v2325
    %2327 = vmatmul.f32.gmra.mxu0 %v2326
    %v2328 = vpop.f32.mrf.mxu0
    %v2329 = vadd.f32 %v2289, %v2328
    %2330 = vdwg.mxu0
    %2331 = vmatpush.msra.mxu0 0.0
    %2332 = vmatpush.msra.mxu0 0.0
    %2333 = vmatpush.msra.mxu0 0.0
    %2334 = vmatpush.msra.mxu0 0.0
    %2335 = vmatpush.msra.mxu0 0.0
    %2336 = vmatpush.msra.mxu0 0.0
    %2337 = vmatpush.msra.mxu0 0.0
    %v2338 = vand.u32 %v2178, 4294901760
    %2339 = vmatpush.msra.mxu0 %v2338
    %v2340 = vand.u32 %v2174, 4294901760
    %2341 = vmatpush.msra.mxu0 %v2340
    %v2342 = vand.u32 %v2170, 4294901760
    %2343 = vmatpush.msra.mxu0 %v2342
    %v2344 = vand.u32 %v2166, 4294901760
    %2345 = vmatpush.msra.mxu0 %v2344
    %v2346 = vand.u32 %v2162, 4294901760
    %2347 = vmatpush.msra.mxu0 %v2346
    %v2348 = vand.u32 %v2158, 4294901760
    %2349 = vmatpush.msra.mxu0 %v2348
    %v2350 = vand.u32 %v2154, 4294901760
    %2351 = vmatpush.msra.mxu0 %v2350
    %v2352 = vand.u32 %v2150, 4294901760
    %2353 = vmatpush.msra.mxu0 %v2352
    %v2354 = vand.u32 %v2146, 4294901760
    %2355 = vmatpush.msra.mxu0 %v2354
    %v2356 = vand.u32 %v2189, 4294901760
    %v2357 = vsub.f32 %v2189, %v2356
    %v2358 = vand.u32 %v2357, 4294901760
    %2359 = vmatmul.f32.gmra.mxu0 %v2358
    %v2360 = vpop.f32.mrf.mxu0
    %v2361 = vadd.f32 %v2329, %v2360
    %2362 = vdwg.mxu0
    %2363 = vmatpush.msra.mxu0 0.0
    %2364 = vmatpush.msra.mxu0 0.0
    %2365 = vmatpush.msra.mxu0 0.0
    %2366 = vmatpush.msra.mxu0 0.0
    %2367 = vmatpush.msra.mxu0 0.0
    %2368 = vmatpush.msra.mxu0 0.0
    %2369 = vmatpush.msra.mxu0 0.0
    %v2370 = vand.u32 %v2178, 4294901760
    %v2371 = vsub.f32 %v2178, %v2370
    %v2372 = vand.u32 %v2371, 4294901760
    %2373 = vmatpush.msra.mxu0 %v2372
    %v2374 = vand.u32 %v2174, 4294901760
    %v2375 = vsub.f32 %v2174, %v2374
    %v2376 = vand.u32 %v2375, 4294901760
    %2377 = vmatpush.msra.mxu0 %v2376
    %v2378 = vand.u32 %v2170, 4294901760
    %v2379 = vsub.f32 %v2170, %v2378
    %v2380 = vand.u32 %v2379, 4294901760
    %2381 = vmatpush.msra.mxu0 %v2380
    %v2382 = vand.u32 %v2166, 4294901760
    %v2383 = vsub.f32 %v2166, %v2382
    %v2384 = vand.u32 %v2383, 4294901760
    %2385 = vmatpush.msra.mxu0 %v2384
    %v2386 = vand.u32 %v2162, 4294901760
    %v2387 = vsub.f32 %v2162, %v2386
    %v2388 = vand.u32 %v2387, 4294901760
    %2389 = vmatpush.msra.mxu0 %v2388
    %v2390 = vand.u32 %v2158, 4294901760
    %v2391 = vsub.f32 %v2158, %v2390
    %v2392 = vand.u32 %v2391, 4294901760
    %2393 = vmatpush.msra.mxu0 %v2392
    %v2394 = vand.u32 %v2154, 4294901760
    %v2395 = vsub.f32 %v2154, %v2394
    %v2396 = vand.u32 %v2395, 4294901760
    %2397 = vmatpush.msra.mxu0 %v2396
    %v2398 = vand.u32 %v2150, 4294901760
    %v2399 = vsub.f32 %v2150, %v2398
    %v2400 = vand.u32 %v2399, 4294901760
    %2401 = vmatpush.msra.mxu0 %v2400
    %v2402 = vand.u32 %v2146, 4294901760
    %v2403 = vsub.f32 %v2146, %v2402
    %v2404 = vand.u32 %v2403, 4294901760
    %2405 = vmatpush.msra.mxu0 %v2404
    %v2406 = vand.u32 %v2189, 4294901760
    %2407 = vmatmul.f32.gmra.mxu0 %v2406
    %v2408 = vpop.f32.mrf.mxu0
    %v2409 = vadd.f32 %v2361, %v2408
    %2410 = vdwg.mxu0
    %2411 = vmatpush.msra.mxu0 0.0
    %2412 = vmatpush.msra.mxu0 0.0
    %2413 = vmatpush.msra.mxu0 0.0
    %2414 = vmatpush.msra.mxu0 0.0
    %2415 = vmatpush.msra.mxu0 0.0
    %2416 = vmatpush.msra.mxu0 0.0
    %2417 = vmatpush.msra.mxu0 0.0
    %v2418 = vand.u32 %v2178, 4294901760
    %2419 = vmatpush.msra.mxu0 %v2418
    %v2420 = vand.u32 %v2174, 4294901760
    %2421 = vmatpush.msra.mxu0 %v2420
    %v2422 = vand.u32 %v2170, 4294901760
    %2423 = vmatpush.msra.mxu0 %v2422
    %v2424 = vand.u32 %v2166, 4294901760
    %2425 = vmatpush.msra.mxu0 %v2424
    %v2426 = vand.u32 %v2162, 4294901760
    %2427 = vmatpush.msra.mxu0 %v2426
    %v2428 = vand.u32 %v2158, 4294901760
    %2429 = vmatpush.msra.mxu0 %v2428
    %v2430 = vand.u32 %v2154, 4294901760
    %2431 = vmatpush.msra.mxu0 %v2430
    %v2432 = vand.u32 %v2150, 4294901760
    %2433 = vmatpush.msra.mxu0 %v2432
    %v2434 = vand.u32 %v2146, 4294901760
    %2435 = vmatpush.msra.mxu0 %v2434
    %v2436 = vand.u32 %v2189, 4294901760
    %2437 = vmatmul.f32.gmra.mxu0 %v2436
    %v2438 = vpop.f32.mrf.mxu0
    %v2439 = vadd.f32 %v2409, %v2438
    %2440 = vdwg.mxu0
    %2441 = vmatpush.msra.mxu0 0.0
    %2442 = vmatpush.msra.mxu0 0.0
    %2443 = vmatpush.msra.mxu0 0.0
    %2444 = vmatpush.msra.mxu0 0.0
    %2445 = vmatpush.msra.mxu0 0.0
    %2446 = vmatpush.msra.mxu0 0.0
    %2447 = vmatpush.msra.mxu0 0.0
    %v2448 = vand.u32 %v2179, 4294901760
    %2449 = vmatpush.msra.mxu0 %v2448
    %v2450 = vand.u32 %v2175, 4294901760
    %2451 = vmatpush.msra.mxu0 %v2450
    %v2452 = vand.u32 %v2171, 4294901760
    %2453 = vmatpush.msra.mxu0 %v2452
    %v2454 = vand.u32 %v2167, 4294901760
    %2455 = vmatpush.msra.mxu0 %v2454
    %v2456 = vand.u32 %v2163, 4294901760
    %2457 = vmatpush.msra.mxu0 %v2456
    %v2458 = vand.u32 %v2159, 4294901760
    %2459 = vmatpush.msra.mxu0 %v2458
    %v2460 = vand.u32 %v2155, 4294901760
    %2461 = vmatpush.msra.mxu0 %v2460
    %v2462 = vand.u32 %v2151, 4294901760
    %2463 = vmatpush.msra.mxu0 %v2462
    %v2464 = vand.u32 %v2147, 4294901760
    %2465 = vmatpush.msra.mxu0 %v2464
    %v2466 = vand.u32 %v2189, 4294901760
    %v2467 = vsub.f32 %v2189, %v2466
    %v2468 = vand.u32 %v2467, 4294901760
    %v2469 = vsub.f32 %v2467, %v2468
    %v2470 = vand.u32 %v2469, 4294901760
    %2471 = vmatmul.f32.gmra.mxu0 %v2470
    %v2472 = vpop.f32.mrf.mxu0
    %v2473 = vadd.f32 %v2186, %v2472
    %2474 = vdwg.mxu0
    %2475 = vmatpush.msra.mxu0 0.0
    %2476 = vmatpush.msra.mxu0 0.0
    %2477 = vmatpush.msra.mxu0 0.0
    %2478 = vmatpush.msra.mxu0 0.0
    %2479 = vmatpush.msra.mxu0 0.0
    %2480 = vmatpush.msra.mxu0 0.0
    %2481 = vmatpush.msra.mxu0 0.0
    %v2482 = vand.u32 %v2179, 4294901760
    %v2483 = vsub.f32 %v2179, %v2482
    %v2484 = vand.u32 %v2483, 4294901760
    %v2485 = vsub.f32 %v2483, %v2484
    %v2486 = vand.u32 %v2485, 4294901760
    %2487 = vmatpush.msra.mxu0 %v2486
    %v2488 = vand.u32 %v2175, 4294901760
    %v2489 = vsub.f32 %v2175, %v2488
    %v2490 = vand.u32 %v2489, 4294901760
    %v2491 = vsub.f32 %v2489, %v2490
    %v2492 = vand.u32 %v2491, 4294901760
    %2493 = vmatpush.msra.mxu0 %v2492
    %v2494 = vand.u32 %v2171, 4294901760
    %v2495 = vsub.f32 %v2171, %v2494
    %v2496 = vand.u32 %v2495, 4294901760
    %v2497 = vsub.f32 %v2495, %v2496
    %v2498 = vand.u32 %v2497, 4294901760
    %2499 = vmatpush.msra.mxu0 %v2498
    %v2500 = vand.u32 %v2167, 4294901760
    %v2501 = vsub.f32 %v2167, %v2500
    %v2502 = vand.u32 %v2501, 4294901760
    %v2503 = vsub.f32 %v2501, %v2502
    %v2504 = vand.u32 %v2503, 4294901760
    %2505 = vmatpush.msra.mxu0 %v2504
    %v2506 = vand.u32 %v2163, 4294901760
    %v2507 = vsub.f32 %v2163, %v2506
    %v2508 = vand.u32 %v2507, 4294901760
    %v2509 = vsub.f32 %v2507, %v2508
    %v2510 = vand.u32 %v2509, 4294901760
    %2511 = vmatpush.msra.mxu0 %v2510
    %v2512 = vand.u32 %v2159, 4294901760
    %v2513 = vsub.f32 %v2159, %v2512
    %v2514 = vand.u32 %v2513, 4294901760
    %v2515 = vsub.f32 %v2513, %v2514
    %v2516 = vand.u32 %v2515, 4294901760
    %2517 = vmatpush.msra.mxu0 %v2516
    %v2518 = vand.u32 %v2155, 4294901760
    %v2519 = vsub.f32 %v2155, %v2518
    %v2520 = vand.u32 %v2519, 4294901760
    %v2521 = vsub.f32 %v2519, %v2520
    %v2522 = vand.u32 %v2521, 4294901760
    %2523 = vmatpush.msra.mxu0 %v2522
    %v2524 = vand.u32 %v2151, 4294901760
    %v2525 = vsub.f32 %v2151, %v2524
    %v2526 = vand.u32 %v2525, 4294901760
    %v2527 = vsub.f32 %v2525, %v2526
    %v2528 = vand.u32 %v2527, 4294901760
    %2529 = vmatpush.msra.mxu0 %v2528
    %v2530 = vand.u32 %v2147, 4294901760
    %v2531 = vsub.f32 %v2147, %v2530
    %v2532 = vand.u32 %v2531, 4294901760
    %v2533 = vsub.f32 %v2531, %v2532
    %v2534 = vand.u32 %v2533, 4294901760
    %2535 = vmatpush.msra.mxu0 %v2534
    %v2536 = vand.u32 %v2189, 4294901760
    %2537 = vmatmul.f32.gmra.mxu0 %v2536
    %v2538 = vpop.f32.mrf.mxu0
    %v2539 = vadd.f32 %v2473, %v2538
    %2540 = vdwg.mxu0
    %2541 = vmatpush.msra.mxu0 0.0
    %2542 = vmatpush.msra.mxu0 0.0
    %2543 = vmatpush.msra.mxu0 0.0
    %2544 = vmatpush.msra.mxu0 0.0
    %2545 = vmatpush.msra.mxu0 0.0
    %2546 = vmatpush.msra.mxu0 0.0
    %2547 = vmatpush.msra.mxu0 0.0
    %v2548 = vand.u32 %v2179, 4294901760
    %v2549 = vsub.f32 %v2179, %v2548
    %2550 = vmatpush.msra.mxu0 %v2549
    %v2551 = vand.u32 %v2175, 4294901760
    %v2552 = vsub.f32 %v2175, %v2551
    %2553 = vmatpush.msra.mxu0 %v2552
    %v2554 = vand.u32 %v2171, 4294901760
    %v2555 = vsub.f32 %v2171, %v2554
    %2556 = vmatpush.msra.mxu0 %v2555
    %v2557 = vand.u32 %v2167, 4294901760
    %v2558 = vsub.f32 %v2167, %v2557
    %2559 = vmatpush.msra.mxu0 %v2558
    %v2560 = vand.u32 %v2163, 4294901760
    %v2561 = vsub.f32 %v2163, %v2560
    %2562 = vmatpush.msra.mxu0 %v2561
    %v2563 = vand.u32 %v2159, 4294901760
    %v2564 = vsub.f32 %v2159, %v2563
    %2565 = vmatpush.msra.mxu0 %v2564
    %v2566 = vand.u32 %v2155, 4294901760
    %v2567 = vsub.f32 %v2155, %v2566
    %2568 = vmatpush.msra.mxu0 %v2567
    %v2569 = vand.u32 %v2151, 4294901760
    %v2570 = vsub.f32 %v2151, %v2569
    %2571 = vmatpush.msra.mxu0 %v2570
    %v2572 = vand.u32 %v2147, 4294901760
    %v2573 = vsub.f32 %v2147, %v2572
    %2574 = vmatpush.msra.mxu0 %v2573
    %v2575 = vand.u32 %v2189, 4294901760
    %v2576 = vsub.f32 %v2189, %v2575
    %2577 = vmatmul.f32.gmra.mxu0 %v2576
    %v2578 = vpop.f32.mrf.mxu0
    %v2579 = vadd.f32 %v2539, %v2578
    %2580 = vdwg.mxu0
    %2581 = vmatpush.msra.mxu0 0.0
    %2582 = vmatpush.msra.mxu0 0.0
    %2583 = vmatpush.msra.mxu0 0.0
    %2584 = vmatpush.msra.mxu0 0.0
    %2585 = vmatpush.msra.mxu0 0.0
    %2586 = vmatpush.msra.mxu0 0.0
    %2587 = vmatpush.msra.mxu0 0.0
    %v2588 = vand.u32 %v2179, 4294901760
    %2589 = vmatpush.msra.mxu0 %v2588
    %v2590 = vand.u32 %v2175, 4294901760
    %2591 = vmatpush.msra.mxu0 %v2590
    %v2592 = vand.u32 %v2171, 4294901760
    %2593 = vmatpush.msra.mxu0 %v2592
    %v2594 = vand.u32 %v2167, 4294901760
    %2595 = vmatpush.msra.mxu0 %v2594
    %v2596 = vand.u32 %v2163, 4294901760
    %2597 = vmatpush.msra.mxu0 %v2596
    %v2598 = vand.u32 %v2159, 4294901760
    %2599 = vmatpush.msra.mxu0 %v2598
    %v2600 = vand.u32 %v2155, 4294901760
    %2601 = vmatpush.msra.mxu0 %v2600
    %v2602 = vand.u32 %v2151, 4294901760
    %2603 = vmatpush.msra.mxu0 %v2602
    %v2604 = vand.u32 %v2147, 4294901760
    %2605 = vmatpush.msra.mxu0 %v2604
    %v2606 = vand.u32 %v2189, 4294901760
    %v2607 = vsub.f32 %v2189, %v2606
    %v2608 = vand.u32 %v2607, 4294901760
    %2609 = vmatmul.f32.gmra.mxu0 %v2608
    %v2610 = vpop.f32.mrf.mxu0
    %v2611 = vadd.f32 %v2579, %v2610
    %2612 = vdwg.mxu0
    %2613 = vmatpush.msra.mxu0 0.0
    %2614 = vmatpush.msra.mxu0 0.0
    %2615 = vmatpush.msra.mxu0 0.0
    %2616 = vmatpush.msra.mxu0 0.0
    %2617 = vmatpush.msra.mxu0 0.0
    %2618 = vmatpush.msra.mxu0 0.0
    %2619 = vmatpush.msra.mxu0 0.0
    %v2620 = vand.u32 %v2179, 4294901760
    %v2621 = vsub.f32 %v2179, %v2620
    %v2622 = vand.u32 %v2621, 4294901760
    %2623 = vmatpush.msra.mxu0 %v2622
    %v2624 = vand.u32 %v2175, 4294901760
    %v2625 = vsub.f32 %v2175, %v2624
    %v2626 = vand.u32 %v2625, 4294901760
    %2627 = vmatpush.msra.mxu0 %v2626
    %v2628 = vand.u32 %v2171, 4294901760
    %v2629 = vsub.f32 %v2171, %v2628
    %v2630 = vand.u32 %v2629, 4294901760
    %2631 = vmatpush.msra.mxu0 %v2630
    %v2632 = vand.u32 %v2167, 4294901760
    %v2633 = vsub.f32 %v2167, %v2632
    %v2634 = vand.u32 %v2633, 4294901760
    %2635 = vmatpush.msra.mxu0 %v2634
    %v2636 = vand.u32 %v2163, 4294901760
    %v2637 = vsub.f32 %v2163, %v2636
    %v2638 = vand.u32 %v2637, 4294901760
    %2639 = vmatpush.msra.mxu0 %v2638
    %v2640 = vand.u32 %v2159, 4294901760
    %v2641 = vsub.f32 %v2159, %v2640
    %v2642 = vand.u32 %v2641, 4294901760
    %2643 = vmatpush.msra.mxu0 %v2642
    %v2644 = vand.u32 %v2155, 4294901760
    %v2645 = vsub.f32 %v2155, %v2644
    %v2646 = vand.u32 %v2645, 4294901760
    %2647 = vmatpush.msra.mxu0 %v2646
    %v2648 = vand.u32 %v2151, 4294901760
    %v2649 = vsub.f32 %v2151, %v2648
    %v2650 = vand.u32 %v2649, 4294901760
    %2651 = vmatpush.msra.mxu0 %v2650
    %v2652 = vand.u32 %v2147, 4294901760
    %v2653 = vsub.f32 %v2147, %v2652
    %v2654 = vand.u32 %v2653, 4294901760
    %2655 = vmatpush.msra.mxu0 %v2654
    %v2656 = vand.u32 %v2189, 4294901760
    %2657 = vmatmul.f32.gmra.mxu0 %v2656
    %v2658 = vpop.f32.mrf.mxu0
    %v2659 = vadd.f32 %v2611, %v2658
    %2660 = vdwg.mxu0
    %2661 = vmatpush.msra.mxu0 0.0
    %2662 = vmatpush.msra.mxu0 0.0
    %2663 = vmatpush.msra.mxu0 0.0
    %2664 = vmatpush.msra.mxu0 0.0
    %2665 = vmatpush.msra.mxu0 0.0
    %2666 = vmatpush.msra.mxu0 0.0
    %2667 = vmatpush.msra.mxu0 0.0
    %v2668 = vand.u32 %v2179, 4294901760
    %2669 = vmatpush.msra.mxu0 %v2668
    %v2670 = vand.u32 %v2175, 4294901760
    %2671 = vmatpush.msra.mxu0 %v2670
    %v2672 = vand.u32 %v2171, 4294901760
    %2673 = vmatpush.msra.mxu0 %v2672
    %v2674 = vand.u32 %v2167, 4294901760
    %2675 = vmatpush.msra.mxu0 %v2674
    %v2676 = vand.u32 %v2163, 4294901760
    %2677 = vmatpush.msra.mxu0 %v2676
    %v2678 = vand.u32 %v2159, 4294901760
    %2679 = vmatpush.msra.mxu0 %v2678
    %v2680 = vand.u32 %v2155, 4294901760
    %2681 = vmatpush.msra.mxu0 %v2680
    %v2682 = vand.u32 %v2151, 4294901760
    %2683 = vmatpush.msra.mxu0 %v2682
    %v2684 = vand.u32 %v2147, 4294901760
    %2685 = vmatpush.msra.mxu0 %v2684
    %v2686 = vand.u32 %v2189, 4294901760
    %2687 = vmatmul.f32.gmra.mxu0 %v2686
    %v2688 = vpop.f32.mrf.mxu0
    %v2689 = vadd.f32 %v2659, %v2688
    %2690 = vdwg.mxu0
    %2691 = vmatpush.msra.mxu0 0.0
    %2692 = vmatpush.msra.mxu0 0.0
    %2693 = vmatpush.msra.mxu0 0.0
    %2694 = vmatpush.msra.mxu0 0.0
    %2695 = vmatpush.msra.mxu0 0.0
    %2696 = vmatpush.msra.mxu0 0.0
    %2697 = vmatpush.msra.mxu0 0.0
    %v2698 = vand.u32 %v2180, 4294901760
    %2699 = vmatpush.msra.mxu0 %v2698
    %v2700 = vand.u32 %v2176, 4294901760
    %2701 = vmatpush.msra.mxu0 %v2700
    %v2702 = vand.u32 %v2172, 4294901760
    %2703 = vmatpush.msra.mxu0 %v2702
    %v2704 = vand.u32 %v2168, 4294901760
    %2705 = vmatpush.msra.mxu0 %v2704
    %v2706 = vand.u32 %v2164, 4294901760
    %2707 = vmatpush.msra.mxu0 %v2706
    %v2708 = vand.u32 %v2160, 4294901760
    %2709 = vmatpush.msra.mxu0 %v2708
    %v2710 = vand.u32 %v2156, 4294901760
    %2711 = vmatpush.msra.mxu0 %v2710
    %v2712 = vand.u32 %v2152, 4294901760
    %2713 = vmatpush.msra.mxu0 %v2712
    %v2714 = vand.u32 %v2148, 4294901760
    %2715 = vmatpush.msra.mxu0 %v2714
    %v2716 = vand.u32 %v2189, 4294901760
    %v2717 = vsub.f32 %v2189, %v2716
    %v2718 = vand.u32 %v2717, 4294901760
    %v2719 = vsub.f32 %v2717, %v2718
    %v2720 = vand.u32 %v2719, 4294901760
    %2721 = vmatmul.f32.gmra.mxu0 %v2720
    %v2722 = vpop.f32.mrf.mxu0
    %v2723 = vadd.f32 %v2186, %v2722
    %2724 = vdwg.mxu0
    %2725 = vmatpush.msra.mxu0 0.0
    %2726 = vmatpush.msra.mxu0 0.0
    %2727 = vmatpush.msra.mxu0 0.0
    %2728 = vmatpush.msra.mxu0 0.0
    %2729 = vmatpush.msra.mxu0 0.0
    %2730 = vmatpush.msra.mxu0 0.0
    %2731 = vmatpush.msra.mxu0 0.0
    %v2732 = vand.u32 %v2180, 4294901760
    %v2733 = vsub.f32 %v2180, %v2732
    %v2734 = vand.u32 %v2733, 4294901760
    %v2735 = vsub.f32 %v2733, %v2734
    %v2736 = vand.u32 %v2735, 4294901760
    %2737 = vmatpush.msra.mxu0 %v2736
    %v2738 = vand.u32 %v2176, 4294901760
    %v2739 = vsub.f32 %v2176, %v2738
    %v2740 = vand.u32 %v2739, 4294901760
    %v2741 = vsub.f32 %v2739, %v2740
    %v2742 = vand.u32 %v2741, 4294901760
    %2743 = vmatpush.msra.mxu0 %v2742
    %v2744 = vand.u32 %v2172, 4294901760
    %v2745 = vsub.f32 %v2172, %v2744
    %v2746 = vand.u32 %v2745, 4294901760
    %v2747 = vsub.f32 %v2745, %v2746
    %v2748 = vand.u32 %v2747, 4294901760
    %2749 = vmatpush.msra.mxu0 %v2748
    %v2750 = vand.u32 %v2168, 4294901760
    %v2751 = vsub.f32 %v2168, %v2750
    %v2752 = vand.u32 %v2751, 4294901760
    %v2753 = vsub.f32 %v2751, %v2752
    %v2754 = vand.u32 %v2753, 4294901760
    %2755 = vmatpush.msra.mxu0 %v2754
    %v2756 = vand.u32 %v2164, 4294901760
    %v2757 = vsub.f32 %v2164, %v2756
    %v2758 = vand.u32 %v2757, 4294901760
    %v2759 = vsub.f32 %v2757, %v2758
    %v2760 = vand.u32 %v2759, 4294901760
    %2761 = vmatpush.msra.mxu0 %v2760
    %v2762 = vand.u32 %v2160, 4294901760
    %v2763 = vsub.f32 %v2160, %v2762
    %v2764 = vand.u32 %v2763, 4294901760
    %v2765 = vsub.f32 %v2763, %v2764
    %v2766 = vand.u32 %v2765, 4294901760
    %2767 = vmatpush.msra.mxu0 %v2766
    %v2768 = vand.u32 %v2156, 4294901760
    %v2769 = vsub.f32 %v2156, %v2768
    %v2770 = vand.u32 %v2769, 4294901760
    %v2771 = vsub.f32 %v2769, %v2770
    %v2772 = vand.u32 %v2771, 4294901760
    %2773 = vmatpush.msra.mxu0 %v2772
    %v2774 = vand.u32 %v2152, 4294901760
    %v2775 = vsub.f32 %v2152, %v2774
    %v2776 = vand.u32 %v2775, 4294901760
    %v2777 = vsub.f32 %v2775, %v2776
    %v2778 = vand.u32 %v2777, 4294901760
    %2779 = vmatpush.msra.mxu0 %v2778
    %v2780 = vand.u32 %v2148, 4294901760
    %v2781 = vsub.f32 %v2148, %v2780
    %v2782 = vand.u32 %v2781, 4294901760
    %v2783 = vsub.f32 %v2781, %v2782
    %v2784 = vand.u32 %v2783, 4294901760
    %2785 = vmatpush.msra.mxu0 %v2784
    %v2786 = vand.u32 %v2189, 4294901760
    %2787 = vmatmul.f32.gmra.mxu0 %v2786
    %v2788 = vpop.f32.mrf.mxu0
    %v2789 = vadd.f32 %v2723, %v2788
    %2790 = vdwg.mxu0
    %2791 = vmatpush.msra.mxu0 0.0
    %2792 = vmatpush.msra.mxu0 0.0
    %2793 = vmatpush.msra.mxu0 0.0
    %2794 = vmatpush.msra.mxu0 0.0
    %2795 = vmatpush.msra.mxu0 0.0
    %2796 = vmatpush.msra.mxu0 0.0
    %2797 = vmatpush.msra.mxu0 0.0
    %v2798 = vand.u32 %v2180, 4294901760
    %v2799 = vsub.f32 %v2180, %v2798
    %2800 = vmatpush.msra.mxu0 %v2799
    %v2801 = vand.u32 %v2176, 4294901760
    %v2802 = vsub.f32 %v2176, %v2801
    %2803 = vmatpush.msra.mxu0 %v2802
    %v2804 = vand.u32 %v2172, 4294901760
    %v2805 = vsub.f32 %v2172, %v2804
    %2806 = vmatpush.msra.mxu0 %v2805
    %v2807 = vand.u32 %v2168, 4294901760
    %v2808 = vsub.f32 %v2168, %v2807
    %2809 = vmatpush.msra.mxu0 %v2808
    %v2810 = vand.u32 %v2164, 4294901760
    %v2811 = vsub.f32 %v2164, %v2810
    %2812 = vmatpush.msra.mxu0 %v2811
    %v2813 = vand.u32 %v2160, 4294901760
    %v2814 = vsub.f32 %v2160, %v2813
    %2815 = vmatpush.msra.mxu0 %v2814
    %v2816 = vand.u32 %v2156, 4294901760
    %v2817 = vsub.f32 %v2156, %v2816
    %2818 = vmatpush.msra.mxu0 %v2817
    %v2819 = vand.u32 %v2152, 4294901760
    %v2820 = vsub.f32 %v2152, %v2819
    %2821 = vmatpush.msra.mxu0 %v2820
    %v2822 = vand.u32 %v2148, 4294901760
    %v2823 = vsub.f32 %v2148, %v2822
    %2824 = vmatpush.msra.mxu0 %v2823
    %v2825 = vand.u32 %v2189, 4294901760
    %v2826 = vsub.f32 %v2189, %v2825
    %2827 = vmatmul.f32.gmra.mxu0 %v2826
    %v2828 = vpop.f32.mrf.mxu0
    %v2829 = vadd.f32 %v2789, %v2828
    %2830 = vdwg.mxu0
    %2831 = vmatpush.msra.mxu0 0.0
    %2832 = vmatpush.msra.mxu0 0.0
    %2833 = vmatpush.msra.mxu0 0.0
    %2834 = vmatpush.msra.mxu0 0.0
    %2835 = vmatpush.msra.mxu0 0.0
    %2836 = vmatpush.msra.mxu0 0.0
    %2837 = vmatpush.msra.mxu0 0.0
    %v2838 = vand.u32 %v2180, 4294901760
    %2839 = vmatpush.msra.mxu0 %v2838
    %v2840 = vand.u32 %v2176, 4294901760
    %2841 = vmatpush.msra.mxu0 %v2840
    %v2842 = vand.u32 %v2172, 4294901760
    %2843 = vmatpush.msra.mxu0 %v2842
    %v2844 = vand.u32 %v2168, 4294901760
    %2845 = vmatpush.msra.mxu0 %v2844
    %v2846 = vand.u32 %v2164, 4294901760
    %2847 = vmatpush.msra.mxu0 %v2846
    %v2848 = vand.u32 %v2160, 4294901760
    %2849 = vmatpush.msra.mxu0 %v2848
    %v2850 = vand.u32 %v2156, 4294901760
    %2851 = vmatpush.msra.mxu0 %v2850
    %v2852 = vand.u32 %v2152, 4294901760
    %2853 = vmatpush.msra.mxu0 %v2852
    %v2854 = vand.u32 %v2148, 4294901760
    %2855 = vmatpush.msra.mxu0 %v2854
    %v2856 = vand.u32 %v2189, 4294901760
    %v2857 = vsub.f32 %v2189, %v2856
    %v2858 = vand.u32 %v2857, 4294901760
    %2859 = vmatmul.f32.gmra.mxu0 %v2858
    %v2860 = vpop.f32.mrf.mxu0
    %v2861 = vadd.f32 %v2829, %v2860
    %2862 = vdwg.mxu0
    %2863 = vmatpush.msra.mxu0 0.0
    %2864 = vmatpush.msra.mxu0 0.0
    %2865 = vmatpush.msra.mxu0 0.0
    %2866 = vmatpush.msra.mxu0 0.0
    %2867 = vmatpush.msra.mxu0 0.0
    %2868 = vmatpush.msra.mxu0 0.0
    %2869 = vmatpush.msra.mxu0 0.0
    %v2870 = vand.u32 %v2180, 4294901760
    %v2871 = vsub.f32 %v2180, %v2870
    %v2872 = vand.u32 %v2871, 4294901760
    %2873 = vmatpush.msra.mxu0 %v2872
    %v2874 = vand.u32 %v2176, 4294901760
    %v2875 = vsub.f32 %v2176, %v2874
    %v2876 = vand.u32 %v2875, 4294901760
    %2877 = vmatpush.msra.mxu0 %v2876
    %v2878 = vand.u32 %v2172, 4294901760
    %v2879 = vsub.f32 %v2172, %v2878
    %v2880 = vand.u32 %v2879, 4294901760
    %2881 = vmatpush.msra.mxu0 %v2880
    %v2882 = vand.u32 %v2168, 4294901760
    %v2883 = vsub.f32 %v2168, %v2882
    %v2884 = vand.u32 %v2883, 4294901760
    %2885 = vmatpush.msra.mxu0 %v2884
    %v2886 = vand.u32 %v2164, 4294901760
    %v2887 = vsub.f32 %v2164, %v2886
    %v2888 = vand.u32 %v2887, 4294901760
    %2889 = vmatpush.msra.mxu0 %v2888
    %v2890 = vand.u32 %v2160, 4294901760
    %v2891 = vsub.f32 %v2160, %v2890
    %v2892 = vand.u32 %v2891, 4294901760
    %2893 = vmatpush.msra.mxu0 %v2892
    %v2894 = vand.u32 %v2156, 4294901760
    %v2895 = vsub.f32 %v2156, %v2894
    %v2896 = vand.u32 %v2895, 4294901760
    %2897 = vmatpush.msra.mxu0 %v2896
    %v2898 = vand.u32 %v2152, 4294901760
    %v2899 = vsub.f32 %v2152, %v2898
    %v2900 = vand.u32 %v2899, 4294901760
    %2901 = vmatpush.msra.mxu0 %v2900
    %v2902 = vand.u32 %v2148, 4294901760
    %v2903 = vsub.f32 %v2148, %v2902
    %v2904 = vand.u32 %v2903, 4294901760
    %2905 = vmatpush.msra.mxu0 %v2904
    %v2906 = vand.u32 %v2189, 4294901760
    %2907 = vmatmul.f32.gmra.mxu0 %v2906
    %v2908 = vpop.f32.mrf.mxu0
    %v2909 = vadd.f32 %v2861, %v2908
    %2910 = vdwg.mxu0
    %2911 = vmatpush.msra.mxu0 0.0
    %2912 = vmatpush.msra.mxu0 0.0
    %2913 = vmatpush.msra.mxu0 0.0
    %2914 = vmatpush.msra.mxu0 0.0
    %2915 = vmatpush.msra.mxu0 0.0
    %2916 = vmatpush.msra.mxu0 0.0
    %2917 = vmatpush.msra.mxu0 0.0
    %v2918 = vand.u32 %v2180, 4294901760
    %2919 = vmatpush.msra.mxu0 %v2918
    %v2920 = vand.u32 %v2176, 4294901760
    %2921 = vmatpush.msra.mxu0 %v2920
    %v2922 = vand.u32 %v2172, 4294901760
    %2923 = vmatpush.msra.mxu0 %v2922
    %v2924 = vand.u32 %v2168, 4294901760
    %2925 = vmatpush.msra.mxu0 %v2924
    %v2926 = vand.u32 %v2164, 4294901760
    %2927 = vmatpush.msra.mxu0 %v2926
    %v2928 = vand.u32 %v2160, 4294901760
    %2929 = vmatpush.msra.mxu0 %v2928
    %v2930 = vand.u32 %v2156, 4294901760
    %2931 = vmatpush.msra.mxu0 %v2930
    %v2932 = vand.u32 %v2152, 4294901760
    %2933 = vmatpush.msra.mxu0 %v2932
    %v2934 = vand.u32 %v2148, 4294901760
    %2935 = vmatpush.msra.mxu0 %v2934
    %v2936 = vand.u32 %v2189, 4294901760
    %2937 = vmatmul.f32.gmra.mxu0 %v2936
    %v2938 = vpop.f32.mrf.mxu0
    %v2939 = vadd.f32 %v2909, %v2938
    %2940 = vdwg.mxu0
    %2941 = vmatpush.msra.mxu0 0.0
    %2942 = vmatpush.msra.mxu0 0.0
    %2943 = vmatpush.msra.mxu0 0.0
    %2944 = vmatpush.msra.mxu0 0.0
    %2945 = vmatpush.msra.mxu0 0.0
    %2946 = vmatpush.msra.mxu0 0.0
    %2947 = vmatpush.msra.mxu0 0.0
    %v2948 = vand.u32 %v2181, 4294901760
    %2949 = vmatpush.msra.mxu0 %v2948
    %v2950 = vand.u32 %v2177, 4294901760
    %2951 = vmatpush.msra.mxu0 %v2950
    %v2952 = vand.u32 %v2173, 4294901760
    %2953 = vmatpush.msra.mxu0 %v2952
    %v2954 = vand.u32 %v2169, 4294901760
    %2955 = vmatpush.msra.mxu0 %v2954
    %v2956 = vand.u32 %v2165, 4294901760
    %2957 = vmatpush.msra.mxu0 %v2956
    %v2958 = vand.u32 %v2161, 4294901760
    %2959 = vmatpush.msra.mxu0 %v2958
    %v2960 = vand.u32 %v2157, 4294901760
    %2961 = vmatpush.msra.mxu0 %v2960
    %v2962 = vand.u32 %v2153, 4294901760
    %2963 = vmatpush.msra.mxu0 %v2962
    %v2964 = vand.u32 %v2149, 4294901760
    %2965 = vmatpush.msra.mxu0 %v2964
    %v2966 = vand.u32 %v2189, 4294901760
    %v2967 = vsub.f32 %v2189, %v2966
    %v2968 = vand.u32 %v2967, 4294901760
    %v2969 = vsub.f32 %v2967, %v2968
    %v2970 = vand.u32 %v2969, 4294901760
    %2971 = vmatmul.f32.gmra.mxu0 %v2970
    %v2972 = vpop.f32.mrf.mxu0
    %v2973 = vadd.f32 %v2186, %v2972
    %2974 = vdwg.mxu0
    %2975 = vmatpush.msra.mxu0 0.0
    %2976 = vmatpush.msra.mxu0 0.0
    %2977 = vmatpush.msra.mxu0 0.0
    %2978 = vmatpush.msra.mxu0 0.0
    %2979 = vmatpush.msra.mxu0 0.0
    %2980 = vmatpush.msra.mxu0 0.0
    %2981 = vmatpush.msra.mxu0 0.0
    %v2982 = vand.u32 %v2181, 4294901760
    %v2983 = vsub.f32 %v2181, %v2982
    %v2984 = vand.u32 %v2983, 4294901760
    %v2985 = vsub.f32 %v2983, %v2984
    %v2986 = vand.u32 %v2985, 4294901760
    %2987 = vmatpush.msra.mxu0 %v2986
    %v2988 = vand.u32 %v2177, 4294901760
    %v2989 = vsub.f32 %v2177, %v2988
    %v2990 = vand.u32 %v2989, 4294901760
    %v2991 = vsub.f32 %v2989, %v2990
    %v2992 = vand.u32 %v2991, 4294901760
    %2993 = vmatpush.msra.mxu0 %v2992
    %v2994 = vand.u32 %v2173, 4294901760
    %v2995 = vsub.f32 %v2173, %v2994
    %v2996 = vand.u32 %v2995, 4294901760
    %v2997 = vsub.f32 %v2995, %v2996
    %v2998 = vand.u32 %v2997, 4294901760
    %2999 = vmatpush.msra.mxu0 %v2998
    %v3000 = vand.u32 %v2169, 4294901760
    %v3001 = vsub.f32 %v2169, %v3000
    %v3002 = vand.u32 %v3001, 4294901760
    %v3003 = vsub.f32 %v3001, %v3002
    %v3004 = vand.u32 %v3003, 4294901760
    %3005 = vmatpush.msra.mxu0 %v3004
    %v3006 = vand.u32 %v2165, 4294901760
    %v3007 = vsub.f32 %v2165, %v3006
    %v3008 = vand.u32 %v3007, 4294901760
    %v3009 = vsub.f32 %v3007, %v3008
    %v3010 = vand.u32 %v3009, 4294901760
    %3011 = vmatpush.msra.mxu0 %v3010
    %v3012 = vand.u32 %v2161, 4294901760
    %v3013 = vsub.f32 %v2161, %v3012
    %v3014 = vand.u32 %v3013, 4294901760
    %v3015 = vsub.f32 %v3013, %v3014
    %v3016 = vand.u32 %v3015, 4294901760
    %3017 = vmatpush.msra.mxu0 %v3016
    %v3018 = vand.u32 %v2157, 4294901760
    %v3019 = vsub.f32 %v2157, %v3018
    %v3020 = vand.u32 %v3019, 4294901760
    %v3021 = vsub.f32 %v3019, %v3020
    %v3022 = vand.u32 %v3021, 4294901760
    %3023 = vmatpush.msra.mxu0 %v3022
    %v3024 = vand.u32 %v2153, 4294901760
    %v3025 = vsub.f32 %v2153, %v3024
    %v3026 = vand.u32 %v3025, 4294901760
    %v3027 = vsub.f32 %v3025, %v3026
    %v3028 = vand.u32 %v3027, 4294901760
    %3029 = vmatpush.msra.mxu0 %v3028
    %v3030 = vand.u32 %v2149, 4294901760
    %v3031 = vsub.f32 %v2149, %v3030
    %v3032 = vand.u32 %v3031, 4294901760
    %v3033 = vsub.f32 %v3031, %v3032
    %v3034 = vand.u32 %v3033, 4294901760
    %3035 = vmatpush.msra.mxu0 %v3034
    %v3036 = vand.u32 %v2189, 4294901760
    %3037 = vmatmul.f32.gmra.mxu0 %v3036
    %v3038 = vpop.f32.mrf.mxu0
    %v3039 = vadd.f32 %v2973, %v3038
    %3040 = vdwg.mxu0
    %3041 = vmatpush.msra.mxu0 0.0
    %3042 = vmatpush.msra.mxu0 0.0
    %3043 = vmatpush.msra.mxu0 0.0
    %3044 = vmatpush.msra.mxu0 0.0
    %3045 = vmatpush.msra.mxu0 0.0
    %3046 = vmatpush.msra.mxu0 0.0
    %3047 = vmatpush.msra.mxu0 0.0
    %v3048 = vand.u32 %v2181, 4294901760
    %v3049 = vsub.f32 %v2181, %v3048
    %3050 = vmatpush.msra.mxu0 %v3049
    %v3051 = vand.u32 %v2177, 4294901760
    %v3052 = vsub.f32 %v2177, %v3051
    %3053 = vmatpush.msra.mxu0 %v3052
    %v3054 = vand.u32 %v2173, 4294901760
    %v3055 = vsub.f32 %v2173, %v3054
    %3056 = vmatpush.msra.mxu0 %v3055
    %v3057 = vand.u32 %v2169, 4294901760
    %v3058 = vsub.f32 %v2169, %v3057
    %3059 = vmatpush.msra.mxu0 %v3058
    %v3060 = vand.u32 %v2165, 4294901760
    %v3061 = vsub.f32 %v2165, %v3060
    %3062 = vmatpush.msra.mxu0 %v3061
    %v3063 = vand.u32 %v2161, 4294901760
    %v3064 = vsub.f32 %v2161, %v3063
    %3065 = vmatpush.msra.mxu0 %v3064
    %v3066 = vand.u32 %v2157, 4294901760
    %v3067 = vsub.f32 %v2157, %v3066
    %3068 = vmatpush.msra.mxu0 %v3067
    %v3069 = vand.u32 %v2153, 4294901760
    %v3070 = vsub.f32 %v2153, %v3069
    %3071 = vmatpush.msra.mxu0 %v3070
    %v3072 = vand.u32 %v2149, 4294901760
    %v3073 = vsub.f32 %v2149, %v3072
    %3074 = vmatpush.msra.mxu0 %v3073
    %v3075 = vand.u32 %v2189, 4294901760
    %v3076 = vsub.f32 %v2189, %v3075
    %3077 = vmatmul.f32.gmra.mxu0 %v3076
    %v3078 = vpop.f32.mrf.mxu0
    %v3079 = vadd.f32 %v3039, %v3078
    %3080 = vdwg.mxu0
    %3081 = vmatpush.msra.mxu0 0.0
    %3082 = vmatpush.msra.mxu0 0.0
    %3083 = vmatpush.msra.mxu0 0.0
    %3084 = vmatpush.msra.mxu0 0.0
    %3085 = vmatpush.msra.mxu0 0.0
    %3086 = vmatpush.msra.mxu0 0.0
    %3087 = vmatpush.msra.mxu0 0.0
    %v3088 = vand.u32 %v2181, 4294901760
    %3089 = vmatpush.msra.mxu0 %v3088
    %v3090 = vand.u32 %v2177, 4294901760
    %3091 = vmatpush.msra.mxu0 %v3090
    %v3092 = vand.u32 %v2173, 4294901760
    %3093 = vmatpush.msra.mxu0 %v3092
    %v3094 = vand.u32 %v2169, 4294901760
    %3095 = vmatpush.msra.mxu0 %v3094
    %v3096 = vand.u32 %v2165, 4294901760
    %3097 = vmatpush.msra.mxu0 %v3096
    %v3098 = vand.u32 %v2161, 4294901760
    %3099 = vmatpush.msra.mxu0 %v3098
    %v3100 = vand.u32 %v2157, 4294901760
    %3101 = vmatpush.msra.mxu0 %v3100
    %v3102 = vand.u32 %v2153, 4294901760
    %3103 = vmatpush.msra.mxu0 %v3102
    %v3104 = vand.u32 %v2149, 4294901760
    %3105 = vmatpush.msra.mxu0 %v3104
    %v3106 = vand.u32 %v2189, 4294901760
    %v3107 = vsub.f32 %v2189, %v3106
    %v3108 = vand.u32 %v3107, 4294901760
    %3109 = vmatmul.f32.gmra.mxu0 %v3108
    %v3110 = vpop.f32.mrf.mxu0
    %v3111 = vadd.f32 %v3079, %v3110
    %3112 = vdwg.mxu0
    %3113 = vmatpush.msra.mxu0 0.0
    %3114 = vmatpush.msra.mxu0 0.0
    %3115 = vmatpush.msra.mxu0 0.0
    %3116 = vmatpush.msra.mxu0 0.0
    %3117 = vmatpush.msra.mxu0 0.0
    %3118 = vmatpush.msra.mxu0 0.0
    %3119 = vmatpush.msra.mxu0 0.0
    %v3120 = vand.u32 %v2181, 4294901760
    %v3121 = vsub.f32 %v2181, %v3120
    %v3122 = vand.u32 %v3121, 4294901760
    %3123 = vmatpush.msra.mxu0 %v3122
    %v3124 = vand.u32 %v2177, 4294901760
    %v3125 = vsub.f32 %v2177, %v3124
    %v3126 = vand.u32 %v3125, 4294901760
    %3127 = vmatpush.msra.mxu0 %v3126
    %v3128 = vand.u32 %v2173, 4294901760
    %v3129 = vsub.f32 %v2173, %v3128
    %v3130 = vand.u32 %v3129, 4294901760
    %3131 = vmatpush.msra.mxu0 %v3130
    %v3132 = vand.u32 %v2169, 4294901760
    %v3133 = vsub.f32 %v2169, %v3132
    %v3134 = vand.u32 %v3133, 4294901760
    %3135 = vmatpush.msra.mxu0 %v3134
    %v3136 = vand.u32 %v2165, 4294901760
    %v3137 = vsub.f32 %v2165, %v3136
    %v3138 = vand.u32 %v3137, 4294901760
    %3139 = vmatpush.msra.mxu0 %v3138
    %v3140 = vand.u32 %v2161, 4294901760
    %v3141 = vsub.f32 %v2161, %v3140
    %v3142 = vand.u32 %v3141, 4294901760
    %3143 = vmatpush.msra.mxu0 %v3142
    %v3144 = vand.u32 %v2157, 4294901760
    %v3145 = vsub.f32 %v2157, %v3144
    %v3146 = vand.u32 %v3145, 4294901760
    %3147 = vmatpush.msra.mxu0 %v3146
    %v3148 = vand.u32 %v2153, 4294901760
    %v3149 = vsub.f32 %v2153, %v3148
    %v3150 = vand.u32 %v3149, 4294901760
    %3151 = vmatpush.msra.mxu0 %v3150
    %v3152 = vand.u32 %v2149, 4294901760
    %v3153 = vsub.f32 %v2149, %v3152
    %v3154 = vand.u32 %v3153, 4294901760
    %3155 = vmatpush.msra.mxu0 %v3154
    %v3156 = vand.u32 %v2189, 4294901760
    %3157 = vmatmul.f32.gmra.mxu0 %v3156
    %v3158 = vpop.f32.mrf.mxu0
    %v3159 = vadd.f32 %v3111, %v3158
    %3160 = vdwg.mxu0
    %3161 = vmatpush.msra.mxu0 0.0
    %3162 = vmatpush.msra.mxu0 0.0
    %3163 = vmatpush.msra.mxu0 0.0
    %3164 = vmatpush.msra.mxu0 0.0
    %3165 = vmatpush.msra.mxu0 0.0
    %3166 = vmatpush.msra.mxu0 0.0
    %3167 = vmatpush.msra.mxu0 0.0
    %v3168 = vand.u32 %v2181, 4294901760
    %3169 = vmatpush.msra.mxu0 %v3168
    %v3170 = vand.u32 %v2177, 4294901760
    %3171 = vmatpush.msra.mxu0 %v3170
    %v3172 = vand.u32 %v2173, 4294901760
    %3173 = vmatpush.msra.mxu0 %v3172
    %v3174 = vand.u32 %v2169, 4294901760
    %3175 = vmatpush.msra.mxu0 %v3174
    %v3176 = vand.u32 %v2165, 4294901760
    %3177 = vmatpush.msra.mxu0 %v3176
    %v3178 = vand.u32 %v2161, 4294901760
    %3179 = vmatpush.msra.mxu0 %v3178
    %v3180 = vand.u32 %v2157, 4294901760
    %3181 = vmatpush.msra.mxu0 %v3180
    %v3182 = vand.u32 %v2153, 4294901760
    %3183 = vmatpush.msra.mxu0 %v3182
    %v3184 = vand.u32 %v2149, 4294901760
    %3185 = vmatpush.msra.mxu0 %v3184
    %v3186 = vand.u32 %v2189, 4294901760
    %3187 = vmatmul.f32.gmra.mxu0 %v3186
    %v3188 = vpop.f32.mrf.mxu0
    %v3189 = vadd.f32 %v3159, %v3188
    %3190 = vdwg.mxu0
    %v3191 = vmax.f32 %v2439, 0.0
    %v3192 = vmax.f32 %v2689, 0.0
    %v3193 = vmax.f32 %v2939, 0.0
    %v3194 = vmax.f32 %v3189, 0.0
    %3195 = vst [vmem:[#allocation2 + $0x8] sm:$0xff] %v3191
    %3196 = vst [vmem:[#allocation2 + $0x10] sm:$0xff] %v3192
    %3197 = vst [vmem:[#allocation2 + $0x18] sm:$0xff] %v3193
    %3198 = vst [vmem:[#allocation2 + $0x20] sm:$0xff] %v3194
    %v3199 = vld [vmem:[#allocation2 + $0x8] sm:$0xff]
    %v3200 = vld [vmem:[#allocation2 + $0x10] sm:$0xff]
    %v3201 = vld [vmem:[#allocation2 + $0x18] sm:$0xff]
    %v3202 = vld [vmem:[#allocation2 + $0x20] sm:$0xff]
    %v3203 = vld [vmem:[#allocation2 + $0x8] sm:$0xff]
    %v3204 = vld [vmem:[#allocation2 + $0x10] sm:$0xff]
    %v3205 = vld [vmem:[#allocation2 + $0x18] sm:$0xff]
    %v3206 = vld [vmem:[#allocation2 + $0x20] sm:$0xff]
    %v3207 = vld [vmem:[#allocation2 + $0x28] sm:$0xff]
    %3213 = vrot.lane.b32.xlu0 %v3203, 127
    %v3214 = vpop.permute.xlu0 %3213
    %3215 = vrot.lane.b32.xlu0 %v3204, 127
    %v3216 = vpop.permute.xlu0 %3215
    %3217 = vrot.lane.b32.xlu0 %v3205, 127
    %v3218 = vpop.permute.xlu0 %3217
    %3219 = vrot.lane.b32.xlu0 %v3206, 127
    %v3220 = vpop.permute.xlu0 %3219
    %3221 = vrot.lane.b32.xlu0 %v3207, 127
    %v3222 = vpop.permute.xlu0 %3221
    %v3223 = vsel %vm291, %v3214, %v3216
    %v3224 = vsel %vm291, %v3216, %v3218
    %v3225 = vsel %vm291, %v3218, %v3220
    %v3226 = vsel %vm291, %v3220, %v3222
    %v3231 = vmax.f32 %v3199, %v3223
    %v3232 = vmax.f32 %v3200, %v3224
    %v3233 = vmax.f32 %v3201, %v3225
    %v3234 = vmax.f32 %v3202, %v3226
    %3235 = vrot.lane.b32.xlu0 %v3203, 112
    %v3236 = vpop.permute.xlu0 %3235
    %3237 = vrot.lane.b32.xlu0 %v3204, 112
    %v3238 = vpop.permute.xlu0 %3237
    %3239 = vrot.lane.b32.xlu0 %v3205, 112
    %v3240 = vpop.permute.xlu0 %3239
    %3241 = vrot.lane.b32.xlu0 %v3206, 112
    %v3242 = vpop.permute.xlu0 %3241
    %3243 = vrot.lane.b32.xlu0 %v3207, 112
    %v3244 = vpop.permute.xlu0 %3243
    %v3245 = vsel %vm167, %v3236, %v3238
    %v3246 = vsel %vm167, %v3238, %v3240
    %v3247 = vsel %vm167, %v3240, %v3242
    %v3248 = vsel %vm167, %v3242, %v3244
    %v3253 = vmax.f32 %v3231, %v3245
    %v3254 = vmax.f32 %v3232, %v3246
    %v3255 = vmax.f32 %v3233, %v3247
    %v3256 = vmax.f32 %v3234, %v3248
    %3257 = vrot.lane.b32.xlu0 %v3203, 111
    %v3258 = vpop.permute.xlu0 %3257
    %3259 = vrot.lane.b32.xlu0 %v3204, 111
    %v3260 = vpop.permute.xlu0 %3259
    %3261 = vrot.lane.b32.xlu0 %v3205, 111
    %v3262 = vpop.permute.xlu0 %3261
    %3263 = vrot.lane.b32.xlu0 %v3206, 111
    %v3264 = vpop.permute.xlu0 %3263
    %3265 = vrot.lane.b32.xlu0 %v3207, 111
    %v3266 = vpop.permute.xlu0 %3265
    %v3267 = vsel %vm105, %v3258, %v3260
    %v3268 = vsel %vm105, %v3260, %v3262
    %v3269 = vsel %vm105, %v3262, %v3264
    %v3270 = vsel %vm105, %v3264, %v3266
    %v3275 = vmax.f32 %v3253, %v3267
    %v3276 = vmax.f32 %v3254, %v3268
    %v3277 = vmax.f32 %v3255, %v3269
    %v3278 = vmax.f32 %v3256, %v3270
    %v3279 = vld [vmem:[#allocation9] sm:$0xff]
    %v3280 = vld [vmem:[#allocation9 + $0x8] sm:$0xff]
    %v3281 = vld [vmem:[#allocation9 + $0x10] sm:$0xff]
    %v3282 = vld [vmem:[#allocation9 + $0x18] sm:$0xff]
    %v3283 = vld [vmem:[#allocation9 + $0x20] sm:$0xff]
    %v3284 = vld [vmem:[#allocation9 + $0x28] sm:$0xff]
    %v3285 = vld [vmem:[#allocation9 + $0x30] sm:$0xff]
    %v3286 = vld [vmem:[#allocation9 + $0x38] sm:$0xff]
    %v3287 = vld [vmem:[#allocation9 + $0x40] sm:$0xff]
    %v3288 = vld [vmem:[#allocation9 + $0x48] sm:$0xff]
    %v3289 = vld [vmem:[#allocation9 + $0x50] sm:$0xff]
    %v3290 = vld [vmem:[#allocation9 + $0x58] sm:$0xff]
    %v3291 = vld [vmem:[#allocation9 + $0x60] sm:$0xff]
    %v3292 = vld [vmem:[#allocation9 + $0x68] sm:$0xff]
    %v3293 = vld [vmem:[#allocation9 + $0x70] sm:$0xff]
    %v3294 = vld [vmem:[#allocation9 + $0x78] sm:$0xff]
    %v3295 = vld [vmem:[#allocation9 + $0x80] sm:$0xff]
    %v3296 = vld [vmem:[#allocation9 + $0x88] sm:$0xff]
    %v3297 = vld [vmem:[#allocation9 + $0x90] sm:$0xff]
    %v3298 = vld [vmem:[#allocation9 + $0x98] sm:$0xff]
    %v3299 = vld [vmem:[#allocation9 + $0xa0] sm:$0xff]
    %v3300 = vld [vmem:[#allocation9 + $0xa8] sm:$0xff]
    %v3301 = vld [vmem:[#allocation9 + $0xb0] sm:$0xff]
    %v3302 = vld [vmem:[#allocation9 + $0xb8] sm:$0xff]
    %v3303 = vld [vmem:[#allocation9 + $0xc0] sm:$0xff]
    %v3304 = vld [vmem:[#allocation9 + $0xc8] sm:$0xff]
    %v3305 = vld [vmem:[#allocation9 + $0xd0] sm:$0xff]
    %v3306 = vld [vmem:[#allocation9 + $0xd8] sm:$0xff]
    %v3307 = vld [vmem:[#allocation9 + $0xe0] sm:$0xff]
    %v3308 = vld [vmem:[#allocation9 + $0xe8] sm:$0xff]
    %v3309 = vld [vmem:[#allocation9 + $0xf0] sm:$0xff]
    %v3310 = vld [vmem:[#allocation9 + $0xf8] sm:$0xff]
    %v3311 = vld [vmem:[#allocation9 + $0x100] sm:$0xff]
    %v3312 = vld [vmem:[#allocation9 + $0x108] sm:$0xff]
    %v3313 = vld [vmem:[#allocation9 + $0x110] sm:$0xff]
    %v3314 = vld [vmem:[#allocation9 + $0x118] sm:$0xff]
    %v3315 = vld [vmem:[#allocation9 + $0x120] sm:$0xff]
    %v3316 = vld [vmem:[#allocation9 + $0x128] sm:$0xff]
    %v3317 = vld [vmem:[#allocation9 + $0x130] sm:$0xff]
    %v3318 = vld [vmem:[#allocation9 + $0x138] sm:$0xff]
    %v3319 = vld [vmem:[#allocation9 + $0x140] sm:$0xff]
    %v3320 = vld [vmem:[#allocation9 + $0x148] sm:$0xff]
    %v3321 = vld [vmem:[#allocation9 + $0x150] sm:$0xff]
    %v3322 = vld [vmem:[#allocation9 + $0x158] sm:$0xff]
    %v3323 = vld [vmem:[#allocation9 + $0x160] sm:$0xff]
    %v3324 = vld [vmem:[#allocation9 + $0x168] sm:$0xff]
    %v3325 = vld [vmem:[#allocation9 + $0x170] sm:$0xff]
    %v3326 = vld [vmem:[#allocation9 + $0x178] sm:$0xff]
    %v3327 = vld [vmem:[#allocation9 + $0x180] sm:$0xff]
    %v3328 = vld [vmem:[#allocation9 + $0x188] sm:$0xff]
    %v3329 = vld [vmem:[#allocation9 + $0x190] sm:$0xff]
    %v3330 = vld [vmem:[#allocation9 + $0x198] sm:$0xff]
    %v3331 = vld [vmem:[#allocation9 + $0x1a0] sm:$0xff]
    %v3332 = vld [vmem:[#allocation9 + $0x1a8] sm:$0xff]
    %v3333 = vld [vmem:[#allocation9 + $0x1b0] sm:$0xff]
    %v3334 = vld [vmem:[#allocation9 + $0x1b8] sm:$0xff]
    %v3335 = vld [vmem:[#allocation9 + $0x1c0] sm:$0xff]
    %v3336 = vld [vmem:[#allocation9 + $0x1c8] sm:$0xff]
    %v3337 = vld [vmem:[#allocation9 + $0x1d0] sm:$0xff]
    %v3338 = vld [vmem:[#allocation9 + $0x1d8] sm:$0xff]
    %v3339 = vld [vmem:[#allocation9 + $0x1e0] sm:$0xff]
    %v3340 = vld [vmem:[#allocation9 + $0x1e8] sm:$0xff]
    %v3341 = vld [vmem:[#allocation9 + $0x1f0] sm:$0xff]
    %v3342 = vld [vmem:[#allocation9 + $0x1f8] sm:$0xff]
    %v3343 = vand.u32 %v3294, 4294901760
    %3344 = vmatpush.msra.mxu0 %v3343
    %v3345 = vand.u32 %v3293, 4294901760
    %3346 = vmatpush.msra.mxu0 %v3345
    %v3347 = vand.u32 %v3292, 4294901760
    %3348 = vmatpush.msra.mxu0 %v3347
    %v3349 = vand.u32 %v3291, 4294901760
    %3350 = vmatpush.msra.mxu0 %v3349
    %v3351 = vand.u32 %v3290, 4294901760
    %3352 = vmatpush.msra.mxu0 %v3351
    %v3353 = vand.u32 %v3289, 4294901760
    %3354 = vmatpush.msra.mxu0 %v3353
    %v3355 = vand.u32 %v3288, 4294901760
    %3356 = vmatpush.msra.mxu0 %v3355
    %v3357 = vand.u32 %v3287, 4294901760
    %3358 = vmatpush.msra.mxu0 %v3357
    %v3359 = vand.u32 %v3286, 4294901760
    %3360 = vmatpush.msra.mxu0 %v3359
    %v3361 = vand.u32 %v3285, 4294901760
    %3362 = vmatpush.msra.mxu0 %v3361
    %v3363 = vand.u32 %v3284, 4294901760
    %3364 = vmatpush.msra.mxu0 %v3363
    %v3365 = vand.u32 %v3283, 4294901760
    %3366 = vmatpush.msra.mxu0 %v3365
    %v3367 = vand.u32 %v3282, 4294901760
    %3368 = vmatpush.msra.mxu0 %v3367
    %v3369 = vand.u32 %v3281, 4294901760
    %3370 = vmatpush.msra.mxu0 %v3369
    %v3371 = vand.u32 %v3280, 4294901760
    %3372 = vmatpush.msra.mxu0 %v3371
    %v3373 = vand.u32 %v3279, 4294901760
    %3374 = vmatpush.msra.mxu0 %v3373
    %v3375 = vand.u32 %v3275, 4294901760
    %v3376 = vsub.f32 %v3275, %v3375
    %v3377 = vand.u32 %v3376, 4294901760
    %v3378 = vsub.f32 %v3376, %v3377
    %v3379 = vand.u32 %v3378, 4294901760
    %3380 = vmatmul.f32.gmra.mxu0 %v3379
    %v3381 = vpop.f32.mrf.mxu0
    %v3382 = vadd.f32 0.0, %v3381
    %3383 = vdwg.mxu0
    %v3384 = vand.u32 %v3294, 4294901760
    %v3385 = vsub.f32 %v3294, %v3384
    %v3386 = vand.u32 %v3385, 4294901760
    %v3387 = vsub.f32 %v3385, %v3386
    %v3388 = vand.u32 %v3387, 4294901760
    %3389 = vmatpush.msra.mxu0 %v3388
    %v3390 = vand.u32 %v3293, 4294901760
    %v3391 = vsub.f32 %v3293, %v3390
    %v3392 = vand.u32 %v3391, 4294901760
    %v3393 = vsub.f32 %v3391, %v3392
    %v3394 = vand.u32 %v3393, 4294901760
    %3395 = vmatpush.msra.mxu0 %v3394
    %v3396 = vand.u32 %v3292, 4294901760
    %v3397 = vsub.f32 %v3292, %v3396
    %v3398 = vand.u32 %v3397, 4294901760
    %v3399 = vsub.f32 %v3397, %v3398
    %v3400 = vand.u32 %v3399, 4294901760
    %3401 = vmatpush.msra.mxu0 %v3400
    %v3402 = vand.u32 %v3291, 4294901760
    %v3403 = vsub.f32 %v3291, %v3402
    %v3404 = vand.u32 %v3403, 4294901760
    %v3405 = vsub.f32 %v3403, %v3404
    %v3406 = vand.u32 %v3405, 4294901760
    %3407 = vmatpush.msra.mxu0 %v3406
    %v3408 = vand.u32 %v3290, 4294901760
    %v3409 = vsub.f32 %v3290, %v3408
    %v3410 = vand.u32 %v3409, 4294901760
    %v3411 = vsub.f32 %v3409, %v3410
    %v3412 = vand.u32 %v3411, 4294901760
    %3413 = vmatpush.msra.mxu0 %v3412
    %v3414 = vand.u32 %v3289, 4294901760
    %v3415 = vsub.f32 %v3289, %v3414
    %v3416 = vand.u32 %v3415, 4294901760
    %v3417 = vsub.f32 %v3415, %v3416
    %v3418 = vand.u32 %v3417, 4294901760
    %3419 = vmatpush.msra.mxu0 %v3418
    %v3420 = vand.u32 %v3288, 4294901760
    %v3421 = vsub.f32 %v3288, %v3420
    %v3422 = vand.u32 %v3421, 4294901760
    %v3423 = vsub.f32 %v3421, %v3422
    %v3424 = vand.u32 %v3423, 4294901760
    %3425 = vmatpush.msra.mxu0 %v3424
    %v3426 = vand.u32 %v3287, 4294901760
    %v3427 = vsub.f32 %v3287, %v3426
    %v3428 = vand.u32 %v3427, 4294901760
    %v3429 = vsub.f32 %v3427, %v3428
    %v3430 = vand.u32 %v3429, 4294901760
    %3431 = vmatpush.msra.mxu0 %v3430
    %v3432 = vand.u32 %v3286, 4294901760
    %v3433 = vsub.f32 %v3286, %v3432
    %v3434 = vand.u32 %v3433, 4294901760
    %v3435 = vsub.f32 %v3433, %v3434
    %v3436 = vand.u32 %v3435, 4294901760
    %3437 = vmatpush.msra.mxu0 %v3436
    %v3438 = vand.u32 %v3285, 4294901760
    %v3439 = vsub.f32 %v3285, %v3438
    %v3440 = vand.u32 %v3439, 4294901760
    %v3441 = vsub.f32 %v3439, %v3440
    %v3442 = vand.u32 %v3441, 4294901760
    %3443 = vmatpush.msra.mxu0 %v3442
    %v3444 = vand.u32 %v3284, 4294901760
    %v3445 = vsub.f32 %v3284, %v3444
    %v3446 = vand.u32 %v3445, 4294901760
    %v3447 = vsub.f32 %v3445, %v3446
    %v3448 = vand.u32 %v3447, 4294901760
    %3449 = vmatpush.msra.mxu0 %v3448
    %v3450 = vand.u32 %v3283, 4294901760
    %v3451 = vsub.f32 %v3283, %v3450
    %v3452 = vand.u32 %v3451, 4294901760
    %v3453 = vsub.f32 %v3451, %v3452
    %v3454 = vand.u32 %v3453, 4294901760
    %3455 = vmatpush.msra.mxu0 %v3454
    %v3456 = vand.u32 %v3282, 4294901760
    %v3457 = vsub.f32 %v3282, %v3456
    %v3458 = vand.u32 %v3457, 4294901760
    %v3459 = vsub.f32 %v3457, %v3458
    %v3460 = vand.u32 %v3459, 4294901760
    %3461 = vmatpush.msra.mxu0 %v3460
    %v3462 = vand.u32 %v3281, 4294901760
    %v3463 = vsub.f32 %v3281, %v3462
    %v3464 = vand.u32 %v3463, 4294901760
    %v3465 = vsub.f32 %v3463, %v3464
    %v3466 = vand.u32 %v3465, 4294901760
    %3467 = vmatpush.msra.mxu0 %v3466
    %v3468 = vand.u32 %v3280, 4294901760
    %v3469 = vsub.f32 %v3280, %v3468
    %v3470 = vand.u32 %v3469, 4294901760
    %v3471 = vsub.f32 %v3469, %v3470
    %v3472 = vand.u32 %v3471, 4294901760
    %3473 = vmatpush.msra.mxu0 %v3472
    %v3474 = vand.u32 %v3279, 4294901760
    %v3475 = vsub.f32 %v3279, %v3474
    %v3476 = vand.u32 %v3475, 4294901760
    %v3477 = vsub.f32 %v3475, %v3476
    %v3478 = vand.u32 %v3477, 4294901760
    %3479 = vmatpush.msra.mxu0 %v3478
    %v3480 = vand.u32 %v3275, 4294901760
    %3481 = vmatmul.f32.gmra.mxu0 %v3480
    %v3482 = vpop.f32.mrf.mxu0
    %v3483 = vadd.f32 %v3382, %v3482
    %3484 = vdwg.mxu0
    %v3485 = vand.u32 %v3294, 4294901760
    %v3486 = vsub.f32 %v3294, %v3485
    %3487 = vmatpush.msra.mxu0 %v3486
    %v3488 = vand.u32 %v3293, 4294901760
    %v3489 = vsub.f32 %v3293, %v3488
    %3490 = vmatpush.msra.mxu0 %v3489
    %v3491 = vand.u32 %v3292, 4294901760
    %v3492 = vsub.f32 %v3292, %v3491
    %3493 = vmatpush.msra.mxu0 %v3492
    %v3494 = vand.u32 %v3291, 4294901760
    %v3495 = vsub.f32 %v3291, %v3494
    %3496 = vmatpush.msra.mxu0 %v3495
    %v3497 = vand.u32 %v3290, 4294901760
    %v3498 = vsub.f32 %v3290, %v3497
    %3499 = vmatpush.msra.mxu0 %v3498
    %v3500 = vand.u32 %v3289, 4294901760
    %v3501 = vsub.f32 %v3289, %v3500
    %3502 = vmatpush.msra.mxu0 %v3501
    %v3503 = vand.u32 %v3288, 4294901760
    %v3504 = vsub.f32 %v3288, %v3503
    %3505 = vmatpush.msra.mxu0 %v3504
    %v3506 = vand.u32 %v3287, 4294901760
    %v3507 = vsub.f32 %v3287, %v3506
    %3508 = vmatpush.msra.mxu0 %v3507
    %v3509 = vand.u32 %v3286, 4294901760
    %v3510 = vsub.f32 %v3286, %v3509
    %3511 = vmatpush.msra.mxu0 %v3510
    %v3512 = vand.u32 %v3285, 4294901760
    %v3513 = vsub.f32 %v3285, %v3512
    %3514 = vmatpush.msra.mxu0 %v3513
    %v3515 = vand.u32 %v3284, 4294901760
    %v3516 = vsub.f32 %v3284, %v3515
    %3517 = vmatpush.msra.mxu0 %v3516
    %v3518 = vand.u32 %v3283, 4294901760
    %v3519 = vsub.f32 %v3283, %v3518
    %3520 = vmatpush.msra.mxu0 %v3519
    %v3521 = vand.u32 %v3282, 4294901760
    %v3522 = vsub.f32 %v3282, %v3521
    %3523 = vmatpush.msra.mxu0 %v3522
    %v3524 = vand.u32 %v3281, 4294901760
    %v3525 = vsub.f32 %v3281, %v3524
    %3526 = vmatpush.msra.mxu0 %v3525
    %v3527 = vand.u32 %v3280, 4294901760
    %v3528 = vsub.f32 %v3280, %v3527
    %3529 = vmatpush.msra.mxu0 %v3528
    %v3530 = vand.u32 %v3279, 4294901760
    %v3531 = vsub.f32 %v3279, %v3530
    %3532 = vmatpush.msra.mxu0 %v3531
    %v3533 = vand.u32 %v3275, 4294901760
    %v3534 = vsub.f32 %v3275, %v3533
    %3535 = vmatmul.f32.gmra.mxu0 %v3534
    %v3536 = vpop.f32.mrf.mxu0
    %v3537 = vadd.f32 %v3483, %v3536
    %3538 = vdwg.mxu0
    %v3539 = vand.u32 %v3294, 4294901760
    %3540 = vmatpush.msra.mxu0 %v3539
    %v3541 = vand.u32 %v3293, 4294901760
    %3542 = vmatpush.msra.mxu0 %v3541
    %v3543 = vand.u32 %v3292, 4294901760
    %3544 = vmatpush.msra.mxu0 %v3543
    %v3545 = vand.u32 %v3291, 4294901760
    %3546 = vmatpush.msra.mxu0 %v3545
    %v3547 = vand.u32 %v3290, 4294901760
    %3548 = vmatpush.msra.mxu0 %v3547
    %v3549 = vand.u32 %v3289, 4294901760
    %3550 = vmatpush.msra.mxu0 %v3549
    %v3551 = vand.u32 %v3288, 4294901760
    %3552 = vmatpush.msra.mxu0 %v3551
    %v3553 = vand.u32 %v3287, 4294901760
    %3554 = vmatpush.msra.mxu0 %v3553
    %v3555 = vand.u32 %v3286, 4294901760
    %3556 = vmatpush.msra.mxu0 %v3555
    %v3557 = vand.u32 %v3285, 4294901760
    %3558 = vmatpush.msra.mxu0 %v3557
    %v3559 = vand.u32 %v3284, 4294901760
    %3560 = vmatpush.msra.mxu0 %v3559
    %v3561 = vand.u32 %v3283, 4294901760
    %3562 = vmatpush.msra.mxu0 %v3561
    %v3563 = vand.u32 %v3282, 4294901760
    %3564 = vmatpush.msra.mxu0 %v3563
    %v3565 = vand.u32 %v3281, 4294901760
    %3566 = vmatpush.msra.mxu0 %v3565
    %v3567 = vand.u32 %v3280, 4294901760
    %3568 = vmatpush.msra.mxu0 %v3567
    %v3569 = vand.u32 %v3279, 4294901760
    %3570 = vmatpush.msra.mxu0 %v3569
    %v3571 = vand.u32 %v3275, 4294901760
    %v3572 = vsub.f32 %v3275, %v3571
    %v3573 = vand.u32 %v3572, 4294901760
    %3574 = vmatmul.f32.gmra.mxu0 %v3573
    %v3575 = vpop.f32.mrf.mxu0
    %v3576 = vadd.f32 %v3537, %v3575
    %3577 = vdwg.mxu0
    %v3578 = vand.u32 %v3294, 4294901760
    %v3579 = vsub.f32 %v3294, %v3578
    %v3580 = vand.u32 %v3579, 4294901760
    %3581 = vmatpush.msra.mxu0 %v3580
    %v3582 = vand.u32 %v3293, 4294901760
    %v3583 = vsub.f32 %v3293, %v3582
    %v3584 = vand.u32 %v3583, 4294901760
    %3585 = vmatpush.msra.mxu0 %v3584
    %v3586 = vand.u32 %v3292, 4294901760
    %v3587 = vsub.f32 %v3292, %v3586
    %v3588 = vand.u32 %v3587, 4294901760
    %3589 = vmatpush.msra.mxu0 %v3588
    %v3590 = vand.u32 %v3291, 4294901760
    %v3591 = vsub.f32 %v3291, %v3590
    %v3592 = vand.u32 %v3591, 4294901760
    %3593 = vmatpush.msra.mxu0 %v3592
    %v3594 = vand.u32 %v3290, 4294901760
    %v3595 = vsub.f32 %v3290, %v3594
    %v3596 = vand.u32 %v3595, 4294901760
    %3597 = vmatpush.msra.mxu0 %v3596
    %v3598 = vand.u32 %v3289, 4294901760
    %v3599 = vsub.f32 %v3289, %v3598
    %v3600 = vand.u32 %v3599, 4294901760
    %3601 = vmatpush.msra.mxu0 %v3600
    %v3602 = vand.u32 %v3288, 4294901760
    %v3603 = vsub.f32 %v3288, %v3602
    %v3604 = vand.u32 %v3603, 4294901760
    %3605 = vmatpush.msra.mxu0 %v3604
    %v3606 = vand.u32 %v3287, 4294901760
    %v3607 = vsub.f32 %v3287, %v3606
    %v3608 = vand.u32 %v3607, 4294901760
    %3609 = vmatpush.msra.mxu0 %v3608
    %v3610 = vand.u32 %v3286, 4294901760
    %v3611 = vsub.f32 %v3286, %v3610
    %v3612 = vand.u32 %v3611, 4294901760
    %3613 = vmatpush.msra.mxu0 %v3612
    %v3614 = vand.u32 %v3285, 4294901760
    %v3615 = vsub.f32 %v3285, %v3614
    %v3616 = vand.u32 %v3615, 4294901760
    %3617 = vmatpush.msra.mxu0 %v3616
    %v3618 = vand.u32 %v3284, 4294901760
    %v3619 = vsub.f32 %v3284, %v3618
    %v3620 = vand.u32 %v3619, 4294901760
    %3621 = vmatpush.msra.mxu0 %v3620
    %v3622 = vand.u32 %v3283, 4294901760
    %v3623 = vsub.f32 %v3283, %v3622
    %v3624 = vand.u32 %v3623, 4294901760
    %3625 = vmatpush.msra.mxu0 %v3624
    %v3626 = vand.u32 %v3282, 4294901760
    %v3627 = vsub.f32 %v3282, %v3626
    %v3628 = vand.u32 %v3627, 4294901760
    %3629 = vmatpush.msra.mxu0 %v3628
    %v3630 = vand.u32 %v3281, 4294901760
    %v3631 = vsub.f32 %v3281, %v3630
    %v3632 = vand.u32 %v3631, 4294901760
    %3633 = vmatpush.msra.mxu0 %v3632
    %v3634 = vand.u32 %v3280, 4294901760
    %v3635 = vsub.f32 %v3280, %v3634
    %v3636 = vand.u32 %v3635, 4294901760
    %3637 = vmatpush.msra.mxu0 %v3636
    %v3638 = vand.u32 %v3279, 4294901760
    %v3639 = vsub.f32 %v3279, %v3638
    %v3640 = vand.u32 %v3639, 4294901760
    %3641 = vmatpush.msra.mxu0 %v3640
    %v3642 = vand.u32 %v3275, 4294901760
    %3643 = vmatmul.f32.gmra.mxu0 %v3642
    %v3644 = vpop.f32.mrf.mxu0
    %v3645 = vadd.f32 %v3576, %v3644
    %3646 = vdwg.mxu0
    %v3647 = vand.u32 %v3294, 4294901760
    %3648 = vmatpush.msra.mxu0 %v3647
    %v3649 = vand.u32 %v3293, 4294901760
    %3650 = vmatpush.msra.mxu0 %v3649
    %v3651 = vand.u32 %v3292, 4294901760
    %3652 = vmatpush.msra.mxu0 %v3651
    %v3653 = vand.u32 %v3291, 4294901760
    %3654 = vmatpush.msra.mxu0 %v3653
    %v3655 = vand.u32 %v3290, 4294901760
    %3656 = vmatpush.msra.mxu0 %v3655
    %v3657 = vand.u32 %v3289, 4294901760
    %3658 = vmatpush.msra.mxu0 %v3657
    %v3659 = vand.u32 %v3288, 4294901760
    %3660 = vmatpush.msra.mxu0 %v3659
    %v3661 = vand.u32 %v3287, 4294901760
    %3662 = vmatpush.msra.mxu0 %v3661
    %v3663 = vand.u32 %v3286, 4294901760
    %3664 = vmatpush.msra.mxu0 %v3663
    %v3665 = vand.u32 %v3285, 4294901760
    %3666 = vmatpush.msra.mxu0 %v3665
    %v3667 = vand.u32 %v3284, 4294901760
    %3668 = vmatpush.msra.mxu0 %v3667
    %v3669 = vand.u32 %v3283, 4294901760
    %3670 = vmatpush.msra.mxu0 %v3669
    %v3671 = vand.u32 %v3282, 4294901760
    %3672 = vmatpush.msra.mxu0 %v3671
    %v3673 = vand.u32 %v3281, 4294901760
    %3674 = vmatpush.msra.mxu0 %v3673
    %v3675 = vand.u32 %v3280, 4294901760
    %3676 = vmatpush.msra.mxu0 %v3675
    %v3677 = vand.u32 %v3279, 4294901760
    %3678 = vmatpush.msra.mxu0 %v3677
    %v3679 = vand.u32 %v3275, 4294901760
    %3680 = vmatmul.f32.gmra.mxu0 %v3679
    %v3681 = vpop.f32.mrf.mxu0
    %v3682 = vadd.f32 %v3645, %v3681
    %3683 = vdwg.mxu0
    %v3684 = vand.u32 %v3310, 4294901760
    %3685 = vmatpush.msra.mxu0 %v3684
    %v3686 = vand.u32 %v3309, 4294901760
    %3687 = vmatpush.msra.mxu0 %v3686
    %v3688 = vand.u32 %v3308, 4294901760
    %3689 = vmatpush.msra.mxu0 %v3688
    %v3690 = vand.u32 %v3307, 4294901760
    %3691 = vmatpush.msra.mxu0 %v3690
    %v3692 = vand.u32 %v3306, 4294901760
    %3693 = vmatpush.msra.mxu0 %v3692
    %v3694 = vand.u32 %v3305, 4294901760
    %3695 = vmatpush.msra.mxu0 %v3694
    %v3696 = vand.u32 %v3304, 4294901760
    %3697 = vmatpush.msra.mxu0 %v3696
    %v3698 = vand.u32 %v3303, 4294901760
    %3699 = vmatpush.msra.mxu0 %v3698
    %v3700 = vand.u32 %v3302, 4294901760
    %3701 = vmatpush.msra.mxu0 %v3700
    %v3702 = vand.u32 %v3301, 4294901760
    %3703 = vmatpush.msra.mxu0 %v3702
    %v3704 = vand.u32 %v3300, 4294901760
    %3705 = vmatpush.msra.mxu0 %v3704
    %v3706 = vand.u32 %v3299, 4294901760
    %3707 = vmatpush.msra.mxu0 %v3706
    %v3708 = vand.u32 %v3298, 4294901760
    %3709 = vmatpush.msra.mxu0 %v3708
    %v3710 = vand.u32 %v3297, 4294901760
    %3711 = vmatpush.msra.mxu0 %v3710
    %v3712 = vand.u32 %v3296, 4294901760
    %3713 = vmatpush.msra.mxu0 %v3712
    %v3714 = vand.u32 %v3295, 4294901760
    %3715 = vmatpush.msra.mxu0 %v3714
    %v3716 = vand.u32 %v3276, 4294901760
    %v3717 = vsub.f32 %v3276, %v3716
    %v3718 = vand.u32 %v3717, 4294901760
    %v3719 = vsub.f32 %v3717, %v3718
    %v3720 = vand.u32 %v3719, 4294901760
    %3721 = vmatmul.f32.gmra.mxu0 %v3720
    %v3722 = vpop.f32.mrf.mxu0
    %v3723 = vadd.f32 %v3682, %v3722
    %3724 = vdwg.mxu0
    %v3725 = vand.u32 %v3310, 4294901760
    %v3726 = vsub.f32 %v3310, %v3725
    %v3727 = vand.u32 %v3726, 4294901760
    %v3728 = vsub.f32 %v3726, %v3727
    %v3729 = vand.u32 %v3728, 4294901760
    %3730 = vmatpush.msra.mxu0 %v3729
    %v3731 = vand.u32 %v3309, 4294901760
    %v3732 = vsub.f32 %v3309, %v3731
    %v3733 = vand.u32 %v3732, 4294901760
    %v3734 = vsub.f32 %v3732, %v3733
    %v3735 = vand.u32 %v3734, 4294901760
    %3736 = vmatpush.msra.mxu0 %v3735
    %v3737 = vand.u32 %v3308, 4294901760
    %v3738 = vsub.f32 %v3308, %v3737
    %v3739 = vand.u32 %v3738, 4294901760
    %v3740 = vsub.f32 %v3738, %v3739
    %v3741 = vand.u32 %v3740, 4294901760
    %3742 = vmatpush.msra.mxu0 %v3741
    %v3743 = vand.u32 %v3307, 4294901760
    %v3744 = vsub.f32 %v3307, %v3743
    %v3745 = vand.u32 %v3744, 4294901760
    %v3746 = vsub.f32 %v3744, %v3745
    %v3747 = vand.u32 %v3746, 4294901760
    %3748 = vmatpush.msra.mxu0 %v3747
    %v3749 = vand.u32 %v3306, 4294901760
    %v3750 = vsub.f32 %v3306, %v3749
    %v3751 = vand.u32 %v3750, 4294901760
    %v3752 = vsub.f32 %v3750, %v3751
    %v3753 = vand.u32 %v3752, 4294901760
    %3754 = vmatpush.msra.mxu0 %v3753
    %v3755 = vand.u32 %v3305, 4294901760
    %v3756 = vsub.f32 %v3305, %v3755
    %v3757 = vand.u32 %v3756, 4294901760
    %v3758 = vsub.f32 %v3756, %v3757
    %v3759 = vand.u32 %v3758, 4294901760
    %3760 = vmatpush.msra.mxu0 %v3759
    %v3761 = vand.u32 %v3304, 4294901760
    %v3762 = vsub.f32 %v3304, %v3761
    %v3763 = vand.u32 %v3762, 4294901760
    %v3764 = vsub.f32 %v3762, %v3763
    %v3765 = vand.u32 %v3764, 4294901760
    %3766 = vmatpush.msra.mxu0 %v3765
    %v3767 = vand.u32 %v3303, 4294901760
    %v3768 = vsub.f32 %v3303, %v3767
    %v3769 = vand.u32 %v3768, 4294901760
    %v3770 = vsub.f32 %v3768, %v3769
    %v3771 = vand.u32 %v3770, 4294901760
    %3772 = vmatpush.msra.mxu0 %v3771
    %v3773 = vand.u32 %v3302, 4294901760
    %v3774 = vsub.f32 %v3302, %v3773
    %v3775 = vand.u32 %v3774, 4294901760
    %v3776 = vsub.f32 %v3774, %v3775
    %v3777 = vand.u32 %v3776, 4294901760
    %3778 = vmatpush.msra.mxu0 %v3777
    %v3779 = vand.u32 %v3301, 4294901760
    %v3780 = vsub.f32 %v3301, %v3779
    %v3781 = vand.u32 %v3780, 4294901760
    %v3782 = vsub.f32 %v3780, %v3781
    %v3783 = vand.u32 %v3782, 4294901760
    %3784 = vmatpush.msra.mxu0 %v3783
    %v3785 = vand.u32 %v3300, 4294901760
    %v3786 = vsub.f32 %v3300, %v3785
    %v3787 = vand.u32 %v3786, 4294901760
    %v3788 = vsub.f32 %v3786, %v3787
    %v3789 = vand.u32 %v3788, 4294901760
    %3790 = vmatpush.msra.mxu0 %v3789
    %v3791 = vand.u32 %v3299, 4294901760
    %v3792 = vsub.f32 %v3299, %v3791
    %v3793 = vand.u32 %v3792, 4294901760
    %v3794 = vsub.f32 %v3792, %v3793
    %v3795 = vand.u32 %v3794, 4294901760
    %3796 = vmatpush.msra.mxu0 %v3795
    %v3797 = vand.u32 %v3298, 4294901760
    %v3798 = vsub.f32 %v3298, %v3797
    %v3799 = vand.u32 %v3798, 4294901760
    %v3800 = vsub.f32 %v3798, %v3799
    %v3801 = vand.u32 %v3800, 4294901760
    %3802 = vmatpush.msra.mxu0 %v3801
    %v3803 = vand.u32 %v3297, 4294901760
    %v3804 = vsub.f32 %v3297, %v3803
    %v3805 = vand.u32 %v3804, 4294901760
    %v3806 = vsub.f32 %v3804, %v3805
    %v3807 = vand.u32 %v3806, 4294901760
    %3808 = vmatpush.msra.mxu0 %v3807
    %v3809 = vand.u32 %v3296, 4294901760
    %v3810 = vsub.f32 %v3296, %v3809
    %v3811 = vand.u32 %v3810, 4294901760
    %v3812 = vsub.f32 %v3810, %v3811
    %v3813 = vand.u32 %v3812, 4294901760
    %3814 = vmatpush.msra.mxu0 %v3813
    %v3815 = vand.u32 %v3295, 4294901760
    %v3816 = vsub.f32 %v3295, %v3815
    %v3817 = vand.u32 %v3816, 4294901760
    %v3818 = vsub.f32 %v3816, %v3817
    %v3819 = vand.u32 %v3818, 4294901760
    %3820 = vmatpush.msra.mxu0 %v3819
    %v3821 = vand.u32 %v3276, 4294901760
    %3822 = vmatmul.f32.gmra.mxu0 %v3821
    %v3823 = vpop.f32.mrf.mxu0
    %v3824 = vadd.f32 %v3723, %v3823
    %3825 = vdwg.mxu0
    %v3826 = vand.u32 %v3310, 4294901760
    %v3827 = vsub.f32 %v3310, %v3826
    %3828 = vmatpush.msra.mxu0 %v3827
    %v3829 = vand.u32 %v3309, 4294901760
    %v3830 = vsub.f32 %v3309, %v3829
    %3831 = vmatpush.msra.mxu0 %v3830
    %v3832 = vand.u32 %v3308, 4294901760
    %v3833 = vsub.f32 %v3308, %v3832
    %3834 = vmatpush.msra.mxu0 %v3833
    %v3835 = vand.u32 %v3307, 4294901760
    %v3836 = vsub.f32 %v3307, %v3835
    %3837 = vmatpush.msra.mxu0 %v3836
    %v3838 = vand.u32 %v3306, 4294901760
    %v3839 = vsub.f32 %v3306, %v3838
    %3840 = vmatpush.msra.mxu0 %v3839
    %v3841 = vand.u32 %v3305, 4294901760
    %v3842 = vsub.f32 %v3305, %v3841
    %3843 = vmatpush.msra.mxu0 %v3842
    %v3844 = vand.u32 %v3304, 4294901760
    %v3845 = vsub.f32 %v3304, %v3844
    %3846 = vmatpush.msra.mxu0 %v3845
    %v3847 = vand.u32 %v3303, 4294901760
    %v3848 = vsub.f32 %v3303, %v3847
    %3849 = vmatpush.msra.mxu0 %v3848
    %v3850 = vand.u32 %v3302, 4294901760
    %v3851 = vsub.f32 %v3302, %v3850
    %3852 = vmatpush.msra.mxu0 %v3851
    %v3853 = vand.u32 %v3301, 4294901760
    %v3854 = vsub.f32 %v3301, %v3853
    %3855 = vmatpush.msra.mxu0 %v3854
    %v3856 = vand.u32 %v3300, 4294901760
    %v3857 = vsub.f32 %v3300, %v3856
    %3858 = vmatpush.msra.mxu0 %v3857
    %v3859 = vand.u32 %v3299, 4294901760
    %v3860 = vsub.f32 %v3299, %v3859
    %3861 = vmatpush.msra.mxu0 %v3860
    %v3862 = vand.u32 %v3298, 4294901760
    %v3863 = vsub.f32 %v3298, %v3862
    %3864 = vmatpush.msra.mxu0 %v3863
    %v3865 = vand.u32 %v3297, 4294901760
    %v3866 = vsub.f32 %v3297, %v3865
    %3867 = vmatpush.msra.mxu0 %v3866
    %v3868 = vand.u32 %v3296, 4294901760
    %v3869 = vsub.f32 %v3296, %v3868
    %3870 = vmatpush.msra.mxu0 %v3869
    %v3871 = vand.u32 %v3295, 4294901760
    %v3872 = vsub.f32 %v3295, %v3871
    %3873 = vmatpush.msra.mxu0 %v3872
    %v3874 = vand.u32 %v3276, 4294901760
    %v3875 = vsub.f32 %v3276, %v3874
    %3876 = vmatmul.f32.gmra.mxu0 %v3875
    %v3877 = vpop.f32.mrf.mxu0
    %v3878 = vadd.f32 %v3824, %v3877
    %3879 = vdwg.mxu0
    %v3880 = vand.u32 %v3310, 4294901760
    %3881 = vmatpush.msra.mxu0 %v3880
    %v3882 = vand.u32 %v3309, 4294901760
    %3883 = vmatpush.msra.mxu0 %v3882
    %v3884 = vand.u32 %v3308, 4294901760
    %3885 = vmatpush.msra.mxu0 %v3884
    %v3886 = vand.u32 %v3307, 4294901760
    %3887 = vmatpush.msra.mxu0 %v3886
    %v3888 = vand.u32 %v3306, 4294901760
    %3889 = vmatpush.msra.mxu0 %v3888
    %v3890 = vand.u32 %v3305, 4294901760
    %3891 = vmatpush.msra.mxu0 %v3890
    %v3892 = vand.u32 %v3304, 4294901760
    %3893 = vmatpush.msra.mxu0 %v3892
    %v3894 = vand.u32 %v3303, 4294901760
    %3895 = vmatpush.msra.mxu0 %v3894
    %v3896 = vand.u32 %v3302, 4294901760
    %3897 = vmatpush.msra.mxu0 %v3896
    %v3898 = vand.u32 %v3301, 4294901760
    %3899 = vmatpush.msra.mxu0 %v3898
    %v3900 = vand.u32 %v3300, 4294901760
    %3901 = vmatpush.msra.mxu0 %v3900
    %v3902 = vand.u32 %v3299, 4294901760
    %3903 = vmatpush.msra.mxu0 %v3902
    %v3904 = vand.u32 %v3298, 4294901760
    %3905 = vmatpush.msra.mxu0 %v3904
    %v3906 = vand.u32 %v3297, 4294901760
    %3907 = vmatpush.msra.mxu0 %v3906
    %v3908 = vand.u32 %v3296, 4294901760
    %3909 = vmatpush.msra.mxu0 %v3908
    %v3910 = vand.u32 %v3295, 4294901760
    %3911 = vmatpush.msra.mxu0 %v3910
    %v3912 = vand.u32 %v3276, 4294901760
    %v3913 = vsub.f32 %v3276, %v3912
    %v3914 = vand.u32 %v3913, 4294901760
    %3915 = vmatmul.f32.gmra.mxu0 %v3914
    %v3916 = vpop.f32.mrf.mxu0
    %v3917 = vadd.f32 %v3878, %v3916
    %3918 = vdwg.mxu0
    %v3919 = vand.u32 %v3310, 4294901760
    %v3920 = vsub.f32 %v3310, %v3919
    %v3921 = vand.u32 %v3920, 4294901760
    %3922 = vmatpush.msra.mxu0 %v3921
    %v3923 = vand.u32 %v3309, 4294901760
    %v3924 = vsub.f32 %v3309, %v3923
    %v3925 = vand.u32 %v3924, 4294901760
    %3926 = vmatpush.msra.mxu0 %v3925
    %v3927 = vand.u32 %v3308, 4294901760
    %v3928 = vsub.f32 %v3308, %v3927
    %v3929 = vand.u32 %v3928, 4294901760
    %3930 = vmatpush.msra.mxu0 %v3929
    %v3931 = vand.u32 %v3307, 4294901760
    %v3932 = vsub.f32 %v3307, %v3931
    %v3933 = vand.u32 %v3932, 4294901760
    %3934 = vmatpush.msra.mxu0 %v3933
    %v3935 = vand.u32 %v3306, 4294901760
    %v3936 = vsub.f32 %v3306, %v3935
    %v3937 = vand.u32 %v3936, 4294901760
    %3938 = vmatpush.msra.mxu0 %v3937
    %v3939 = vand.u32 %v3305, 4294901760
    %v3940 = vsub.f32 %v3305, %v3939
    %v3941 = vand.u32 %v3940, 4294901760
    %3942 = vmatpush.msra.mxu0 %v3941
    %v3943 = vand.u32 %v3304, 4294901760
    %v3944 = vsub.f32 %v3304, %v3943
    %v3945 = vand.u32 %v3944, 4294901760
    %3946 = vmatpush.msra.mxu0 %v3945
    %v3947 = vand.u32 %v3303, 4294901760
    %v3948 = vsub.f32 %v3303, %v3947
    %v3949 = vand.u32 %v3948, 4294901760
    %3950 = vmatpush.msra.mxu0 %v3949
    %v3951 = vand.u32 %v3302, 4294901760
    %v3952 = vsub.f32 %v3302, %v3951
    %v3953 = vand.u32 %v3952, 4294901760
    %3954 = vmatpush.msra.mxu0 %v3953
    %v3955 = vand.u32 %v3301, 4294901760
    %v3956 = vsub.f32 %v3301, %v3955
    %v3957 = vand.u32 %v3956, 4294901760
    %3958 = vmatpush.msra.mxu0 %v3957
    %v3959 = vand.u32 %v3300, 4294901760
    %v3960 = vsub.f32 %v3300, %v3959
    %v3961 = vand.u32 %v3960, 4294901760
    %3962 = vmatpush.msra.mxu0 %v3961
    %v3963 = vand.u32 %v3299, 4294901760
    %v3964 = vsub.f32 %v3299, %v3963
    %v3965 = vand.u32 %v3964, 4294901760
    %3966 = vmatpush.msra.mxu0 %v3965
    %v3967 = vand.u32 %v3298, 4294901760
    %v3968 = vsub.f32 %v3298, %v3967
    %v3969 = vand.u32 %v3968, 4294901760
    %3970 = vmatpush.msra.mxu0 %v3969
    %v3971 = vand.u32 %v3297, 4294901760
    %v3972 = vsub.f32 %v3297, %v3971
    %v3973 = vand.u32 %v3972, 4294901760
    %3974 = vmatpush.msra.mxu0 %v3973
    %v3975 = vand.u32 %v3296, 4294901760
    %v3976 = vsub.f32 %v3296, %v3975
    %v3977 = vand.u32 %v3976, 4294901760
    %3978 = vmatpush.msra.mxu0 %v3977
    %v3979 = vand.u32 %v3295, 4294901760
    %v3980 = vsub.f32 %v3295, %v3979
    %v3981 = vand.u32 %v3980, 4294901760
    %3982 = vmatpush.msra.mxu0 %v3981
    %v3983 = vand.u32 %v3276, 4294901760
    %3984 = vmatmul.f32.gmra.mxu0 %v3983
    %v3985 = vpop.f32.mrf.mxu0
    %v3986 = vadd.f32 %v3917, %v3985
    %3987 = vdwg.mxu0
    %v3988 = vand.u32 %v3310, 4294901760
    %3989 = vmatpush.msra.mxu0 %v3988
    %v3990 = vand.u32 %v3309, 4294901760
    %3991 = vmatpush.msra.mxu0 %v3990
    %v3992 = vand.u32 %v3308, 4294901760
    %3993 = vmatpush.msra.mxu0 %v3992
    %v3994 = vand.u32 %v3307, 4294901760
    %3995 = vmatpush.msra.mxu0 %v3994
    %v3996 = vand.u32 %v3306, 4294901760
    %3997 = vmatpush.msra.mxu0 %v3996
    %v3998 = vand.u32 %v3305, 4294901760
    %3999 = vmatpush.msra.mxu0 %v3998
    %v4000 = vand.u32 %v3304, 4294901760
    %4001 = vmatpush.msra.mxu0 %v4000
    %v4002 = vand.u32 %v3303, 4294901760
    %4003 = vmatpush.msra.mxu0 %v4002
    %v4004 = vand.u32 %v3302, 4294901760
    %4005 = vmatpush.msra.mxu0 %v4004
    %v4006 = vand.u32 %v3301, 4294901760
    %4007 = vmatpush.msra.mxu0 %v4006
    %v4008 = vand.u32 %v3300, 4294901760
    %4009 = vmatpush.msra.mxu0 %v4008
    %v4010 = vand.u32 %v3299, 4294901760
    %4011 = vmatpush.msra.mxu0 %v4010
    %v4012 = vand.u32 %v3298, 4294901760
    %4013 = vmatpush.msra.mxu0 %v4012
    %v4014 = vand.u32 %v3297, 4294901760
    %4015 = vmatpush.msra.mxu0 %v4014
    %v4016 = vand.u32 %v3296, 4294901760
    %4017 = vmatpush.msra.mxu0 %v4016
    %v4018 = vand.u32 %v3295, 4294901760
    %4019 = vmatpush.msra.mxu0 %v4018
    %v4020 = vand.u32 %v3276, 4294901760
    %4021 = vmatmul.f32.gmra.mxu0 %v4020
    %v4022 = vpop.f32.mrf.mxu0
    %v4023 = vadd.f32 %v3986, %v4022
    %4024 = vdwg.mxu0
    %v4025 = vand.u32 %v3326, 4294901760
    %4026 = vmatpush.msra.mxu0 %v4025
    %v4027 = vand.u32 %v3325, 4294901760
    %4028 = vmatpush.msra.mxu0 %v4027
    %v4029 = vand.u32 %v3324, 4294901760
    %4030 = vmatpush.msra.mxu0 %v4029
    %v4031 = vand.u32 %v3323, 4294901760
    %4032 = vmatpush.msra.mxu0 %v4031
    %v4033 = vand.u32 %v3322, 4294901760
    %4034 = vmatpush.msra.mxu0 %v4033
    %v4035 = vand.u32 %v3321, 4294901760
    %4036 = vmatpush.msra.mxu0 %v4035
    %v4037 = vand.u32 %v3320, 4294901760
    %4038 = vmatpush.msra.mxu0 %v4037
    %v4039 = vand.u32 %v3319, 4294901760
    %4040 = vmatpush.msra.mxu0 %v4039
    %v4041 = vand.u32 %v3318, 4294901760
    %4042 = vmatpush.msra.mxu0 %v4041
    %v4043 = vand.u32 %v3317, 4294901760
    %4044 = vmatpush.msra.mxu0 %v4043
    %v4045 = vand.u32 %v3316, 4294901760
    %4046 = vmatpush.msra.mxu0 %v4045
    %v4047 = vand.u32 %v3315, 4294901760
    %4048 = vmatpush.msra.mxu0 %v4047
    %v4049 = vand.u32 %v3314, 4294901760
    %4050 = vmatpush.msra.mxu0 %v4049
    %v4051 = vand.u32 %v3313, 4294901760
    %4052 = vmatpush.msra.mxu0 %v4051
    %v4053 = vand.u32 %v3312, 4294901760
    %4054 = vmatpush.msra.mxu0 %v4053
    %v4055 = vand.u32 %v3311, 4294901760
    %4056 = vmatpush.msra.mxu0 %v4055
    %v4057 = vand.u32 %v3277, 4294901760
    %v4058 = vsub.f32 %v3277, %v4057
    %v4059 = vand.u32 %v4058, 4294901760
    %v4060 = vsub.f32 %v4058, %v4059
    %v4061 = vand.u32 %v4060, 4294901760
    %4062 = vmatmul.f32.gmra.mxu0 %v4061
    %v4063 = vpop.f32.mrf.mxu0
    %v4064 = vadd.f32 %v4023, %v4063
    %4065 = vdwg.mxu0
    %v4066 = vand.u32 %v3326, 4294901760
    %v4067 = vsub.f32 %v3326, %v4066
    %v4068 = vand.u32 %v4067, 4294901760
    %v4069 = vsub.f32 %v4067, %v4068
    %v4070 = vand.u32 %v4069, 4294901760
    %4071 = vmatpush.msra.mxu0 %v4070
    %v4072 = vand.u32 %v3325, 4294901760
    %v4073 = vsub.f32 %v3325, %v4072
    %v4074 = vand.u32 %v4073, 4294901760
    %v4075 = vsub.f32 %v4073, %v4074
    %v4076 = vand.u32 %v4075, 4294901760
    %4077 = vmatpush.msra.mxu0 %v4076
    %v4078 = vand.u32 %v3324, 4294901760
    %v4079 = vsub.f32 %v3324, %v4078
    %v4080 = vand.u32 %v4079, 4294901760
    %v4081 = vsub.f32 %v4079, %v4080
    %v4082 = vand.u32 %v4081, 4294901760
    %4083 = vmatpush.msra.mxu0 %v4082
    %v4084 = vand.u32 %v3323, 4294901760
    %v4085 = vsub.f32 %v3323, %v4084
    %v4086 = vand.u32 %v4085, 4294901760
    %v4087 = vsub.f32 %v4085, %v4086
    %v4088 = vand.u32 %v4087, 4294901760
    %4089 = vmatpush.msra.mxu0 %v4088
    %v4090 = vand.u32 %v3322, 4294901760
    %v4091 = vsub.f32 %v3322, %v4090
    %v4092 = vand.u32 %v4091, 4294901760
    %v4093 = vsub.f32 %v4091, %v4092
    %v4094 = vand.u32 %v4093, 4294901760
    %4095 = vmatpush.msra.mxu0 %v4094
    %v4096 = vand.u32 %v3321, 4294901760
    %v4097 = vsub.f32 %v3321, %v4096
    %v4098 = vand.u32 %v4097, 4294901760
    %v4099 = vsub.f32 %v4097, %v4098
    %v4100 = vand.u32 %v4099, 4294901760
    %4101 = vmatpush.msra.mxu0 %v4100
    %v4102 = vand.u32 %v3320, 4294901760
    %v4103 = vsub.f32 %v3320, %v4102
    %v4104 = vand.u32 %v4103, 4294901760
    %v4105 = vsub.f32 %v4103, %v4104
    %v4106 = vand.u32 %v4105, 4294901760
    %4107 = vmatpush.msra.mxu0 %v4106
    %v4108 = vand.u32 %v3319, 4294901760
    %v4109 = vsub.f32 %v3319, %v4108
    %v4110 = vand.u32 %v4109, 4294901760
    %v4111 = vsub.f32 %v4109, %v4110
    %v4112 = vand.u32 %v4111, 4294901760
    %4113 = vmatpush.msra.mxu0 %v4112
    %v4114 = vand.u32 %v3318, 4294901760
    %v4115 = vsub.f32 %v3318, %v4114
    %v4116 = vand.u32 %v4115, 4294901760
    %v4117 = vsub.f32 %v4115, %v4116
    %v4118 = vand.u32 %v4117, 4294901760
    %4119 = vmatpush.msra.mxu0 %v4118
    %v4120 = vand.u32 %v3317, 4294901760
    %v4121 = vsub.f32 %v3317, %v4120
    %v4122 = vand.u32 %v4121, 4294901760
    %v4123 = vsub.f32 %v4121, %v4122
    %v4124 = vand.u32 %v4123, 4294901760
    %4125 = vmatpush.msra.mxu0 %v4124
    %v4126 = vand.u32 %v3316, 4294901760
    %v4127 = vsub.f32 %v3316, %v4126
    %v4128 = vand.u32 %v4127, 4294901760
    %v4129 = vsub.f32 %v4127, %v4128
    %v4130 = vand.u32 %v4129, 4294901760
    %4131 = vmatpush.msra.mxu0 %v4130
    %v4132 = vand.u32 %v3315, 4294901760
    %v4133 = vsub.f32 %v3315, %v4132
    %v4134 = vand.u32 %v4133, 4294901760
    %v4135 = vsub.f32 %v4133, %v4134
    %v4136 = vand.u32 %v4135, 4294901760
    %4137 = vmatpush.msra.mxu0 %v4136
    %v4138 = vand.u32 %v3314, 4294901760
    %v4139 = vsub.f32 %v3314, %v4138
    %v4140 = vand.u32 %v4139, 4294901760
    %v4141 = vsub.f32 %v4139, %v4140
    %v4142 = vand.u32 %v4141, 4294901760
    %4143 = vmatpush.msra.mxu0 %v4142
    %v4144 = vand.u32 %v3313, 4294901760
    %v4145 = vsub.f32 %v3313, %v4144
    %v4146 = vand.u32 %v4145, 4294901760
    %v4147 = vsub.f32 %v4145, %v4146
    %v4148 = vand.u32 %v4147, 4294901760
    %4149 = vmatpush.msra.mxu0 %v4148
    %v4150 = vand.u32 %v3312, 4294901760
    %v4151 = vsub.f32 %v3312, %v4150
    %v4152 = vand.u32 %v4151, 4294901760
    %v4153 = vsub.f32 %v4151, %v4152
    %v4154 = vand.u32 %v4153, 4294901760
    %4155 = vmatpush.msra.mxu0 %v4154
    %v4156 = vand.u32 %v3311, 4294901760
    %v4157 = vsub.f32 %v3311, %v4156
    %v4158 = vand.u32 %v4157, 4294901760
    %v4159 = vsub.f32 %v4157, %v4158
    %v4160 = vand.u32 %v4159, 4294901760
    %4161 = vmatpush.msra.mxu0 %v4160
    %v4162 = vand.u32 %v3277, 4294901760
    %4163 = vmatmul.f32.gmra.mxu0 %v4162
    %v4164 = vpop.f32.mrf.mxu0
    %v4165 = vadd.f32 %v4064, %v4164
    %4166 = vdwg.mxu0
    %v4167 = vand.u32 %v3326, 4294901760
    %v4168 = vsub.f32 %v3326, %v4167
    %4169 = vmatpush.msra.mxu0 %v4168
    %v4170 = vand.u32 %v3325, 4294901760
    %v4171 = vsub.f32 %v3325, %v4170
    %4172 = vmatpush.msra.mxu0 %v4171
    %v4173 = vand.u32 %v3324, 4294901760
    %v4174 = vsub.f32 %v3324, %v4173
    %4175 = vmatpush.msra.mxu0 %v4174
    %v4176 = vand.u32 %v3323, 4294901760
    %v4177 = vsub.f32 %v3323, %v4176
    %4178 = vmatpush.msra.mxu0 %v4177
    %v4179 = vand.u32 %v3322, 4294901760
    %v4180 = vsub.f32 %v3322, %v4179
    %4181 = vmatpush.msra.mxu0 %v4180
    %v4182 = vand.u32 %v3321, 4294901760
    %v4183 = vsub.f32 %v3321, %v4182
    %4184 = vmatpush.msra.mxu0 %v4183
    %v4185 = vand.u32 %v3320, 4294901760
    %v4186 = vsub.f32 %v3320, %v4185
    %4187 = vmatpush.msra.mxu0 %v4186
    %v4188 = vand.u32 %v3319, 4294901760
    %v4189 = vsub.f32 %v3319, %v4188
    %4190 = vmatpush.msra.mxu0 %v4189
    %v4191 = vand.u32 %v3318, 4294901760
    %v4192 = vsub.f32 %v3318, %v4191
    %4193 = vmatpush.msra.mxu0 %v4192
    %v4194 = vand.u32 %v3317, 4294901760
    %v4195 = vsub.f32 %v3317, %v4194
    %4196 = vmatpush.msra.mxu0 %v4195
    %v4197 = vand.u32 %v3316, 4294901760
    %v4198 = vsub.f32 %v3316, %v4197
    %4199 = vmatpush.msra.mxu0 %v4198
    %v4200 = vand.u32 %v3315, 4294901760
    %v4201 = vsub.f32 %v3315, %v4200
    %4202 = vmatpush.msra.mxu0 %v4201
    %v4203 = vand.u32 %v3314, 4294901760
    %v4204 = vsub.f32 %v3314, %v4203
    %4205 = vmatpush.msra.mxu0 %v4204
    %v4206 = vand.u32 %v3313, 4294901760
    %v4207 = vsub.f32 %v3313, %v4206
    %4208 = vmatpush.msra.mxu0 %v4207
    %v4209 = vand.u32 %v3312, 4294901760
    %v4210 = vsub.f32 %v3312, %v4209
    %4211 = vmatpush.msra.mxu0 %v4210
    %v4212 = vand.u32 %v3311, 4294901760
    %v4213 = vsub.f32 %v3311, %v4212
    %4214 = vmatpush.msra.mxu0 %v4213
    %v4215 = vand.u32 %v3277, 4294901760
    %v4216 = vsub.f32 %v3277, %v4215
    %4217 = vmatmul.f32.gmra.mxu0 %v4216
    %v4218 = vpop.f32.mrf.mxu0
    %v4219 = vadd.f32 %v4165, %v4218
    %4220 = vdwg.mxu0
    %v4221 = vand.u32 %v3326, 4294901760
    %4222 = vmatpush.msra.mxu0 %v4221
    %v4223 = vand.u32 %v3325, 4294901760
    %4224 = vmatpush.msra.mxu0 %v4223
    %v4225 = vand.u32 %v3324, 4294901760
    %4226 = vmatpush.msra.mxu0 %v4225
    %v4227 = vand.u32 %v3323, 4294901760
    %4228 = vmatpush.msra.mxu0 %v4227
    %v4229 = vand.u32 %v3322, 4294901760
    %4230 = vmatpush.msra.mxu0 %v4229
    %v4231 = vand.u32 %v3321, 4294901760
    %4232 = vmatpush.msra.mxu0 %v4231
    %v4233 = vand.u32 %v3320, 4294901760
    %4234 = vmatpush.msra.mxu0 %v4233
    %v4235 = vand.u32 %v3319, 4294901760
    %4236 = vmatpush.msra.mxu0 %v4235
    %v4237 = vand.u32 %v3318, 4294901760
    %4238 = vmatpush.msra.mxu0 %v4237
    %v4239 = vand.u32 %v3317, 4294901760
    %4240 = vmatpush.msra.mxu0 %v4239
    %v4241 = vand.u32 %v3316, 4294901760
    %4242 = vmatpush.msra.mxu0 %v4241
    %v4243 = vand.u32 %v3315, 4294901760
    %4244 = vmatpush.msra.mxu0 %v4243
    %v4245 = vand.u32 %v3314, 4294901760
    %4246 = vmatpush.msra.mxu0 %v4245
    %v4247 = vand.u32 %v3313, 4294901760
    %4248 = vmatpush.msra.mxu0 %v4247
    %v4249 = vand.u32 %v3312, 4294901760
    %4250 = vmatpush.msra.mxu0 %v4249
    %v4251 = vand.u32 %v3311, 4294901760
    %4252 = vmatpush.msra.mxu0 %v4251
    %v4253 = vand.u32 %v3277, 4294901760
    %v4254 = vsub.f32 %v3277, %v4253
    %v4255 = vand.u32 %v4254, 4294901760
    %4256 = vmatmul.f32.gmra.mxu0 %v4255
    %v4257 = vpop.f32.mrf.mxu0
    %v4258 = vadd.f32 %v4219, %v4257
    %4259 = vdwg.mxu0
    %v4260 = vand.u32 %v3326, 4294901760
    %v4261 = vsub.f32 %v3326, %v4260
    %v4262 = vand.u32 %v4261, 4294901760
    %4263 = vmatpush.msra.mxu0 %v4262
    %v4264 = vand.u32 %v3325, 4294901760
    %v4265 = vsub.f32 %v3325, %v4264
    %v4266 = vand.u32 %v4265, 4294901760
    %4267 = vmatpush.msra.mxu0 %v4266
    %v4268 = vand.u32 %v3324, 4294901760
    %v4269 = vsub.f32 %v3324, %v4268
    %v4270 = vand.u32 %v4269, 4294901760
    %4271 = vmatpush.msra.mxu0 %v4270
    %v4272 = vand.u32 %v3323, 4294901760
    %v4273 = vsub.f32 %v3323, %v4272
    %v4274 = vand.u32 %v4273, 4294901760
    %4275 = vmatpush.msra.mxu0 %v4274
    %v4276 = vand.u32 %v3322, 4294901760
    %v4277 = vsub.f32 %v3322, %v4276
    %v4278 = vand.u32 %v4277, 4294901760
    %4279 = vmatpush.msra.mxu0 %v4278
    %v4280 = vand.u32 %v3321, 4294901760
    %v4281 = vsub.f32 %v3321, %v4280
    %v4282 = vand.u32 %v4281, 4294901760
    %4283 = vmatpush.msra.mxu0 %v4282
    %v4284 = vand.u32 %v3320, 4294901760
    %v4285 = vsub.f32 %v3320, %v4284
    %v4286 = vand.u32 %v4285, 4294901760
    %4287 = vmatpush.msra.mxu0 %v4286
    %v4288 = vand.u32 %v3319, 4294901760
    %v4289 = vsub.f32 %v3319, %v4288
    %v4290 = vand.u32 %v4289, 4294901760
    %4291 = vmatpush.msra.mxu0 %v4290
    %v4292 = vand.u32 %v3318, 4294901760
    %v4293 = vsub.f32 %v3318, %v4292
    %v4294 = vand.u32 %v4293, 4294901760
    %4295 = vmatpush.msra.mxu0 %v4294
    %v4296 = vand.u32 %v3317, 4294901760
    %v4297 = vsub.f32 %v3317, %v4296
    %v4298 = vand.u32 %v4297, 4294901760
    %4299 = vmatpush.msra.mxu0 %v4298
    %v4300 = vand.u32 %v3316, 4294901760
    %v4301 = vsub.f32 %v3316, %v4300
    %v4302 = vand.u32 %v4301, 4294901760
    %4303 = vmatpush.msra.mxu0 %v4302
    %v4304 = vand.u32 %v3315, 4294901760
    %v4305 = vsub.f32 %v3315, %v4304
    %v4306 = vand.u32 %v4305, 4294901760
    %4307 = vmatpush.msra.mxu0 %v4306
    %v4308 = vand.u32 %v3314, 4294901760
    %v4309 = vsub.f32 %v3314, %v4308
    %v4310 = vand.u32 %v4309, 4294901760
    %4311 = vmatpush.msra.mxu0 %v4310
    %v4312 = vand.u32 %v3313, 4294901760
    %v4313 = vsub.f32 %v3313, %v4312
    %v4314 = vand.u32 %v4313, 4294901760
    %4315 = vmatpush.msra.mxu0 %v4314
    %v4316 = vand.u32 %v3312, 4294901760
    %v4317 = vsub.f32 %v3312, %v4316
    %v4318 = vand.u32 %v4317, 4294901760
    %4319 = vmatpush.msra.mxu0 %v4318
    %v4320 = vand.u32 %v3311, 4294901760
    %v4321 = vsub.f32 %v3311, %v4320
    %v4322 = vand.u32 %v4321, 4294901760
    %4323 = vmatpush.msra.mxu0 %v4322
    %v4324 = vand.u32 %v3277, 4294901760
    %4325 = vmatmul.f32.gmra.mxu0 %v4324
    %v4326 = vpop.f32.mrf.mxu0
    %v4327 = vadd.f32 %v4258, %v4326
    %4328 = vdwg.mxu0
    %v4329 = vand.u32 %v3326, 4294901760
    %4330 = vmatpush.msra.mxu0 %v4329
    %v4331 = vand.u32 %v3325, 4294901760
    %4332 = vmatpush.msra.mxu0 %v4331
    %v4333 = vand.u32 %v3324, 4294901760
    %4334 = vmatpush.msra.mxu0 %v4333
    %v4335 = vand.u32 %v3323, 4294901760
    %4336 = vmatpush.msra.mxu0 %v4335
    %v4337 = vand.u32 %v3322, 4294901760
    %4338 = vmatpush.msra.mxu0 %v4337
    %v4339 = vand.u32 %v3321, 4294901760
    %4340 = vmatpush.msra.mxu0 %v4339
    %v4341 = vand.u32 %v3320, 4294901760
    %4342 = vmatpush.msra.mxu0 %v4341
    %v4343 = vand.u32 %v3319, 4294901760
    %4344 = vmatpush.msra.mxu0 %v4343
    %v4345 = vand.u32 %v3318, 4294901760
    %4346 = vmatpush.msra.mxu0 %v4345
    %v4347 = vand.u32 %v3317, 4294901760
    %4348 = vmatpush.msra.mxu0 %v4347
    %v4349 = vand.u32 %v3316, 4294901760
    %4350 = vmatpush.msra.mxu0 %v4349
    %v4351 = vand.u32 %v3315, 4294901760
    %4352 = vmatpush.msra.mxu0 %v4351
    %v4353 = vand.u32 %v3314, 4294901760
    %4354 = vmatpush.msra.mxu0 %v4353
    %v4355 = vand.u32 %v3313, 4294901760
    %4356 = vmatpush.msra.mxu0 %v4355
    %v4357 = vand.u32 %v3312, 4294901760
    %4358 = vmatpush.msra.mxu0 %v4357
    %v4359 = vand.u32 %v3311, 4294901760
    %4360 = vmatpush.msra.mxu0 %v4359
    %v4361 = vand.u32 %v3277, 4294901760
    %4362 = vmatmul.f32.gmra.mxu0 %v4361
    %v4363 = vpop.f32.mrf.mxu0
    %v4364 = vadd.f32 %v4327, %v4363
    %4365 = vdwg.mxu0
    %v4366 = vand.u32 %v3342, 4294901760
    %4367 = vmatpush.msra.mxu0 %v4366
    %v4368 = vand.u32 %v3341, 4294901760
    %4369 = vmatpush.msra.mxu0 %v4368
    %v4370 = vand.u32 %v3340, 4294901760
    %4371 = vmatpush.msra.mxu0 %v4370
    %v4372 = vand.u32 %v3339, 4294901760
    %4373 = vmatpush.msra.mxu0 %v4372
    %v4374 = vand.u32 %v3338, 4294901760
    %4375 = vmatpush.msra.mxu0 %v4374
    %v4376 = vand.u32 %v3337, 4294901760
    %4377 = vmatpush.msra.mxu0 %v4376
    %v4378 = vand.u32 %v3336, 4294901760
    %4379 = vmatpush.msra.mxu0 %v4378
    %v4380 = vand.u32 %v3335, 4294901760
    %4381 = vmatpush.msra.mxu0 %v4380
    %v4382 = vand.u32 %v3334, 4294901760
    %4383 = vmatpush.msra.mxu0 %v4382
    %v4384 = vand.u32 %v3333, 4294901760
    %4385 = vmatpush.msra.mxu0 %v4384
    %v4386 = vand.u32 %v3332, 4294901760
    %4387 = vmatpush.msra.mxu0 %v4386
    %v4388 = vand.u32 %v3331, 4294901760
    %4389 = vmatpush.msra.mxu0 %v4388
    %v4390 = vand.u32 %v3330, 4294901760
    %4391 = vmatpush.msra.mxu0 %v4390
    %v4392 = vand.u32 %v3329, 4294901760
    %4393 = vmatpush.msra.mxu0 %v4392
    %v4394 = vand.u32 %v3328, 4294901760
    %4395 = vmatpush.msra.mxu0 %v4394
    %v4396 = vand.u32 %v3327, 4294901760
    %4397 = vmatpush.msra.mxu0 %v4396
    %v4398 = vand.u32 %v3278, 4294901760
    %v4399 = vsub.f32 %v3278, %v4398
    %v4400 = vand.u32 %v4399, 4294901760
    %v4401 = vsub.f32 %v4399, %v4400
    %v4402 = vand.u32 %v4401, 4294901760
    %4403 = vmatmul.f32.gmra.mxu0 %v4402
    %v4404 = vpop.f32.mrf.mxu0
    %v4405 = vadd.f32 %v4364, %v4404
    %4406 = vdwg.mxu0
    %v4407 = vand.u32 %v3342, 4294901760
    %v4408 = vsub.f32 %v3342, %v4407
    %v4409 = vand.u32 %v4408, 4294901760
    %v4410 = vsub.f32 %v4408, %v4409
    %v4411 = vand.u32 %v4410, 4294901760
    %4412 = vmatpush.msra.mxu0 %v4411
    %v4413 = vand.u32 %v3341, 4294901760
    %v4414 = vsub.f32 %v3341, %v4413
    %v4415 = vand.u32 %v4414, 4294901760
    %v4416 = vsub.f32 %v4414, %v4415
    %v4417 = vand.u32 %v4416, 4294901760
    %4418 = vmatpush.msra.mxu0 %v4417
    %v4419 = vand.u32 %v3340, 4294901760
    %v4420 = vsub.f32 %v3340, %v4419
    %v4421 = vand.u32 %v4420, 4294901760
    %v4422 = vsub.f32 %v4420, %v4421
    %v4423 = vand.u32 %v4422, 4294901760
    %4424 = vmatpush.msra.mxu0 %v4423
    %v4425 = vand.u32 %v3339, 4294901760
    %v4426 = vsub.f32 %v3339, %v4425
    %v4427 = vand.u32 %v4426, 4294901760
    %v4428 = vsub.f32 %v4426, %v4427
    %v4429 = vand.u32 %v4428, 4294901760
    %4430 = vmatpush.msra.mxu0 %v4429
    %v4431 = vand.u32 %v3338, 4294901760
    %v4432 = vsub.f32 %v3338, %v4431
    %v4433 = vand.u32 %v4432, 4294901760
    %v4434 = vsub.f32 %v4432, %v4433
    %v4435 = vand.u32 %v4434, 4294901760
    %4436 = vmatpush.msra.mxu0 %v4435
    %v4437 = vand.u32 %v3337, 4294901760
    %v4438 = vsub.f32 %v3337, %v4437
    %v4439 = vand.u32 %v4438, 4294901760
    %v4440 = vsub.f32 %v4438, %v4439
    %v4441 = vand.u32 %v4440, 4294901760
    %4442 = vmatpush.msra.mxu0 %v4441
    %v4443 = vand.u32 %v3336, 4294901760
    %v4444 = vsub.f32 %v3336, %v4443
    %v4445 = vand.u32 %v4444, 4294901760
    %v4446 = vsub.f32 %v4444, %v4445
    %v4447 = vand.u32 %v4446, 4294901760
    %4448 = vmatpush.msra.mxu0 %v4447
    %v4449 = vand.u32 %v3335, 4294901760
    %v4450 = vsub.f32 %v3335, %v4449
    %v4451 = vand.u32 %v4450, 4294901760
    %v4452 = vsub.f32 %v4450, %v4451
    %v4453 = vand.u32 %v4452, 4294901760
    %4454 = vmatpush.msra.mxu0 %v4453
    %v4455 = vand.u32 %v3334, 4294901760
    %v4456 = vsub.f32 %v3334, %v4455
    %v4457 = vand.u32 %v4456, 4294901760
    %v4458 = vsub.f32 %v4456, %v4457
    %v4459 = vand.u32 %v4458, 4294901760
    %4460 = vmatpush.msra.mxu0 %v4459
    %v4461 = vand.u32 %v3333, 4294901760
    %v4462 = vsub.f32 %v3333, %v4461
    %v4463 = vand.u32 %v4462, 4294901760
    %v4464 = vsub.f32 %v4462, %v4463
    %v4465 = vand.u32 %v4464, 4294901760
    %4466 = vmatpush.msra.mxu0 %v4465
    %v4467 = vand.u32 %v3332, 4294901760
    %v4468 = vsub.f32 %v3332, %v4467
    %v4469 = vand.u32 %v4468, 4294901760
    %v4470 = vsub.f32 %v4468, %v4469
    %v4471 = vand.u32 %v4470, 4294901760
    %4472 = vmatpush.msra.mxu0 %v4471
    %v4473 = vand.u32 %v3331, 4294901760
    %v4474 = vsub.f32 %v3331, %v4473
    %v4475 = vand.u32 %v4474, 4294901760
    %v4476 = vsub.f32 %v4474, %v4475
    %v4477 = vand.u32 %v4476, 4294901760
    %4478 = vmatpush.msra.mxu0 %v4477
    %v4479 = vand.u32 %v3330, 4294901760
    %v4480 = vsub.f32 %v3330, %v4479
    %v4481 = vand.u32 %v4480, 4294901760
    %v4482 = vsub.f32 %v4480, %v4481
    %v4483 = vand.u32 %v4482, 4294901760
    %4484 = vmatpush.msra.mxu0 %v4483
    %v4485 = vand.u32 %v3329, 4294901760
    %v4486 = vsub.f32 %v3329, %v4485
    %v4487 = vand.u32 %v4486, 4294901760
    %v4488 = vsub.f32 %v4486, %v4487
    %v4489 = vand.u32 %v4488, 4294901760
    %4490 = vmatpush.msra.mxu0 %v4489
    %v4491 = vand.u32 %v3328, 4294901760
    %v4492 = vsub.f32 %v3328, %v4491
    %v4493 = vand.u32 %v4492, 4294901760
    %v4494 = vsub.f32 %v4492, %v4493
    %v4495 = vand.u32 %v4494, 4294901760
    %4496 = vmatpush.msra.mxu0 %v4495
    %v4497 = vand.u32 %v3327, 4294901760
    %v4498 = vsub.f32 %v3327, %v4497
    %v4499 = vand.u32 %v4498, 4294901760
    %v4500 = vsub.f32 %v4498, %v4499
    %v4501 = vand.u32 %v4500, 4294901760
    %4502 = vmatpush.msra.mxu0 %v4501
    %v4503 = vand.u32 %v3278, 4294901760
    %4504 = vmatmul.f32.gmra.mxu0 %v4503
    %v4505 = vpop.f32.mrf.mxu0
    %v4506 = vadd.f32 %v4405, %v4505
    %4507 = vdwg.mxu0
    %v4508 = vand.u32 %v3342, 4294901760
    %v4509 = vsub.f32 %v3342, %v4508
    %4510 = vmatpush.msra.mxu0 %v4509
    %v4511 = vand.u32 %v3341, 4294901760
    %v4512 = vsub.f32 %v3341, %v4511
    %4513 = vmatpush.msra.mxu0 %v4512
    %v4514 = vand.u32 %v3340, 4294901760
    %v4515 = vsub.f32 %v3340, %v4514
    %4516 = vmatpush.msra.mxu0 %v4515
    %v4517 = vand.u32 %v3339, 4294901760
    %v4518 = vsub.f32 %v3339, %v4517
    %4519 = vmatpush.msra.mxu0 %v4518
    %v4520 = vand.u32 %v3338, 4294901760
    %v4521 = vsub.f32 %v3338, %v4520
    %4522 = vmatpush.msra.mxu0 %v4521
    %v4523 = vand.u32 %v3337, 4294901760
    %v4524 = vsub.f32 %v3337, %v4523
    %4525 = vmatpush.msra.mxu0 %v4524
    %v4526 = vand.u32 %v3336, 4294901760
    %v4527 = vsub.f32 %v3336, %v4526
    %4528 = vmatpush.msra.mxu0 %v4527
    %v4529 = vand.u32 %v3335, 4294901760
    %v4530 = vsub.f32 %v3335, %v4529
    %4531 = vmatpush.msra.mxu0 %v4530
    %v4532 = vand.u32 %v3334, 4294901760
    %v4533 = vsub.f32 %v3334, %v4532
    %4534 = vmatpush.msra.mxu0 %v4533
    %v4535 = vand.u32 %v3333, 4294901760
    %v4536 = vsub.f32 %v3333, %v4535
    %4537 = vmatpush.msra.mxu0 %v4536
    %v4538 = vand.u32 %v3332, 4294901760
    %v4539 = vsub.f32 %v3332, %v4538
    %4540 = vmatpush.msra.mxu0 %v4539
    %v4541 = vand.u32 %v3331, 4294901760
    %v4542 = vsub.f32 %v3331, %v4541
    %4543 = vmatpush.msra.mxu0 %v4542
    %v4544 = vand.u32 %v3330, 4294901760
    %v4545 = vsub.f32 %v3330, %v4544
    %4546 = vmatpush.msra.mxu0 %v4545
    %v4547 = vand.u32 %v3329, 4294901760
    %v4548 = vsub.f32 %v3329, %v4547
    %4549 = vmatpush.msra.mxu0 %v4548
    %v4550 = vand.u32 %v3328, 4294901760
    %v4551 = vsub.f32 %v3328, %v4550
    %4552 = vmatpush.msra.mxu0 %v4551
    %v4553 = vand.u32 %v3327, 4294901760
    %v4554 = vsub.f32 %v3327, %v4553
    %4555 = vmatpush.msra.mxu0 %v4554
    %v4556 = vand.u32 %v3278, 4294901760
    %v4557 = vsub.f32 %v3278, %v4556
    %4558 = vmatmul.f32.gmra.mxu0 %v4557
    %v4559 = vpop.f32.mrf.mxu0
    %v4560 = vadd.f32 %v4506, %v4559
    %4561 = vdwg.mxu0
    %v4562 = vand.u32 %v3342, 4294901760
    %4563 = vmatpush.msra.mxu0 %v4562
    %v4564 = vand.u32 %v3341, 4294901760
    %4565 = vmatpush.msra.mxu0 %v4564
    %v4566 = vand.u32 %v3340, 4294901760
    %4567 = vmatpush.msra.mxu0 %v4566
    %v4568 = vand.u32 %v3339, 4294901760
    %4569 = vmatpush.msra.mxu0 %v4568
    %v4570 = vand.u32 %v3338, 4294901760
    %4571 = vmatpush.msra.mxu0 %v4570
    %v4572 = vand.u32 %v3337, 4294901760
    %4573 = vmatpush.msra.mxu0 %v4572
    %v4574 = vand.u32 %v3336, 4294901760
    %4575 = vmatpush.msra.mxu0 %v4574
    %v4576 = vand.u32 %v3335, 4294901760
    %4577 = vmatpush.msra.mxu0 %v4576
    %v4578 = vand.u32 %v3334, 4294901760
    %4579 = vmatpush.msra.mxu0 %v4578
    %v4580 = vand.u32 %v3333, 4294901760
    %4581 = vmatpush.msra.mxu0 %v4580
    %v4582 = vand.u32 %v3332, 4294901760
    %4583 = vmatpush.msra.mxu0 %v4582
    %v4584 = vand.u32 %v3331, 4294901760
    %4585 = vmatpush.msra.mxu0 %v4584
    %v4586 = vand.u32 %v3330, 4294901760
    %4587 = vmatpush.msra.mxu0 %v4586
    %v4588 = vand.u32 %v3329, 4294901760
    %4589 = vmatpush.msra.mxu0 %v4588
    %v4590 = vand.u32 %v3328, 4294901760
    %4591 = vmatpush.msra.mxu0 %v4590
    %v4592 = vand.u32 %v3327, 4294901760
    %4593 = vmatpush.msra.mxu0 %v4592
    %v4594 = vand.u32 %v3278, 4294901760
    %v4595 = vsub.f32 %v3278, %v4594
    %v4596 = vand.u32 %v4595, 4294901760
    %4597 = vmatmul.f32.gmra.mxu0 %v4596
    %v4598 = vpop.f32.mrf.mxu0
    %v4599 = vadd.f32 %v4560, %v4598
    %4600 = vdwg.mxu0
    %v4601 = vand.u32 %v3342, 4294901760
    %v4602 = vsub.f32 %v3342, %v4601
    %v4603 = vand.u32 %v4602, 4294901760
    %4604 = vmatpush.msra.mxu0 %v4603
    %v4605 = vand.u32 %v3341, 4294901760
    %v4606 = vsub.f32 %v3341, %v4605
    %v4607 = vand.u32 %v4606, 4294901760
    %4608 = vmatpush.msra.mxu0 %v4607
    %v4609 = vand.u32 %v3340, 4294901760
    %v4610 = vsub.f32 %v3340, %v4609
    %v4611 = vand.u32 %v4610, 4294901760
    %4612 = vmatpush.msra.mxu0 %v4611
    %v4613 = vand.u32 %v3339, 4294901760
    %v4614 = vsub.f32 %v3339, %v4613
    %v4615 = vand.u32 %v4614, 4294901760
    %4616 = vmatpush.msra.mxu0 %v4615
    %v4617 = vand.u32 %v3338, 4294901760
    %v4618 = vsub.f32 %v3338, %v4617
    %v4619 = vand.u32 %v4618, 4294901760
    %4620 = vmatpush.msra.mxu0 %v4619
    %v4621 = vand.u32 %v3337, 4294901760
    %v4622 = vsub.f32 %v3337, %v4621
    %v4623 = vand.u32 %v4622, 4294901760
    %4624 = vmatpush.msra.mxu0 %v4623
    %v4625 = vand.u32 %v3336, 4294901760
    %v4626 = vsub.f32 %v3336, %v4625
    %v4627 = vand.u32 %v4626, 4294901760
    %4628 = vmatpush.msra.mxu0 %v4627
    %v4629 = vand.u32 %v3335, 4294901760
    %v4630 = vsub.f32 %v3335, %v4629
    %v4631 = vand.u32 %v4630, 4294901760
    %4632 = vmatpush.msra.mxu0 %v4631
    %v4633 = vand.u32 %v3334, 4294901760
    %v4634 = vsub.f32 %v3334, %v4633
    %v4635 = vand.u32 %v4634, 4294901760
    %4636 = vmatpush.msra.mxu0 %v4635
    %v4637 = vand.u32 %v3333, 4294901760
    %v4638 = vsub.f32 %v3333, %v4637
    %v4639 = vand.u32 %v4638, 4294901760
    %4640 = vmatpush.msra.mxu0 %v4639
    %v4641 = vand.u32 %v3332, 4294901760
    %v4642 = vsub.f32 %v3332, %v4641
    %v4643 = vand.u32 %v4642, 4294901760
    %4644 = vmatpush.msra.mxu0 %v4643
    %v4645 = vand.u32 %v3331, 4294901760
    %v4646 = vsub.f32 %v3331, %v4645
    %v4647 = vand.u32 %v4646, 4294901760
    %4648 = vmatpush.msra.mxu0 %v4647
    %v4649 = vand.u32 %v3330, 4294901760
    %v4650 = vsub.f32 %v3330, %v4649
    %v4651 = vand.u32 %v4650, 4294901760
    %4652 = vmatpush.msra.mxu0 %v4651
    %v4653 = vand.u32 %v3329, 4294901760
    %v4654 = vsub.f32 %v3329, %v4653
    %v4655 = vand.u32 %v4654, 4294901760
    %4656 = vmatpush.msra.mxu0 %v4655
    %v4657 = vand.u32 %v3328, 4294901760
    %v4658 = vsub.f32 %v3328, %v4657
    %v4659 = vand.u32 %v4658, 4294901760
    %4660 = vmatpush.msra.mxu0 %v4659
    %v4661 = vand.u32 %v3327, 4294901760
    %v4662 = vsub.f32 %v3327, %v4661
    %v4663 = vand.u32 %v4662, 4294901760
    %4664 = vmatpush.msra.mxu0 %v4663
    %v4665 = vand.u32 %v3278, 4294901760
    %4666 = vmatmul.f32.gmra.mxu0 %v4665
    %v4667 = vpop.f32.mrf.mxu0
    %v4668 = vadd.f32 %v4599, %v4667
    %4669 = vdwg.mxu0
    %v4670 = vand.u32 %v3342, 4294901760
    %4671 = vmatpush.msra.mxu0 %v4670
    %v4672 = vand.u32 %v3341, 4294901760
    %4673 = vmatpush.msra.mxu0 %v4672
    %v4674 = vand.u32 %v3340, 4294901760
    %4675 = vmatpush.msra.mxu0 %v4674
    %v4676 = vand.u32 %v3339, 4294901760
    %4677 = vmatpush.msra.mxu0 %v4676
    %v4678 = vand.u32 %v3338, 4294901760
    %4679 = vmatpush.msra.mxu0 %v4678
    %v4680 = vand.u32 %v3337, 4294901760
    %4681 = vmatpush.msra.mxu0 %v4680
    %v4682 = vand.u32 %v3336, 4294901760
    %4683 = vmatpush.msra.mxu0 %v4682
    %v4684 = vand.u32 %v3335, 4294901760
    %4685 = vmatpush.msra.mxu0 %v4684
    %v4686 = vand.u32 %v3334, 4294901760
    %4687 = vmatpush.msra.mxu0 %v4686
    %v4688 = vand.u32 %v3333, 4294901760
    %4689 = vmatpush.msra.mxu0 %v4688
    %v4690 = vand.u32 %v3332, 4294901760
    %4691 = vmatpush.msra.mxu0 %v4690
    %v4692 = vand.u32 %v3331, 4294901760
    %4693 = vmatpush.msra.mxu0 %v4692
    %v4694 = vand.u32 %v3330, 4294901760
    %4695 = vmatpush.msra.mxu0 %v4694
    %v4696 = vand.u32 %v3329, 4294901760
    %4697 = vmatpush.msra.mxu0 %v4696
    %v4698 = vand.u32 %v3328, 4294901760
    %4699 = vmatpush.msra.mxu0 %v4698
    %v4700 = vand.u32 %v3327, 4294901760
    %4701 = vmatpush.msra.mxu0 %v4700
    %v4702 = vand.u32 %v3278, 4294901760
    %4703 = vmatmul.f32.gmra.mxu0 %v4702
    %v4704 = vpop.f32.mrf.mxu0
    %v4705 = vadd.f32 %v4668, %v4704
    %4706 = vdwg.mxu0
    %4707 = vst [vmem:[#allocation10] sm:$0xff] %v4705
    // Predicated region
    $region42: #{tpu_custom_call.1} parent=1 // pred_check
      _
    $region43: #{tpu_custom_call.1} parent=1 // pred_check_branch
      %4709 = sbr.rel (0) target = $region45
    $region44: #{tpu_custom_call.1} parent=1 // pred_region
      %4711 = vsyncadd [#allocation6], 0
      %s4713 = sshll.u32 [#allocation10], 4
      %s4714 = int_to_ptr.vmem [resolvable:$true] %s4713
      %s4715 = sshll.u32 %s7, 4
      %s4716 = int_to_ptr.hbm [resolvable:$true] %s4715
      %4718 = dma.vmem_to_hbm [thread:$0]  %s4714, 128, %s4716, [#allocation6]
    $region45: #{tpu_custom_call.1} parent=1 // pred_fallthru
      _
    // Predicated region
    $region46: #{tpu_custom_call.1} parent=1 // pred_check
      _
    $region47: #{tpu_custom_call.1} parent=1 // pred_check_branch
      %4720 = sbr.rel (0) target = $region49
    $region48: #{tpu_custom_call.1} parent=1 // pred_region
      %4722 = dma.done [#allocation6], 128
    $region49: #{tpu_custom_call.1} parent=1 // pred_fallthru
      _
    %4723 = vsyncpa [#allocation5], 1
    %4724 = vsyncpa [#allocation8], 1
    %4725 = vsyncpa [#allocation6], 1

</llo_original>
